<compile_context>
chip_gen: v5e
topology: v5e:2x2
jax: 0.10.0
libtpu: 0.0.40
codegen_flags: <defaults>
</compile_context>

<pallas_src>
import functools

import jax
import jax.numpy as jnp
import numpy as np
from jax.experimental import pallas as pl
from jax.experimental.pallas import tpu as pltpu

_EPS = 1e-9


# ---------------------------------------------------------------------------
# Pallas kernels
# ---------------------------------------------------------------------------
def _conv_body(x_ref, w_ref, b_ref, mb_ref, *, stride, kh, kw, h_out, w_out, cout):
    """3x3 complex conv (as kh*kw accumulating matmuls) + complex bias + modReLU.

    x_ref : (stride*stride, Hp, Wp, 2*Cin)   phase-decomposed padded input (one batch)
    w_ref : (kh*kw, 2*Cin, 2*Cout)           block weights [[wr, wi], [-wi, wr]]
    b_ref : (1, 2*Cout)                      [br | bi]
    mb_ref: (1, Cout)                        modReLU bias
    returns (h_out*w_out, 2*Cout) modReLU'd [yr | yi]
    """
    c2 = x_ref.shape[-1]
    m = h_out * w_out
    acc = jnp.zeros((m, 2 * cout), jnp.float32)
    for ky in range(kh):
        for kx in range(kw):
            ph = (ky % stride) * stride + (kx % stride)       # phase index
            oy, ox = ky // stride, kx // stride               # contiguous offsets
            patch = x_ref[ph, oy:oy + h_out, ox:ox + w_out, :]        # (h_out, w_out, 2Cin)
            acc = acc + jnp.dot(patch.reshape(m, c2), w_ref[ky * kw + kx],
                                preferred_element_type=jnp.float32)
    y = acc + b_ref[...]                                       # (m, 2*Cout) = [yr | yi]

    # modReLU: relu(|z| + b) * z / |z|
    yr, yi = y[:, :cout], y[:, cout:]
    mag = jnp.sqrt(yr * yr + yi * yi)
    scale = jnp.maximum(mag + mb_ref[...], 0.0) * pl.reciprocal(mag + _EPS, approx=True)
    return y * jnp.concatenate([scale, scale], axis=-1)        # lane-dense [yr*s | yi*s]


def _conv_modrelu_kernel(x_ref, w_ref, b_ref, mb_ref, out_ref, **kw):
    out_ref[0] = _conv_body(x_ref, w_ref, b_ref, mb_ref, **kw)


def _conv_modrelu_pool_kernel(x_ref, w_ref, b_ref, mb_ref, mean_ref, **kw):
    # Last layer: fuse the global complex average pool; only (1, 2*Cout) leaves VMEM.
    out = _conv_body(x_ref, w_ref, b_ref, mb_ref, **kw)
    m = kw['h_out'] * kw['w_out']
    mean_ref[0] = jnp.sum(out, axis=0, keepdims=True) * (1.0 / m)


def _head_kernel(f_ref, w_ref, b_ref, o_ref):
    """Complex Linear(C -> 1) on pooled features + Mod (|z|).

    f_ref: (N, 2C) pooled [real | imag] means; w_ref: (2C, 2) folded complex weight;
    b_ref: (1, 2) = [br | bi]; o_ref: (N, 1).
    """
    y = jnp.dot(f_ref[...], w_ref[...], preferred_element_type=jnp.float32) + b_ref[...]
    yr, yi = y[:, 0:1], y[:, 1:2]
    o_ref[...] = jnp.sqrt(yr * yr + yi * yi)


# ---------------------------------------------------------------------------
# Wrappers (padding / phase-decomposition / weight folding stay in plain JAX)
# ---------------------------------------------------------------------------
def complex_conv_modrelu(x2, wr, wi, br, bi, mb, *, stride, padding=1, pool_only=False):
    """x2: (N, H, W, 2*Cin) with [real | imag] channel concat; weights HWIO.

    Returns (N, H_out, W_out, 2*Cout), or the fused global-average-pool means
    (N, 2*Cout) when pool_only=True.
    """
    n, h, w, c2 = x2.shape
    cin = c2 // 2
    kh, kw, _, cout = wr.shape
    h_out = (h + 2 * padding - kh) // stride + 1
    w_out = (w + 2 * padding - kw) // stride + 1

    xp = jnp.pad(x2, ((0, 0), (padding, padding), (padding, padding), (0, 0)))
    if stride == 1:
        xph = xp[:, None]                                     # (N, 1, Hp, Wp, 2Cin)
    else:
        hp, wp = xp.shape[1], xp.shape[2]
        xp = jnp.pad(xp, ((0, 0), (0, (-hp) % stride), (0, (-wp) % stride), (0, 0)))
        xph = jnp.stack([xp[:, py::stride, px::stride, :]
                         for py in range(stride) for px in range(stride)], axis=1)
    n_ph = stride * stride
    hp2, wp2 = xph.shape[2], xph.shape[3]
    xph = xph.reshape(n * n_ph, hp2, wp2, c2)

    assert (kh - 1) // stride + h_out <= hp2 and (kw - 1) // stride + w_out <= wp2

    # Fold the complex product into one block weight:  A=[xr|xi] @ [[wr, wi], [-wi, wr]]
    wrf = wr.reshape(kh * kw, cin, cout)
    wif = wi.reshape(kh * kw, cin, cout)
    wblk = jnp.concatenate([jnp.concatenate([wrf, wif], axis=2),
                            jnp.concatenate([-wif, wrf], axis=2)], axis=1)   # (9, 2Cin, 2Cout)
    bblk = jnp.concatenate([br, bi]).reshape(1, 2 * cout)
    mb2 = mb.reshape(1, cout)

    m = h_out * w_out
    kern_kw = dict(stride=stride, kh=kh, kw=kw, h_out=h_out, w_out=w_out, cout=cout)
    in_specs = [pl.BlockSpec((n_ph, hp2, wp2, c2), lambda b: (b, 0, 0, 0)),
                pl.BlockSpec((kh * kw, 2 * cin, 2 * cout), lambda b: (0, 0, 0)),
                pl.BlockSpec((1, 2 * cout), lambda b: (0, 0)),
                pl.BlockSpec((1, cout), lambda b: (0, 0))]
    cparams = pltpu.CompilerParams(dimension_semantics=("parallel",))
    # TODO(synk): for large images, tile the grid over output rows (with halo DMA)
    # instead of whole-image-per-batch blocks, and keep W_out a multiple of 8.

    if pool_only:
        pooled = pl.pallas_call(
            functools.partial(_conv_modrelu_pool_kernel, **kern_kw),
            grid=(n,),
            in_specs=in_specs,
            out_specs=pl.BlockSpec((1, 1, 2 * cout), lambda b: (b, 0, 0)),
            out_shape=jax.ShapeDtypeStruct((n, 1, 2 * cout), jnp.float32),
            compiler_params=cparams,
        )(xph, wblk, bblk, mb2)
        return pooled.reshape(n, 2 * cout)

    out = pl.pallas_call(
        functools.partial(_conv_modrelu_kernel, **kern_kw),
        grid=(n,),
        in_specs=in_specs,
        out_specs=pl.BlockSpec((1, m, 2 * cout), lambda b: (b, 0, 0)),
        out_shape=jax.ShapeDtypeStruct((n, m, 2 * cout), jnp.float32),
        compiler_params=cparams,
    )(xph, wblk, bblk, mb2)
    return out.reshape(n, h_out, w_out, 2 * cout)


def head(feat, wr, wi, br, bi):
    """feat: (N, 2C) pooled [real | imag] means; wr, wi: (1, C); br, bi: (1, 1)."""
    n, c2 = feat.shape
    whead = jnp.concatenate([jnp.concatenate([wr.T, wi.T], axis=1),
                             jnp.concatenate([-wi.T, wr.T], axis=1)], axis=0)  # (2C, 2)
    bhead = jnp.concatenate([br, bi], axis=1)                                  # (1, 2)
    return pl.pallas_call(
        _head_kernel,
        grid=(1,),
        in_specs=[pl.BlockSpec((n, c2), lambda i: (0, 0)),
                  pl.BlockSpec((c2, 2), lambda i: (0, 0)),
                  pl.BlockSpec((1, 2), lambda i: (0, 0))],
        out_specs=pl.BlockSpec((n, 1), lambda i: (0, 0)),
        out_shape=jax.ShapeDtypeStruct((n, 1), jnp.float32),
    )(feat, whead, bhead)


# ---------------------------------------------------------------------------
# Parameter construction (mirrors CNN_Discriminator.__init__ bookkeeping)
# ---------------------------------------------------------------------------
def build_params(key, *, input_channels, num_conv_layers, image_size,
                 channels_multiplicator=1, step_pooling=1, max_channels=128,
                 num_filter=8, kernel_size_conv=3, stride_conv=1,
                 min_spatial_size=8):
    conv_params = []
    in_channels = input_channels
    out_channels = num_filter
    conv_size = image_size
    k = kernel_size_conv
    for l in range(num_conv_layers):
        stride_conv_l = stride_conv
        if l != 0:
            in_channels = min(out_channels, max_channels)
            if l % step_pooling == 0 and conv_size > min_spatial_size:
                out_channels = min(in_channels * channels_multiplicator, max_channels)
                stride_conv_l = 2
                conv_size = conv_size // stride_conv_l
        key, kwr, kwi, kbr, kbi, kmb = jax.random.split(key, 6)
        scale = 1.0 / np.sqrt(k * k * in_channels)
        conv_params.append(dict(
            wr=scale * jax.random.normal(kwr, (k, k, in_channels, out_channels), jnp.float32),
            wi=scale * jax.random.normal(kwi, (k, k, in_channels, out_channels), jnp.float32),
            br=0.1 * jax.random.normal(kbr, (out_channels,), jnp.float32),
            bi=0.1 * jax.random.normal(kbi, (out_channels,), jnp.float32),
            mb=0.1 * jax.random.normal(kmb, (out_channels,), jnp.float32),
            stride=stride_conv_l,
        ))
    num_features = out_channels
    key, kwr, kwi, kbr, kbi = jax.random.split(key, 5)
    scale = 1.0 / np.sqrt(num_features)
    fc = dict(
        wr=scale * jax.random.normal(kwr, (1, num_features), jnp.float32),
        wi=scale * jax.random.normal(kwi, (1, num_features), jnp.float32),
        br=0.1 * jax.random.normal(kbr, (1, 1), jnp.float32),
        bi=0.1 * jax.random.normal(kbi, (1, 1), jnp.float32),
    )
    return dict(conv=conv_params, fc=fc)


# ---------------------------------------------------------------------------
# Forward (Pallas) and pure-JAX reference
# ---------------------------------------------------------------------------
def cnn_discriminator_forward(z, params):
    # z: (N, Cin, H, W) complex64 (NCHW, like the PyTorch module)
    x = jnp.transpose(z, (0, 2, 3, 1))                                 # -> NHWC
    x2 = jnp.concatenate([jnp.real(x), jnp.imag(x)], axis=-1).astype(jnp.float32)

    convs = params['conv']
    feat = None
    for li, layer in enumerate(convs):
        last = (li == len(convs) - 1)
        out = complex_conv_modrelu(
            x2, layer['wr'], layer['wi'], layer['br'], layer['bi'], layer['mb'],
            stride=layer['stride'], pool_only=last)
        if last:
            feat = out                       # (N, 2*C) pooled complex means
        else:
            x2 = out                         # (N, H', W', 2*C)

    fc = params['fc']
    out = head(feat, fc['wr'], fc['wi'], fc['br'], fc['bi'])           # (N, 1) real
    # PyTorch: model(z).real.to(complex64)  (Mod() output is real -> cast to complex)
    return out.astype(jnp.complex64)


def reference_forward(z, params):
    x = jnp.transpose(z, (0, 2, 3, 1))
    xr = jnp.real(x).astype(jnp.float32)
    xi = jnp.imag(x).astype(jnp.float32)
    dn = ('NHWC', 'HWIO', 'NHWC')
    for layer in params['conv']:
        s = layer['stride']
        conv = functools.partial(jax.lax.conv_general_dilated,
                                 window_strides=(s, s),
                                 padding=((1, 1), (1, 1)),
                                 dimension_numbers=dn,
                                 precision=jax.lax.Precision.HIGHEST)
        yr = conv(xr, layer['wr']) - conv(xi, layer['wi']) + layer['br']
        yi = conv(xr, layer['wi']) + conv(xi, layer['wr']) + layer['bi']
        mag = jnp.sqrt(yr * yr + yi * yi)
        scale = jnp.maximum(mag + layer['mb'], 0.0) / (mag + _EPS)
        xr, xi = yr * scale, yi * scale
    fr = jnp.mean(xr, axis=(1, 2))
    fi = jnp.mean(xi, axis=(1, 2))
    fc = params['fc']
    yr = fr @ fc['wr'].T - fi @ fc['wi'].T + fc['br']
    yi = fr @ fc['wi'].T + fi @ fc['wr'].T + fc['bi']
    return jnp.sqrt(yr * yr + yi * yi).astype(jnp.complex64)


if __name__ == "__main__":
    key = jax.random.PRNGKey(0)
    N, CIN, IMG = 2, 4, 16
    kp, kr, ki = jax.random.split(key, 3)

    params = build_params(kp, input_channels=CIN, num_conv_layers=2,
                          image_size=IMG, num_filter=8)

    zr = jax.random.normal(kr, (N, CIN, IMG, IMG), jnp.float32)
    zi = jax.random.normal(ki, (N, CIN, IMG, IMG), jnp.float32)
    z = (zr + 1j * zi).astype(jnp.complex64)

    out = jax.block_until_ready(cnn_discriminator_forward(z, params))
    ref = jax.block_until_ready(reference_forward(z, params))

    assert out.shape == (N, 1), out.shape
    assert out.dtype == jnp.complex64, out.dtype
    np.testing.assert_allclose(np.real(np.asarray(out)), np.real(np.asarray(ref)),
                               rtol=5e-3, atol=1e-3)
    print("KERNEL_OK")
</pallas_src>

<mosaic_0001>
module attributes {stable_mosaic.version = 11 : i64} {
  func.func @_conv_modrelu_kernel(%arg0: i32, %arg1: memref<1x18x18x8xf32, #tpu.memory_space<vmem>>, %arg2: memref<9x8x16xf32, #tpu.memory_space<vmem>>, %arg3: memref<1x16xf32, #tpu.memory_space<vmem>>, %arg4: memref<1x8xf32, #tpu.memory_space<vmem>>, %arg5: memref<1x256x16xf32, #tpu.memory_space<vmem>>) attributes {dimension_semantics = [#tpu.dimension_semantics<parallel>], iteration_bounds = array<i64: 2>, scalar_prefetch = 0 : i64, scratch_operands = 0 : i64, tpu.core_type = #tpu.core_type<tc>, window_params = [{transform_indices = @transform_0, window_bounds = array<i64: 1, 18, 18, 8>}, {pipeline_mode = #tpu.pipeline_mode<synchronous>, transform_indices = @transform_1, window_bounds = array<i64: 9, 8, 16>}, {pipeline_mode = #tpu.pipeline_mode<synchronous>, transform_indices = @transform_2, window_bounds = array<i64: 1, 16>}, {pipeline_mode = #tpu.pipeline_mode<synchronous>, transform_indices = @transform_3, window_bounds = array<i64: 1, 8>}, {transform_indices = @transform_4, window_bounds = array<i64: 1, 256, 16>}]} {
    %cst = arith.constant 0.000000e+00 : f32
    %0 = vector.broadcast %cst : f32 to vector<256x16xf32>
    %c0 = arith.constant 0 : index
    %c0_0 = arith.constant 0 : index
    %c0_1 = arith.constant 0 : index
    %c0_2 = arith.constant 0 : index
    %1 = vector.load %arg1[%c0, %c0_0, %c0_1, %c0_2] : memref<1x18x18x8xf32, #tpu.memory_space<vmem>>, vector<1x16x16x8xf32>
    %2 = vector.shape_cast %1 : vector<1x16x16x8xf32> to vector<16x16x8xf32>
    %3 = vector.shape_cast %2 : vector<16x16x8xf32> to vector<256x8xf32>
    %c0_3 = arith.constant 0 : index
    %c0_4 = arith.constant 0 : index
    %c0_5 = arith.constant 0 : index
    %4 = vector.load %arg2[%c0_3, %c0_4, %c0_5] : memref<9x8x16xf32, #tpu.memory_space<vmem>>, vector<1x8x16xf32>
    %5 = vector.shape_cast %4 : vector<1x8x16xf32> to vector<8x16xf32>
    %cst_6 = arith.constant dense<0.000000e+00> : vector<256x16xf32>
    %6 = tpu.matmul %3, %5, %cst_6 {dimension_numbers = #tpu.dot_dimension_numbers<[1], [0], [0], [1], [0, 0, 1, 1], [], []>} : vector<256x8xf32>, vector<8x16xf32>, vector<256x16xf32> -> vector<256x16xf32>
    %7 = arith.addf %0, %6 : vector<256x16xf32>
    %c0_7 = arith.constant 0 : index
    %c0_8 = arith.constant 0 : index
    %c1 = arith.constant 1 : index
    %c0_9 = arith.constant 0 : index
    %8 = vector.load %arg1[%c0_7, %c0_8, %c1, %c0_9] : memref<1x18x18x8xf32, #tpu.memory_space<vmem>>, vector<1x16x16x8xf32>
    %9 = vector.shape_cast %8 : vector<1x16x16x8xf32> to vector<16x16x8xf32>
    %10 = vector.shape_cast %9 : vector<16x16x8xf32> to vector<256x8xf32>
    %c1_10 = arith.constant 1 : index
    %c0_11 = arith.constant 0 : index
    %c0_12 = arith.constant 0 : index
    %11 = vector.load %arg2[%c1_10, %c0_11, %c0_12] : memref<9x8x16xf32, #tpu.memory_space<vmem>>, vector<1x8x16xf32>
    %12 = vector.shape_cast %11 : vector<1x8x16xf32> to vector<8x16xf32>
    %cst_13 = arith.constant dense<0.000000e+00> : vector<256x16xf32>
    %13 = tpu.matmul %10, %12, %cst_13 {dimension_numbers = #tpu.dot_dimension_numbers<[1], [0], [0], [1], [0, 0, 1, 1], [], []>} : vector<256x8xf32>, vector<8x16xf32>, vector<256x16xf32> -> vector<256x16xf32>
    %14 = arith.addf %7, %13 : vector<256x16xf32>
    %c0_14 = arith.constant 0 : index
    %c0_15 = arith.constant 0 : index
    %c2 = arith.constant 2 : index
    %c0_16 = arith.constant 0 : index
    %15 = vector.load %arg1[%c0_14, %c0_15, %c2, %c0_16] : memref<1x18x18x8xf32, #tpu.memory_space<vmem>>, vector<1x16x16x8xf32>
    %16 = vector.shape_cast %15 : vector<1x16x16x8xf32> to vector<16x16x8xf32>
    %17 = vector.shape_cast %16 : vector<16x16x8xf32> to vector<256x8xf32>
    %c2_17 = arith.constant 2 : index
    %c0_18 = arith.constant 0 : index
    %c0_19 = arith.constant 0 : index
    %18 = vector.load %arg2[%c2_17, %c0_18, %c0_19] : memref<9x8x16xf32, #tpu.memory_space<vmem>>, vector<1x8x16xf32>
    %19 = vector.shape_cast %18 : vector<1x8x16xf32> to vector<8x16xf32>
    %cst_20 = arith.constant dense<0.000000e+00> : vector<256x16xf32>
    %20 = tpu.matmul %17, %19, %cst_20 {dimension_numbers = #tpu.dot_dimension_numbers<[1], [0], [0], [1], [0, 0, 1, 1], [], []>} : vector<256x8xf32>, vector<8x16xf32>, vector<256x16xf32> -> vector<256x16xf32>
    %21 = arith.addf %14, %20 : vector<256x16xf32>
    %c0_21 = arith.constant 0 : index
    %c1_22 = arith.constant 1 : index
    %c0_23 = arith.constant 0 : index
    %c0_24 = arith.constant 0 : index
    %22 = vector.load %arg1[%c0_21, %c1_22, %c0_23, %c0_24] : memref<1x18x18x8xf32, #tpu.memory_space<vmem>>, vector<1x16x16x8xf32>
    %23 = vector.shape_cast %22 : vector<1x16x16x8xf32> to vector<16x16x8xf32>
    %24 = vector.shape_cast %23 : vector<16x16x8xf32> to vector<256x8xf32>
    %c3 = arith.constant 3 : index
    %c0_25 = arith.constant 0 : index
    %c0_26 = arith.constant 0 : index
    %25 = vector.load %arg2[%c3, %c0_25, %c0_26] : memref<9x8x16xf32, #tpu.memory_space<vmem>>, vector<1x8x16xf32>
    %26 = vector.shape_cast %25 : vector<1x8x16xf32> to vector<8x16xf32>
    %cst_27 = arith.constant dense<0.000000e+00> : vector<256x16xf32>
    %27 = tpu.matmul %24, %26, %cst_27 {dimension_numbers = #tpu.dot_dimension_numbers<[1], [0], [0], [1], [0, 0, 1, 1], [], []>} : vector<256x8xf32>, vector<8x16xf32>, vector<256x16xf32> -> vector<256x16xf32>
    %28 = arith.addf %21, %27 : vector<256x16xf32>
    %c0_28 = arith.constant 0 : index
    %c1_29 = arith.constant 1 : index
    %c1_30 = arith.constant 1 : index
    %c0_31 = arith.constant 0 : index
    %29 = vector.load %arg1[%c0_28, %c1_29, %c1_30, %c0_31] : memref<1x18x18x8xf32, #tpu.memory_space<vmem>>, vector<1x16x16x8xf32>
    %30 = vector.shape_cast %29 : vector<1x16x16x8xf32> to vector<16x16x8xf32>
    %31 = vector.shape_cast %30 : vector<16x16x8xf32> to vector<256x8xf32>
    %c4 = arith.constant 4 : index
    %c0_32 = arith.constant 0 : index
    %c0_33 = arith.constant 0 : index
    %32 = vector.load %arg2[%c4, %c0_32, %c0_33] : memref<9x8x16xf32, #tpu.memory_space<vmem>>, vector<1x8x16xf32>
    %33 = vector.shape_cast %32 : vector<1x8x16xf32> to vector<8x16xf32>
    %cst_34 = arith.constant dense<0.000000e+00> : vector<256x16xf32>
    %34 = tpu.matmul %31, %33, %cst_34 {dimension_numbers = #tpu.dot_dimension_numbers<[1], [0], [0], [1], [0, 0, 1, 1], [], []>} : vector<256x8xf32>, vector<8x16xf32>, vector<256x16xf32> -> vector<256x16xf32>
    %35 = arith.addf %28, %34 : vector<256x16xf32>
    %c0_35 = arith.constant 0 : index
    %c1_36 = arith.constant 1 : index
    %c2_37 = arith.constant 2 : index
    %c0_38 = arith.constant 0 : index
    %36 = vector.load %arg1[%c0_35, %c1_36, %c2_37, %c0_38] : memref<1x18x18x8xf32, #tpu.memory_space<vmem>>, vector<1x16x16x8xf32>
    %37 = vector.shape_cast %36 : vector<1x16x16x8xf32> to vector<16x16x8xf32>
    %38 = vector.shape_cast %37 : vector<16x16x8xf32> to vector<256x8xf32>
    %c5 = arith.constant 5 : index
    %c0_39 = arith.constant 0 : index
    %c0_40 = arith.constant 0 : index
    %39 = vector.load %arg2[%c5, %c0_39, %c0_40] : memref<9x8x16xf32, #tpu.memory_space<vmem>>, vector<1x8x16xf32>
    %40 = vector.shape_cast %39 : vector<1x8x16xf32> to vector<8x16xf32>
    %cst_41 = arith.constant dense<0.000000e+00> : vector<256x16xf32>
    %41 = tpu.matmul %38, %40, %cst_41 {dimension_numbers = #tpu.dot_dimension_numbers<[1], [0], [0], [1], [0, 0, 1, 1], [], []>} : vector<256x8xf32>, vector<8x16xf32>, vector<256x16xf32> -> vector<256x16xf32>
    %42 = arith.addf %35, %41 : vector<256x16xf32>
    %c0_42 = arith.constant 0 : index
    %c2_43 = arith.constant 2 : index
    %c0_44 = arith.constant 0 : index
    %c0_45 = arith.constant 0 : index
    %43 = vector.load %arg1[%c0_42, %c2_43, %c0_44, %c0_45] : memref<1x18x18x8xf32, #tpu.memory_space<vmem>>, vector<1x16x16x8xf32>
    %44 = vector.shape_cast %43 : vector<1x16x16x8xf32> to vector<16x16x8xf32>
    %45 = vector.shape_cast %44 : vector<16x16x8xf32> to vector<256x8xf32>
    %c6 = arith.constant 6 : index
    %c0_46 = arith.constant 0 : index
    %c0_47 = arith.constant 0 : index
    %46 = vector.load %arg2[%c6, %c0_46, %c0_47] : memref<9x8x16xf32, #tpu.memory_space<vmem>>, vector<1x8x16xf32>
    %47 = vector.shape_cast %46 : vector<1x8x16xf32> to vector<8x16xf32>
    %cst_48 = arith.constant dense<0.000000e+00> : vector<256x16xf32>
    %48 = tpu.matmul %45, %47, %cst_48 {dimension_numbers = #tpu.dot_dimension_numbers<[1], [0], [0], [1], [0, 0, 1, 1], [], []>} : vector<256x8xf32>, vector<8x16xf32>, vector<256x16xf32> -> vector<256x16xf32>
    %49 = arith.addf %42, %48 : vector<256x16xf32>
    %c0_49 = arith.constant 0 : index
    %c2_50 = arith.constant 2 : index
    %c1_51 = arith.constant 1 : index
    %c0_52 = arith.constant 0 : index
    %50 = vector.load %arg1[%c0_49, %c2_50, %c1_51, %c0_52] : memref<1x18x18x8xf32, #tpu.memory_space<vmem>>, vector<1x16x16x8xf32>
    %51 = vector.shape_cast %50 : vector<1x16x16x8xf32> to vector<16x16x8xf32>
    %52 = vector.shape_cast %51 : vector<16x16x8xf32> to vector<256x8xf32>
    %c7 = arith.constant 7 : index
    %c0_53 = arith.constant 0 : index
    %c0_54 = arith.constant 0 : index
    %53 = vector.load %arg2[%c7, %c0_53, %c0_54] : memref<9x8x16xf32, #tpu.memory_space<vmem>>, vector<1x8x16xf32>
    %54 = vector.shape_cast %53 : vector<1x8x16xf32> to vector<8x16xf32>
    %cst_55 = arith.constant dense<0.000000e+00> : vector<256x16xf32>
    %55 = tpu.matmul %52, %54, %cst_55 {dimension_numbers = #tpu.dot_dimension_numbers<[1], [0], [0], [1], [0, 0, 1, 1], [], []>} : vector<256x8xf32>, vector<8x16xf32>, vector<256x16xf32> -> vector<256x16xf32>
    %56 = arith.addf %49, %55 : vector<256x16xf32>
    %c0_56 = arith.constant 0 : index
    %c2_57 = arith.constant 2 : index
    %c2_58 = arith.constant 2 : index
    %c0_59 = arith.constant 0 : index
    %57 = vector.load %arg1[%c0_56, %c2_57, %c2_58, %c0_59] : memref<1x18x18x8xf32, #tpu.memory_space<vmem>>, vector<1x16x16x8xf32>
    %58 = vector.shape_cast %57 : vector<1x16x16x8xf32> to vector<16x16x8xf32>
    %59 = vector.shape_cast %58 : vector<16x16x8xf32> to vector<256x8xf32>
    %c8 = arith.constant 8 : index
    %c0_60 = arith.constant 0 : index
    %c0_61 = arith.constant 0 : index
    %60 = vector.load %arg2[%c8, %c0_60, %c0_61] : memref<9x8x16xf32, #tpu.memory_space<vmem>>, vector<1x8x16xf32>
    %61 = vector.shape_cast %60 : vector<1x8x16xf32> to vector<8x16xf32>
    %cst_62 = arith.constant dense<0.000000e+00> : vector<256x16xf32>
    %62 = tpu.matmul %59, %61, %cst_62 {dimension_numbers = #tpu.dot_dimension_numbers<[1], [0], [0], [1], [0, 0, 1, 1], [], []>} : vector<256x8xf32>, vector<8x16xf32>, vector<256x16xf32> -> vector<256x16xf32>
    %63 = arith.addf %56, %62 : vector<256x16xf32>
    %c0_63 = arith.constant 0 : index
    %c0_64 = arith.constant 0 : index
    %64 = vector.load %arg3[%c0_63, %c0_64] : memref<1x16xf32, #tpu.memory_space<vmem>>, vector<1x16xf32>
    %65 = vector.broadcast %64 : vector<1x16xf32> to vector<256x16xf32>
    %66 = arith.addf %63, %65 : vector<256x16xf32>
    %67 = vector.extract_strided_slice %66 {offsets = [0, 0], sizes = [256, 8], strides = [1, 1]} : vector<256x16xf32> to vector<256x8xf32>
    %68 = vector.extract_strided_slice %66 {offsets = [0, 8], sizes = [256, 8], strides = [1, 1]} : vector<256x16xf32> to vector<256x8xf32>
    %69 = arith.mulf %67, %67 : vector<256x8xf32>
    %70 = arith.mulf %68, %68 : vector<256x8xf32>
    %71 = arith.addf %69, %70 : vector<256x8xf32>
    %72 = math.sqrt %71 : vector<256x8xf32>
    %c0_65 = arith.constant 0 : index
    %c0_66 = arith.constant 0 : index
    %73 = vector.load %arg4[%c0_65, %c0_66] : memref<1x8xf32, #tpu.memory_space<vmem>>, vector<1x8xf32>
    %74 = vector.broadcast %73 : vector<1x8xf32> to vector<256x8xf32>
    %75 = arith.addf %72, %74 : vector<256x8xf32>
    %cst_67 = arith.constant 0.000000e+00 : f32
    %76 = vector.broadcast %cst_67 : f32 to vector<256x8xf32>
    %77 = arith.maximumf %75, %76 : vector<256x8xf32>
    %cst_68 = arith.constant 9.99999971E-10 : f32
    %78 = vector.broadcast %cst_68 : f32 to vector<256x8xf32>
    %79 = arith.addf %72, %78 : vector<256x8xf32>
    %80 = tpu.reciprocal %79 {approx = true} : vector<256x8xf32> -> vector<256x8xf32>
    %81 = arith.mulf %77, %80 : vector<256x8xf32>
    %82 = tpu.concatenate %81, %81 in 1 : vector<256x8xf32>, vector<256x8xf32> -> vector<256x16xf32>
    %83 = arith.mulf %66, %82 : vector<256x16xf32>
    %c0_69 = arith.constant 0 : index
    %c0_70 = arith.constant 0 : index
    %c0_71 = arith.constant 0 : index
    %84 = vector.load %arg5[%c0_69, %c0_70, %c0_71] : memref<1x256x16xf32, #tpu.memory_space<vmem>>, vector<1x256x16xf32>
    %85 = vector.shape_cast %84 : vector<1x256x16xf32> to vector<256x16xf32>
    %86 = vector.shape_cast %83 : vector<256x16xf32> to vector<1x256x16xf32>
    tpu.vector_store %arg5[%c0_69, %c0_70, %c0_71], %86 {strides = array<i32>} : memref<1x256x16xf32, #tpu.memory_space<vmem>>, vector<1x256x16xf32>,
    return
  }
  func.func @transform_0(%arg0: i32) -> (i32, i32, i32, i32) {
    %c0_i32 = arith.constant 0 : i32
    %c0_i32_0 = arith.constant 0 : i32
    %c0_i32_1 = arith.constant 0 : i32
    %c0_i32_2 = arith.constant 0 : i32
    return %arg0, %c0_i32, %c0_i32_0, %c0_i32_1 : i32, i32, i32, i32
  }
  func.func @transform_1(%arg0: i32) -> (i32, i32, i32) {
    %c0_i32 = arith.constant 0 : i32
    %c0_i32_0 = arith.constant 0 : i32
    %c0_i32_1 = arith.constant 0 : i32
    %c0_i32_2 = arith.constant 0 : i32
    return %c0_i32, %c0_i32_0, %c0_i32_1 : i32, i32, i32
  }
  func.func @transform_2(%arg0: i32) -> (i32, i32) {
    %c0_i32 = arith.constant 0 : i32
    %c0_i32_0 = arith.constant 0 : i32
    %c0_i32_1 = arith.constant 0 : i32
    return %c0_i32, %c0_i32_0 : i32, i32
  }
  func.func @transform_3(%arg0: i32) -> (i32, i32) {
    %c0_i32 = arith.constant 0 : i32
    %c0_i32_0 = arith.constant 0 : i32
    %c0_i32_1 = arith.constant 0 : i32
    return %c0_i32, %c0_i32_0 : i32, i32
  }
  func.func @transform_4(%arg0: i32) -> (i32, i32, i32) {
    %c0_i32 = arith.constant 0 : i32
    %c0_i32_0 = arith.constant 0 : i32
    %c0_i32_1 = arith.constant 0 : i32
    return %arg0, %c0_i32, %c0_i32_0 : i32, i32, i32
  }
}

</mosaic_0001>

<llo_original>
// kernel: tpu_custom_call.1
$region0: #{tpu_custom_call.1}
  #allocation0 [shape = 'u32[]', space=smem, size = 0x4, offset = 0x4, fixed_abs, tag = 'smem constant byte address 0x4 - core index']
  #allocation1 [shape = 'u32[72,128]{1,0:T(1,128)}', space=vmem, size = 0x9000, scoped, tag = 'internal scratch']
  %s0 = inlined_call_operand.vmem [shape: f32[2,18,18,8], index: 0, kind: input, shape index: {}]
  %s1 = inlined_call_operand.vmem [shape: f32[9,8,16], index: 1, kind: input, shape index: {}]
  %s2 = inlined_call_operand.vmem [shape: f32[1,16], index: 2, kind: input, shape index: {}]
  %s3 = inlined_call_operand.vmem [shape: f32[1,8], index: 3, kind: input, shape index: {}]
  %s4 = inlined_call_operand.vmem [shape: f32[2,256,16], index: 4, kind: output, shape index: {}]
  %s5 = sld [smem:[#allocation0]]
  $region49: #{tpu_custom_call.1} parent=0
    _
  %s7 = ssub.s32 1, %s5
  %s8 = scalar_select 0, %s7, %s5
  loop: start=0, step=1, limit=4
  $region2: #{tpu_custom_call.1} parent=0 // loop_pre_header
    _
  $region3: #{tpu_custom_call.1} parent=0 // loop_header
    %s10 = sphi 0, %s14
    %p11 = scmp.ge.s32.totalorder %s10, 4
    %s20 = sphi 0, %s22
    %s23 = sphi 0, %s20
    %s24 = sphi 0, %s23
    %s40 = sphi 0, %s24
    %s44 = sphi 0, %s44
    %s46 = sphi 0, %s44
    %s47 = sphi 0, %s46
    %s61 = sphi 0, %s47
    %s65 = sphi 0, %s65
    %s67 = sphi 0, %s65
    %s68 = sphi 0, %s67
    %s82 = sphi 0, %s68
    %s86 = sphi 0, %s86
    %s88 = sphi 0, %s86
    %s89 = sphi 0, %s88
    %s103 = sphi 0, %s89
    %s109 = sphi 0, %s111
    %s112 = sphi 0, %s109
    %s113 = sphi 0, %s112
    %s129 = sphi 0, %s113
  $region4: #{tpu_custom_call.1} parent=0 // loop_header_branch
    %13 = sbr.rel (%p11) target = $region8
  $region5: #{tpu_custom_call.1} parent=0 // loop_body
    %s15 = ssub.s32 %s10, 1
    %s16 = ssub.s32 %s10, 2
    %s17 = sadd.s32 %s10, 1
    %s18 = ssub.s32 %s10, %s17
    %p19 = scmp.eq.s32.totalorder %s18, 0
    %s21 = sadd.s32 %s20, 1
    %s22 = scalar_select %p19, %s20, %s21
    %p25 = pneg %p19
    %p26 = scmp.eq.s32.totalorder %s10, 1
    %p27 = por %p25, %p26
    %p28 = scmp.ne.s32.totalorder %s20, %s23
    %p29 = scmp.eq.s32.totalorder %s10, 0
    %p30 = por %p28, %p29
    %p31 = scmp.ne.s32.totalorder %s20, %s23
    %p32 = scmp.eq.s32.totalorder %s15, 1
    %p33 = por %p31, %p32
    %p34 = scmp.ne.s32.totalorder %s23, %s24
    %p35 = scmp.eq.s32.totalorder %s15, 0
    %p36 = por %p34, %p35
    %p37 = scmp.ne.s32.totalorder %s23, %s24
    %p38 = scmp.eq.s32.totalorder %s16, 1
    %p39 = por %p37, %p38
    %p41 = scmp.ne.s32.totalorder %s24, %s40
    %p42 = scmp.eq.s32.totalorder %s16, 0
    %p43 = por %p41, %p42
    %s45 = sadd.s32 %s44, 1
    %p48 = scmp.eq.s32.totalorder %s10, 1
    %p49 = scmp.ne.s32.totalorder %s44, %s46
    %p50 = scmp.eq.s32.totalorder %s10, 0
    %p51 = por %p49, %p50
    %p52 = scmp.ne.s32.totalorder %s44, %s46
    %p53 = scmp.eq.s32.totalorder %s15, 1
    %p54 = por %p52, %p53
    %p55 = scmp.ne.s32.totalorder %s46, %s47
    %p56 = scmp.eq.s32.totalorder %s15, 0
    %p57 = por %p55, %p56
    %p58 = scmp.ne.s32.totalorder %s46, %s47
    %p59 = scmp.eq.s32.totalorder %s16, 1
    %p60 = por %p58, %p59
    %p62 = scmp.ne.s32.totalorder %s47, %s61
    %p63 = scmp.eq.s32.totalorder %s16, 0
    %p64 = por %p62, %p63
    %s66 = sadd.s32 %s65, 1
    %p69 = scmp.eq.s32.totalorder %s10, 1
    %p70 = scmp.ne.s32.totalorder %s65, %s67
    %p71 = scmp.eq.s32.totalorder %s10, 0
    %p72 = por %p70, %p71
    %p73 = scmp.ne.s32.totalorder %s65, %s67
    %p74 = scmp.eq.s32.totalorder %s15, 1
    %p75 = por %p73, %p74
    %p76 = scmp.ne.s32.totalorder %s67, %s68
    %p77 = scmp.eq.s32.totalorder %s15, 0
    %p78 = por %p76, %p77
    %p79 = scmp.ne.s32.totalorder %s67, %s68
    %p80 = scmp.eq.s32.totalorder %s16, 1
    %p81 = por %p79, %p80
    %p83 = scmp.ne.s32.totalorder %s68, %s82
    %p84 = scmp.eq.s32.totalorder %s16, 0
    %p85 = por %p83, %p84
    %s87 = sadd.s32 %s86, 1
    %p90 = scmp.eq.s32.totalorder %s10, 1
    %p91 = scmp.ne.s32.totalorder %s86, %s88
    %p92 = scmp.eq.s32.totalorder %s10, 0
    %p93 = por %p91, %p92
    %p94 = scmp.ne.s32.totalorder %s86, %s88
    %p95 = scmp.eq.s32.totalorder %s15, 1
    %p96 = por %p94, %p95
    %p97 = scmp.ne.s32.totalorder %s88, %s89
    %p98 = scmp.eq.s32.totalorder %s15, 0
    %p99 = por %p97, %p98
    %p100 = scmp.ne.s32.totalorder %s88, %s89
    %p101 = scmp.eq.s32.totalorder %s16, 1
    %p102 = por %p100, %p101
    %p104 = scmp.ne.s32.totalorder %s89, %s103
    %p105 = scmp.eq.s32.totalorder %s16, 0
    %p106 = por %p104, %p105
    %s107 = ssub.s32 %s10, %s17
    %p108 = scmp.eq.s32.totalorder %s107, 0
    %s110 = sadd.s32 %s109, 1
    %s111 = scalar_select %p108, %s109, %s110
    %p114 = pneg %p108
    %p115 = scmp.eq.s32.totalorder %s10, 1
    %p116 = por %p114, %p115
    %p117 = scmp.ne.s32.totalorder %s109, %s112
    %p118 = scmp.eq.s32.totalorder %s10, 0
    %p119 = por %p117, %p118
    %p120 = scmp.ne.s32.totalorder %s109, %s112
    %p121 = scmp.eq.s32.totalorder %s15, 1
    %p122 = por %p120, %p121
    %p123 = scmp.ne.s32.totalorder %s112, %s113
    %p124 = scmp.eq.s32.totalorder %s15, 0
    %p125 = por %p123, %p124
    %p126 = scmp.ne.s32.totalorder %s112, %s113
    %p127 = scmp.eq.s32.totalorder %s16, 1
    %p128 = por %p126, %p127
    %p130 = scmp.ne.s32.totalorder %s113, %s129
    %p131 = scmp.eq.s32.totalorder %s16, 0
    %p132 = por %p130, %p131
    %p133 = scmp.le.s32.totalorder 1, %s10
    %p134 = scmp.lt.s32.totalorder %s10, 3
    %p135 = pnand %p133, %p134
    %p136 = pneg %p135
    // Predicated region
    $region9: #{tpu_custom_call.1} parent=5 // pred_check
      _
    $region10: #{tpu_custom_call.1} parent=5 // pred_check_branch
      %138 = sbr.rel (%p135) target = $region12
    $region11: #{tpu_custom_call.1} parent=5 // pred_region
      %s139 = ssub.s32 %s10, 1
      // Predicated region
      $region13: #{tpu_custom_call.1} parent=11 // pred_check
        %p140 = pneg %p57
      $region14: #{tpu_custom_call.1} parent=11 // pred_check_branch
        %142 = sbr.rel (%p140) target = $region16
      $region15: #{tpu_custom_call.1} parent=11 // pred_region
        _
      $region16: #{tpu_custom_call.1} parent=11 // pred_fallthru
        _
      // Predicated region
      $region17: #{tpu_custom_call.1} parent=11 // pred_check
        %p143 = pneg %p78
      $region18: #{tpu_custom_call.1} parent=11 // pred_check_branch
        %145 = sbr.rel (%p143) target = $region20
      $region19: #{tpu_custom_call.1} parent=11 // pred_region
        _
      $region20: #{tpu_custom_call.1} parent=11 // pred_fallthru
        _
      // Predicated region
      $region21: #{tpu_custom_call.1} parent=11 // pred_check
        %p146 = pneg %p99
      $region22: #{tpu_custom_call.1} parent=11 // pred_check_branch
        %148 = sbr.rel (%p146) target = $region24
      $region23: #{tpu_custom_call.1} parent=11 // pred_region
        _
      $region24: #{tpu_custom_call.1} parent=11 // pred_fallthru
        _
    $region12: #{tpu_custom_call.1} parent=5 // pred_fallthru
      _
    %p149 = scmp.lt.s32.totalorder %s10, 2
    // Predicated region
    $region25: #{tpu_custom_call.1} parent=5 // pred_check
      %p150 = pneg %p149
    $region26: #{tpu_custom_call.1} parent=5 // pred_check_branch
      %152 = sbr.rel (%p150) target = $region28
    $region27: #{tpu_custom_call.1} parent=5 // pred_region
      // Predicated region
      $region29: #{tpu_custom_call.1} parent=27 // pred_check
        %p153 = pneg %p30
      $region30: #{tpu_custom_call.1} parent=27 // pred_check_branch
        %155 = sbr.rel (%p153) target = $region32
      $region31: #{tpu_custom_call.1} parent=27 // pred_region
        %p156 = scmp.lt.s32.totalorder %s10, 1
        %s157 = scalar_select %p156, %s10, 1
        %s158 = smul.addr %s157, 54
        %s159 = smul.addr %s158, 8
        %s160 = scalar_lea.vmem %s0, %s159
      $region32: #{tpu_custom_call.1} parent=27 // pred_fallthru
        _
    $region28: #{tpu_custom_call.1} parent=5 // pred_fallthru
      _
    %p161 = scmp.le.s32.totalorder 1, %s10
    %p162 = scmp.lt.s32.totalorder %s10, 3
    %p163 = pnand %p161, %p162
    %p164 = pneg %p163
    // Predicated region
    $region33: #{tpu_custom_call.1} parent=5 // pred_check
      _
    $region34: #{tpu_custom_call.1} parent=5 // pred_check_branch
      %166 = sbr.rel (%p163) target = $region36
    $region35: #{tpu_custom_call.1} parent=5 // pred_region
      %s167 = ssub.s32 %s10, 1
      %p168 = scmp.lt.s32.totalorder %s15, 1
      %s169 = scalar_select %p168, %s15, 1
      %s170 = smul.addr %s169, 54
      %s171 = smul.addr %s170, 8
      %s172 = scalar_lea.vmem %s0, %s171
      %p173 = pneg %p36
      %p174 = pneg %p33
      %p175 = pneg %p57
      %p176 = pneg %p54
      %p177 = pneg %p78
      %p178 = pneg %p75
      %p179 = pneg %p99
      %p180 = pneg %p96
      %p181 = pneg %p125
      %p182 = pneg %p122
      %p183 = scmp.lt.s32.totalorder %s15, 1
      %s184 = scalar_select %p183, %s15, 1
      %s185 = smul.addr %s184, 32
      %s186 = smul.addr %s185, 8
      %s187 = scalar_lea.vmem %s4, %s186
      %p188 = scmp.lt.s32.totalorder %s15, 1
      %s189 = scalar_select %p188, %s15, 1
      %s190 = smul.addr %s189, 54
      %s191 = smul.addr %s190, 8
      %s192 = scalar_lea.vmem %s0, %s191
      %p193 = scmp.lt.s32.totalorder %s15, 1
      %s194 = scalar_select %p193, %s15, 1
      %s195 = smul.addr %s194, 32
      %s196 = smul.addr %s195, 8
      %s197 = scalar_lea.vmem %s4, %s196
      %v198 = vld [vmem:[%s192] sm:$0xff]
      %v199 = vld [vmem:[%s192 + $0x8] sm:$0xff]
      %v200 = vld [vmem:[%s192 + $0x18] sm:$0xff]
      %v201 = vld [vmem:[%s192 + $0x20] sm:$0xff]
      %v202 = vld [vmem:[%s192 + $0x30] sm:$0xff]
      %v203 = vld [vmem:[%s192 + $0x38] sm:$0xff]
      %v204 = vld [vmem:[%s192 + $0x48] sm:$0xff]
      %v205 = vld [vmem:[%s192 + $0x50] sm:$0xff]
      %v206 = vld [vmem:[%s192 + $0x60] sm:$0xff]
      %v207 = vld [vmem:[%s192 + $0x68] sm:$0xff]
      %v208 = vld [vmem:[%s192 + $0x78] sm:$0xff]
      %v209 = vld [vmem:[%s192 + $0x80] sm:$0xff]
      %v210 = vld [vmem:[%s192 + $0x90] sm:$0xff]
      %v211 = vld [vmem:[%s192 + $0x98] sm:$0xff]
      %v212 = vld [vmem:[%s192 + $0xa8] sm:$0xff]
      %v213 = vld [vmem:[%s192 + $0xb0] sm:$0xff]
      %v214 = vld [vmem:[%s192 + $0xc0] sm:$0xff]
      %v215 = vld [vmem:[%s192 + $0xc8] sm:$0xff]
      %v216 = vld [vmem:[%s192 + $0xd8] sm:$0xff]
      %v217 = vld [vmem:[%s192 + $0xe0] sm:$0xff]
      %v218 = vld [vmem:[%s192 + $0xf0] sm:$0xff]
      %v219 = vld [vmem:[%s192 + $0xf8] sm:$0xff]
      %v220 = vld [vmem:[%s192 + $0x108] sm:$0xff]
      %v221 = vld [vmem:[%s192 + $0x110] sm:$0xff]
      %v222 = vld [vmem:[%s192 + $0x120] sm:$0xff]
      %v223 = vld [vmem:[%s192 + $0x128] sm:$0xff]
      %v224 = vld [vmem:[%s192 + $0x138] sm:$0xff]
      %v225 = vld [vmem:[%s192 + $0x140] sm:$0xff]
      %v226 = vld [vmem:[%s192 + $0x150] sm:$0xff]
      %v227 = vld [vmem:[%s192 + $0x158] sm:$0xff]
      %v228 = vld [vmem:[%s192 + $0x168] sm:$0xff]
      %v229 = vld [vmem:[%s192 + $0x170] sm:$0xff]
      %v230 = vld [vmem:[%s1] sm:$0xff]
      %v231 = vld [vmem:[%s192 + $0x1] sm:$0xff]
      %v232 = vld [vmem:[%s192 + $0x9] sm:$0xff]
      %v233 = vld [vmem:[%s192 + $0x19] sm:$0xff]
      %v234 = vld [vmem:[%s192 + $0x21] sm:$0xff]
      %v235 = vld [vmem:[%s192 + $0x31] sm:$0xff]
      %v236 = vld [vmem:[%s192 + $0x39] sm:$0xff]
      %v237 = vld [vmem:[%s192 + $0x49] sm:$0xff]
      %v238 = vld [vmem:[%s192 + $0x51] sm:$0xff]
      %v239 = vld [vmem:[%s192 + $0x61] sm:$0xff]
      %v240 = vld [vmem:[%s192 + $0x69] sm:$0xff]
      %v241 = vld [vmem:[%s192 + $0x79] sm:$0xff]
      %v242 = vld [vmem:[%s192 + $0x81] sm:$0xff]
      %v243 = vld [vmem:[%s192 + $0x91] sm:$0xff]
      %v244 = vld [vmem:[%s192 + $0x99] sm:$0xff]
      %v245 = vld [vmem:[%s192 + $0xa9] sm:$0xff]
      %v246 = vld [vmem:[%s192 + $0xb1] sm:$0xff]
      %v247 = vld [vmem:[%s192 + $0xc1] sm:$0xff]
      %v248 = vld [vmem:[%s192 + $0xc9] sm:$0xff]
      %v249 = vld [vmem:[%s192 + $0xd9] sm:$0xff]
      %v250 = vld [vmem:[%s192 + $0xe1] sm:$0xff]
      %v251 = vld [vmem:[%s192 + $0xf1] sm:$0xff]
      %v252 = vld [vmem:[%s192 + $0xf9] sm:$0xff]
      %v253 = vld [vmem:[%s192 + $0x109] sm:$0xff]
      %v254 = vld [vmem:[%s192 + $0x111] sm:$0xff]
      %v255 = vld [vmem:[%s192 + $0x121] sm:$0xff]
      %v256 = vld [vmem:[%s192 + $0x129] sm:$0xff]
      %v257 = vld [vmem:[%s192 + $0x139] sm:$0xff]
      %v258 = vld [vmem:[%s192 + $0x141] sm:$0xff]
      %v259 = vld [vmem:[%s192 + $0x151] sm:$0xff]
      %v260 = vld [vmem:[%s192 + $0x159] sm:$0xff]
      %v261 = vld [vmem:[%s192 + $0x169] sm:$0xff]
      %v262 = vld [vmem:[%s192 + $0x171] sm:$0xff]
      %s263 = scalar_lea.vmem %s1, 8
      %v264 = vld [vmem:[%s263] sm:$0xff]
      %vm265 = vcmask 64512
      %v267 = vsel %vm265, %v231, 0
      %v270 = vsel %vm265, %v232, 0
      %v273 = vsel %vm265, %v233, 0
      %v276 = vsel %vm265, %v234, 0
      %v279 = vsel %vm265, %v235, 0
      %v282 = vsel %vm265, %v236, 0
      %v285 = vsel %vm265, %v237, 0
      %v288 = vsel %vm265, %v238, 0
      %v291 = vsel %vm265, %v239, 0
      %v294 = vsel %vm265, %v240, 0
      %v297 = vsel %vm265, %v241, 0
      %v300 = vsel %vm265, %v242, 0
      %v303 = vsel %vm265, %v243, 0
      %v306 = vsel %vm265, %v244, 0
      %v309 = vsel %vm265, %v245, 0
      %v312 = vsel %vm265, %v246, 0
      %v315 = vsel %vm265, %v247, 0
      %v318 = vsel %vm265, %v248, 0
      %v321 = vsel %vm265, %v249, 0
      %v324 = vsel %vm265, %v250, 0
      %v327 = vsel %vm265, %v251, 0
      %v330 = vsel %vm265, %v252, 0
      %v333 = vsel %vm265, %v253, 0
      %v336 = vsel %vm265, %v254, 0
      %v339 = vsel %vm265, %v255, 0
      %v342 = vsel %vm265, %v256, 0
      %v345 = vsel %vm265, %v257, 0
      %v348 = vsel %vm265, %v258, 0
      %v351 = vsel %vm265, %v259, 0
      %v354 = vsel %vm265, %v260, 0
      %v357 = vsel %vm265, %v261, 0
      %v360 = vsel %vm265, %v262, 0
      %362 = vmatpush.msra.mxu0 0.0
      %363 = vmatpush.msra.mxu0 0.0
      %364 = vmatpush.msra.mxu0 0.0
      %365 = vmatpush.msra.mxu0 0.0
      %366 = vmatpush.msra.mxu0 0.0
      %367 = vmatpush.msra.mxu0 0.0
      %368 = vmatpush.msra.mxu0 0.0
      %369 = vmatpush.msra.mxu0 0.0
      %370 = vmatpush.msra.mxu0 0.0
      %371 = vmatpush.msra.mxu0 0.0
      %372 = vmatpush.msra.mxu0 0.0
      %373 = vmatpush.msra.mxu0 0.0
      %374 = vmatpush.msra.mxu0 0.0
      %375 = vmatpush.msra.mxu0 0.0
      %376 = vmatpush.msra.mxu0 0.0
      %377 = vmatpush.msra.mxu0 %v264
      %378 = vmatmul.f32.gmra.mxu0 %v267
      %v379 = vpop.f32.mrf.mxu0
      %v380 = vadd.f32 0.0, %v379
      %381 = vmatmul.f32.gmra.mxu0 %v270
      %v382 = vpop.f32.mrf.mxu0
      %v383 = vadd.f32 0.0, %v382
      %384 = vmatmul.f32.gmra.mxu0 %v273
      %v385 = vpop.f32.mrf.mxu0
      %v386 = vadd.f32 0.0, %v385
      %387 = vmatmul.f32.gmra.mxu0 %v276
      %v388 = vpop.f32.mrf.mxu0
      %v389 = vadd.f32 0.0, %v388
      %390 = vmatmul.f32.gmra.mxu0 %v279
      %v391 = vpop.f32.mrf.mxu0
      %v392 = vadd.f32 0.0, %v391
      %393 = vmatmul.f32.gmra.mxu0 %v282
      %v394 = vpop.f32.mrf.mxu0
      %v395 = vadd.f32 0.0, %v394
      %396 = vmatmul.f32.gmra.mxu0 %v285
      %v397 = vpop.f32.mrf.mxu0
      %v398 = vadd.f32 0.0, %v397
      %399 = vmatmul.f32.gmra.mxu0 %v288
      %v400 = vpop.f32.mrf.mxu0
      %v401 = vadd.f32 0.0, %v400
      %402 = vmatmul.f32.gmra.mxu0 %v291
      %v403 = vpop.f32.mrf.mxu0
      %v404 = vadd.f32 0.0, %v403
      %405 = vmatmul.f32.gmra.mxu0 %v294
      %v406 = vpop.f32.mrf.mxu0
      %v407 = vadd.f32 0.0, %v406
      %408 = vmatmul.f32.gmra.mxu0 %v297
      %v409 = vpop.f32.mrf.mxu0
      %v410 = vadd.f32 0.0, %v409
      %411 = vmatmul.f32.gmra.mxu0 %v300
      %v412 = vpop.f32.mrf.mxu0
      %v413 = vadd.f32 0.0, %v412
      %414 = vmatmul.f32.gmra.mxu0 %v303
      %v415 = vpop.f32.mrf.mxu0
      %v416 = vadd.f32 0.0, %v415
      %417 = vmatmul.f32.gmra.mxu0 %v306
      %v418 = vpop.f32.mrf.mxu0
      %v419 = vadd.f32 0.0, %v418
      %420 = vmatmul.f32.gmra.mxu0 %v309
      %v421 = vpop.f32.mrf.mxu0
      %v422 = vadd.f32 0.0, %v421
      %423 = vmatmul.f32.gmra.mxu0 %v312
      %v424 = vpop.f32.mrf.mxu0
      %v425 = vadd.f32 0.0, %v424
      %426 = vmatmul.f32.gmra.mxu0 %v315
      %v427 = vpop.f32.mrf.mxu0
      %v428 = vadd.f32 0.0, %v427
      %429 = vmatmul.f32.gmra.mxu0 %v318
      %v430 = vpop.f32.mrf.mxu0
      %v431 = vadd.f32 0.0, %v430
      %432 = vmatmul.f32.gmra.mxu0 %v321
      %v433 = vpop.f32.mrf.mxu0
      %v434 = vadd.f32 0.0, %v433
      %435 = vmatmul.f32.gmra.mxu0 %v324
      %v436 = vpop.f32.mrf.mxu0
      %v437 = vadd.f32 0.0, %v436
      %438 = vmatmul.f32.gmra.mxu0 %v327
      %v439 = vpop.f32.mrf.mxu0
      %v440 = vadd.f32 0.0, %v439
      %441 = vmatmul.f32.gmra.mxu0 %v330
      %v442 = vpop.f32.mrf.mxu0
      %v443 = vadd.f32 0.0, %v442
      %444 = vmatmul.f32.gmra.mxu0 %v333
      %v445 = vpop.f32.mrf.mxu0
      %v446 = vadd.f32 0.0, %v445
      %447 = vmatmul.f32.gmra.mxu0 %v336
      %v448 = vpop.f32.mrf.mxu0
      %v449 = vadd.f32 0.0, %v448
      %450 = vmatmul.f32.gmra.mxu0 %v339
      %v451 = vpop.f32.mrf.mxu0
      %v452 = vadd.f32 0.0, %v451
      %453 = vmatmul.f32.gmra.mxu0 %v342
      %v454 = vpop.f32.mrf.mxu0
      %v455 = vadd.f32 0.0, %v454
      %456 = vmatmul.f32.gmra.mxu0 %v345
      %v457 = vpop.f32.mrf.mxu0
      %v458 = vadd.f32 0.0, %v457
      %459 = vmatmul.f32.gmra.mxu0 %v348
      %v460 = vpop.f32.mrf.mxu0
      %v461 = vadd.f32 0.0, %v460
      %462 = vmatmul.f32.gmra.mxu0 %v351
      %v463 = vpop.f32.mrf.mxu0
      %v464 = vadd.f32 0.0, %v463
      %465 = vmatmul.f32.gmra.mxu0 %v354
      %v466 = vpop.f32.mrf.mxu0
      %v467 = vadd.f32 0.0, %v466
      %468 = vmatmul.f32.gmra.mxu0 %v357
      %v469 = vpop.f32.mrf.mxu0
      %v470 = vadd.f32 0.0, %v469
      %471 = vmatmul.f32.gmra.mxu0 %v360
      %v472 = vpop.f32.mrf.mxu0
      %v473 = vadd.f32 0.0, %v472
      %474 = vdwg.mxu0
      %v476 = vsel %vm265, %v198, 0
      %v479 = vsel %vm265, %v199, 0
      %v482 = vsel %vm265, %v200, 0
      %v485 = vsel %vm265, %v201, 0
      %v488 = vsel %vm265, %v202, 0
      %v491 = vsel %vm265, %v203, 0
      %v494 = vsel %vm265, %v204, 0
      %v497 = vsel %vm265, %v205, 0
      %v500 = vsel %vm265, %v206, 0
      %v503 = vsel %vm265, %v207, 0
      %v506 = vsel %vm265, %v208, 0
      %v509 = vsel %vm265, %v209, 0
      %v512 = vsel %vm265, %v210, 0
      %v515 = vsel %vm265, %v211, 0
      %v518 = vsel %vm265, %v212, 0
      %v521 = vsel %vm265, %v213, 0
      %v524 = vsel %vm265, %v214, 0
      %v527 = vsel %vm265, %v215, 0
      %v530 = vsel %vm265, %v216, 0
      %v533 = vsel %vm265, %v217, 0
      %v536 = vsel %vm265, %v218, 0
      %v539 = vsel %vm265, %v219, 0
      %v542 = vsel %vm265, %v220, 0
      %v545 = vsel %vm265, %v221, 0
      %v548 = vsel %vm265, %v222, 0
      %v551 = vsel %vm265, %v223, 0
      %v554 = vsel %vm265, %v224, 0
      %v557 = vsel %vm265, %v225, 0
      %v560 = vsel %vm265, %v226, 0
      %v563 = vsel %vm265, %v227, 0
      %v566 = vsel %vm265, %v228, 0
      %v569 = vsel %vm265, %v229, 0
      %571 = vmatpush.msra.mxu0 0.0
      %572 = vmatpush.msra.mxu0 0.0
      %573 = vmatpush.msra.mxu0 0.0
      %574 = vmatpush.msra.mxu0 0.0
      %575 = vmatpush.msra.mxu0 0.0
      %576 = vmatpush.msra.mxu0 0.0
      %577 = vmatpush.msra.mxu0 0.0
      %578 = vmatpush.msra.mxu0 0.0
      %579 = vmatpush.msra.mxu0 0.0
      %580 = vmatpush.msra.mxu0 0.0
      %581 = vmatpush.msra.mxu0 0.0
      %582 = vmatpush.msra.mxu0 0.0
      %583 = vmatpush.msra.mxu0 0.0
      %584 = vmatpush.msra.mxu0 0.0
      %585 = vmatpush.msra.mxu0 0.0
      %586 = vmatpush.msra.mxu0 %v230
      %587 = vmatmul.f32.gmra.mxu0 %v476
      %v588 = vpop.f32.mrf.mxu0
      %v589 = vadd.f32 %v380, %v588
      %590 = vmatmul.f32.gmra.mxu0 %v479
      %v591 = vpop.f32.mrf.mxu0
      %v592 = vadd.f32 %v383, %v591
      %593 = vmatmul.f32.gmra.mxu0 %v482
      %v594 = vpop.f32.mrf.mxu0
      %v595 = vadd.f32 %v386, %v594
      %596 = vmatmul.f32.gmra.mxu0 %v485
      %v597 = vpop.f32.mrf.mxu0
      %v598 = vadd.f32 %v389, %v597
      %599 = vmatmul.f32.gmra.mxu0 %v488
      %v600 = vpop.f32.mrf.mxu0
      %v601 = vadd.f32 %v392, %v600
      %602 = vmatmul.f32.gmra.mxu0 %v491
      %v603 = vpop.f32.mrf.mxu0
      %v604 = vadd.f32 %v395, %v603
      %605 = vmatmul.f32.gmra.mxu0 %v494
      %v606 = vpop.f32.mrf.mxu0
      %v607 = vadd.f32 %v398, %v606
      %608 = vmatmul.f32.gmra.mxu0 %v497
      %v609 = vpop.f32.mrf.mxu0
      %v610 = vadd.f32 %v401, %v609
      %611 = vmatmul.f32.gmra.mxu0 %v500
      %v612 = vpop.f32.mrf.mxu0
      %v613 = vadd.f32 %v404, %v612
      %614 = vmatmul.f32.gmra.mxu0 %v503
      %v615 = vpop.f32.mrf.mxu0
      %v616 = vadd.f32 %v407, %v615
      %617 = vmatmul.f32.gmra.mxu0 %v506
      %v618 = vpop.f32.mrf.mxu0
      %v619 = vadd.f32 %v410, %v618
      %620 = vmatmul.f32.gmra.mxu0 %v509
      %v621 = vpop.f32.mrf.mxu0
      %v622 = vadd.f32 %v413, %v621
      %623 = vmatmul.f32.gmra.mxu0 %v512
      %v624 = vpop.f32.mrf.mxu0
      %v625 = vadd.f32 %v416, %v624
      %626 = vmatmul.f32.gmra.mxu0 %v515
      %v627 = vpop.f32.mrf.mxu0
      %v628 = vadd.f32 %v419, %v627
      %629 = vmatmul.f32.gmra.mxu0 %v518
      %v630 = vpop.f32.mrf.mxu0
      %v631 = vadd.f32 %v422, %v630
      %632 = vmatmul.f32.gmra.mxu0 %v521
      %v633 = vpop.f32.mrf.mxu0
      %v634 = vadd.f32 %v425, %v633
      %635 = vmatmul.f32.gmra.mxu0 %v524
      %v636 = vpop.f32.mrf.mxu0
      %v637 = vadd.f32 %v428, %v636
      %638 = vmatmul.f32.gmra.mxu0 %v527
      %v639 = vpop.f32.mrf.mxu0
      %v640 = vadd.f32 %v431, %v639
      %641 = vmatmul.f32.gmra.mxu0 %v530
      %v642 = vpop.f32.mrf.mxu0
      %v643 = vadd.f32 %v434, %v642
      %644 = vmatmul.f32.gmra.mxu0 %v533
      %v645 = vpop.f32.mrf.mxu0
      %v646 = vadd.f32 %v437, %v645
      %647 = vmatmul.f32.gmra.mxu0 %v536
      %v648 = vpop.f32.mrf.mxu0
      %v649 = vadd.f32 %v440, %v648
      %650 = vmatmul.f32.gmra.mxu0 %v539
      %v651 = vpop.f32.mrf.mxu0
      %v652 = vadd.f32 %v443, %v651
      %653 = vmatmul.f32.gmra.mxu0 %v542
      %v654 = vpop.f32.mrf.mxu0
      %v655 = vadd.f32 %v446, %v654
      %656 = vmatmul.f32.gmra.mxu0 %v545
      %v657 = vpop.f32.mrf.mxu0
      %v658 = vadd.f32 %v449, %v657
      %659 = vmatmul.f32.gmra.mxu0 %v548
      %v660 = vpop.f32.mrf.mxu0
      %v661 = vadd.f32 %v452, %v660
      %662 = vmatmul.f32.gmra.mxu0 %v551
      %v663 = vpop.f32.mrf.mxu0
      %v664 = vadd.f32 %v455, %v663
      %665 = vmatmul.f32.gmra.mxu0 %v554
      %v666 = vpop.f32.mrf.mxu0
      %v667 = vadd.f32 %v458, %v666
      %668 = vmatmul.f32.gmra.mxu0 %v557
      %v669 = vpop.f32.mrf.mxu0
      %v670 = vadd.f32 %v461, %v669
      %671 = vmatmul.f32.gmra.mxu0 %v560
      %v672 = vpop.f32.mrf.mxu0
      %v673 = vadd.f32 %v464, %v672
      %674 = vmatmul.f32.gmra.mxu0 %v563
      %v675 = vpop.f32.mrf.mxu0
      %v676 = vadd.f32 %v467, %v675
      %677 = vmatmul.f32.gmra.mxu0 %v566
      %v678 = vpop.f32.mrf.mxu0
      %v679 = vadd.f32 %v470, %v678
      %680 = vmatmul.f32.gmra.mxu0 %v569
      %v681 = vpop.f32.mrf.mxu0
      %v682 = vadd.f32 %v473, %v681
      %683 = vdwg.mxu0
      %v684 = vld [vmem:[%s192 + $0x2] sm:$0xff]
      %v685 = vld [vmem:[%s192 + $0xa] sm:$0xff]
      %v686 = vld [vmem:[%s192 + $0x1a] sm:$0xff]
      %v687 = vld [vmem:[%s192 + $0x22] sm:$0xff]
      %v688 = vld [vmem:[%s192 + $0x32] sm:$0xff]
      %v689 = vld [vmem:[%s192 + $0x3a] sm:$0xff]
      %v690 = vld [vmem:[%s192 + $0x4a] sm:$0xff]
      %v691 = vld [vmem:[%s192 + $0x52] sm:$0xff]
      %v692 = vld [vmem:[%s192 + $0x62] sm:$0xff]
      %v693 = vld [vmem:[%s192 + $0x6a] sm:$0xff]
      %v694 = vld [vmem:[%s192 + $0x7a] sm:$0xff]
      %v695 = vld [vmem:[%s192 + $0x82] sm:$0xff]
      %v696 = vld [vmem:[%s192 + $0x92] sm:$0xff]
      %v697 = vld [vmem:[%s192 + $0x9a] sm:$0xff]
      %v698 = vld [vmem:[%s192 + $0xaa] sm:$0xff]
      %v699 = vld [vmem:[%s192 + $0xb2] sm:$0xff]
      %v700 = vld [vmem:[%s192 + $0xc2] sm:$0xff]
      %v701 = vld [vmem:[%s192 + $0xca] sm:$0xff]
      %v702 = vld [vmem:[%s192 + $0xda] sm:$0xff]
      %v703 = vld [vmem:[%s192 + $0xe2] sm:$0xff]
      %v704 = vld [vmem:[%s192 + $0xf2] sm:$0xff]
      %v705 = vld [vmem:[%s192 + $0xfa] sm:$0xff]
      %v706 = vld [vmem:[%s192 + $0x10a] sm:$0xff]
      %v707 = vld [vmem:[%s192 + $0x112] sm:$0xff]
      %v708 = vld [vmem:[%s192 + $0x122] sm:$0xff]
      %v709 = vld [vmem:[%s192 + $0x12a] sm:$0xff]
      %v710 = vld [vmem:[%s192 + $0x13a] sm:$0xff]
      %v711 = vld [vmem:[%s192 + $0x142] sm:$0xff]
      %v712 = vld [vmem:[%s192 + $0x152] sm:$0xff]
      %v713 = vld [vmem:[%s192 + $0x15a] sm:$0xff]
      %v714 = vld [vmem:[%s192 + $0x16a] sm:$0xff]
      %v715 = vld [vmem:[%s192 + $0x172] sm:$0xff]
      %s716 = scalar_lea.vmem %s1, 16
      %v717 = vld [vmem:[%s716] sm:$0xff]
      %v719 = vsel %vm265, %v684, 0
      %v722 = vsel %vm265, %v685, 0
      %v725 = vsel %vm265, %v686, 0
      %v728 = vsel %vm265, %v687, 0
      %v731 = vsel %vm265, %v688, 0
      %v734 = vsel %vm265, %v689, 0
      %v737 = vsel %vm265, %v690, 0
      %v740 = vsel %vm265, %v691, 0
      %v743 = vsel %vm265, %v692, 0
      %v746 = vsel %vm265, %v693, 0
      %v749 = vsel %vm265, %v694, 0
      %v752 = vsel %vm265, %v695, 0
      %v755 = vsel %vm265, %v696, 0
      %v758 = vsel %vm265, %v697, 0
      %v761 = vsel %vm265, %v698, 0
      %v764 = vsel %vm265, %v699, 0
      %v767 = vsel %vm265, %v700, 0
      %v770 = vsel %vm265, %v701, 0
      %v773 = vsel %vm265, %v702, 0
      %v776 = vsel %vm265, %v703, 0
      %v779 = vsel %vm265, %v704, 0
      %v782 = vsel %vm265, %v705, 0
      %v785 = vsel %vm265, %v706, 0
      %v788 = vsel %vm265, %v707, 0
      %v791 = vsel %vm265, %v708, 0
      %v794 = vsel %vm265, %v709, 0
      %v797 = vsel %vm265, %v710, 0
      %v800 = vsel %vm265, %v711, 0
      %v803 = vsel %vm265, %v712, 0
      %v806 = vsel %vm265, %v713, 0
      %v809 = vsel %vm265, %v714, 0
      %v812 = vsel %vm265, %v715, 0
      %814 = vmatpush.msra.mxu0 0.0
      %815 = vmatpush.msra.mxu0 0.0
      %816 = vmatpush.msra.mxu0 0.0
      %817 = vmatpush.msra.mxu0 0.0
      %818 = vmatpush.msra.mxu0 0.0
      %819 = vmatpush.msra.mxu0 0.0
      %820 = vmatpush.msra.mxu0 0.0
      %821 = vmatpush.msra.mxu0 0.0
      %822 = vmatpush.msra.mxu0 0.0
      %823 = vmatpush.msra.mxu0 0.0
      %824 = vmatpush.msra.mxu0 0.0
      %825 = vmatpush.msra.mxu0 0.0
      %826 = vmatpush.msra.mxu0 0.0
      %827 = vmatpush.msra.mxu0 0.0
      %828 = vmatpush.msra.mxu0 0.0
      %829 = vmatpush.msra.mxu0 %v717
      %830 = vmatmul.f32.gmra.mxu0 %v719
      %v831 = vpop.f32.mrf.mxu0
      %v832 = vadd.f32 0.0, %v831
      %833 = vmatmul.f32.gmra.mxu0 %v722
      %v834 = vpop.f32.mrf.mxu0
      %v835 = vadd.f32 0.0, %v834
      %836 = vmatmul.f32.gmra.mxu0 %v725
      %v837 = vpop.f32.mrf.mxu0
      %v838 = vadd.f32 0.0, %v837
      %839 = vmatmul.f32.gmra.mxu0 %v728
      %v840 = vpop.f32.mrf.mxu0
      %v841 = vadd.f32 0.0, %v840
      %842 = vmatmul.f32.gmra.mxu0 %v731
      %v843 = vpop.f32.mrf.mxu0
      %v844 = vadd.f32 0.0, %v843
      %845 = vmatmul.f32.gmra.mxu0 %v734
      %v846 = vpop.f32.mrf.mxu0
      %v847 = vadd.f32 0.0, %v846
      %848 = vmatmul.f32.gmra.mxu0 %v737
      %v849 = vpop.f32.mrf.mxu0
      %v850 = vadd.f32 0.0, %v849
      %851 = vmatmul.f32.gmra.mxu0 %v740
      %v852 = vpop.f32.mrf.mxu0
      %v853 = vadd.f32 0.0, %v852
      %854 = vmatmul.f32.gmra.mxu0 %v743
      %v855 = vpop.f32.mrf.mxu0
      %v856 = vadd.f32 0.0, %v855
      %857 = vmatmul.f32.gmra.mxu0 %v746
      %v858 = vpop.f32.mrf.mxu0
      %v859 = vadd.f32 0.0, %v858
      %860 = vmatmul.f32.gmra.mxu0 %v749
      %v861 = vpop.f32.mrf.mxu0
      %v862 = vadd.f32 0.0, %v861
      %863 = vmatmul.f32.gmra.mxu0 %v752
      %v864 = vpop.f32.mrf.mxu0
      %v865 = vadd.f32 0.0, %v864
      %866 = vmatmul.f32.gmra.mxu0 %v755
      %v867 = vpop.f32.mrf.mxu0
      %v868 = vadd.f32 0.0, %v867
      %869 = vmatmul.f32.gmra.mxu0 %v758
      %v870 = vpop.f32.mrf.mxu0
      %v871 = vadd.f32 0.0, %v870
      %872 = vmatmul.f32.gmra.mxu0 %v761
      %v873 = vpop.f32.mrf.mxu0
      %v874 = vadd.f32 0.0, %v873
      %875 = vmatmul.f32.gmra.mxu0 %v764
      %v876 = vpop.f32.mrf.mxu0
      %v877 = vadd.f32 0.0, %v876
      %878 = vmatmul.f32.gmra.mxu0 %v767
      %v879 = vpop.f32.mrf.mxu0
      %v880 = vadd.f32 0.0, %v879
      %881 = vmatmul.f32.gmra.mxu0 %v770
      %v882 = vpop.f32.mrf.mxu0
      %v883 = vadd.f32 0.0, %v882
      %884 = vmatmul.f32.gmra.mxu0 %v773
      %v885 = vpop.f32.mrf.mxu0
      %v886 = vadd.f32 0.0, %v885
      %887 = vmatmul.f32.gmra.mxu0 %v776
      %v888 = vpop.f32.mrf.mxu0
      %v889 = vadd.f32 0.0, %v888
      %890 = vmatmul.f32.gmra.mxu0 %v779
      %v891 = vpop.f32.mrf.mxu0
      %v892 = vadd.f32 0.0, %v891
      %893 = vmatmul.f32.gmra.mxu0 %v782
      %v894 = vpop.f32.mrf.mxu0
      %v895 = vadd.f32 0.0, %v894
      %896 = vmatmul.f32.gmra.mxu0 %v785
      %v897 = vpop.f32.mrf.mxu0
      %v898 = vadd.f32 0.0, %v897
      %899 = vmatmul.f32.gmra.mxu0 %v788
      %v900 = vpop.f32.mrf.mxu0
      %v901 = vadd.f32 0.0, %v900
      %902 = vmatmul.f32.gmra.mxu0 %v791
      %v903 = vpop.f32.mrf.mxu0
      %v904 = vadd.f32 0.0, %v903
      %905 = vmatmul.f32.gmra.mxu0 %v794
      %v906 = vpop.f32.mrf.mxu0
      %v907 = vadd.f32 0.0, %v906
      %908 = vmatmul.f32.gmra.mxu0 %v797
      %v909 = vpop.f32.mrf.mxu0
      %v910 = vadd.f32 0.0, %v909
      %911 = vmatmul.f32.gmra.mxu0 %v800
      %v912 = vpop.f32.mrf.mxu0
      %v913 = vadd.f32 0.0, %v912
      %914 = vmatmul.f32.gmra.mxu0 %v803
      %v915 = vpop.f32.mrf.mxu0
      %v916 = vadd.f32 0.0, %v915
      %917 = vmatmul.f32.gmra.mxu0 %v806
      %v918 = vpop.f32.mrf.mxu0
      %v919 = vadd.f32 0.0, %v918
      %920 = vmatmul.f32.gmra.mxu0 %v809
      %v921 = vpop.f32.mrf.mxu0
      %v922 = vadd.f32 0.0, %v921
      %923 = vmatmul.f32.gmra.mxu0 %v812
      %v924 = vpop.f32.mrf.mxu0
      %v925 = vadd.f32 0.0, %v924
      %926 = vdwg.mxu0
      %v927 = vadd.f32 %v589, %v832
      %v928 = vadd.f32 %v592, %v835
      %v929 = vadd.f32 %v595, %v838
      %v930 = vadd.f32 %v598, %v841
      %v931 = vadd.f32 %v601, %v844
      %v932 = vadd.f32 %v604, %v847
      %v933 = vadd.f32 %v607, %v850
      %v934 = vadd.f32 %v610, %v853
      %v935 = vadd.f32 %v613, %v856
      %v936 = vadd.f32 %v616, %v859
      %v937 = vadd.f32 %v619, %v862
      %v938 = vadd.f32 %v622, %v865
      %v939 = vadd.f32 %v625, %v868
      %v940 = vadd.f32 %v628, %v871
      %v941 = vadd.f32 %v631, %v874
      %v942 = vadd.f32 %v634, %v877
      %v943 = vadd.f32 %v637, %v880
      %v944 = vadd.f32 %v640, %v883
      %v945 = vadd.f32 %v643, %v886
      %v946 = vadd.f32 %v646, %v889
      %v947 = vadd.f32 %v649, %v892
      %v948 = vadd.f32 %v652, %v895
      %v949 = vadd.f32 %v655, %v898
      %v950 = vadd.f32 %v658, %v901
      %v951 = vadd.f32 %v661, %v904
      %v952 = vadd.f32 %v664, %v907
      %v953 = vadd.f32 %v667, %v910
      %v954 = vadd.f32 %v670, %v913
      %v955 = vadd.f32 %v673, %v916
      %v956 = vadd.f32 %v676, %v919
      %v957 = vadd.f32 %v679, %v922
      %v958 = vadd.f32 %v682, %v925
      %s959 = scalar_lea.vmem %s192, 24
      %v960 = vld [vmem:[%s959] sm:$0xff]
      %v961 = vld [vmem:[%s959 + $0x8] sm:$0xff]
      %v962 = vld [vmem:[%s959 + $0x18] sm:$0xff]
      %v963 = vld [vmem:[%s959 + $0x20] sm:$0xff]
      %v964 = vld [vmem:[%s959 + $0x30] sm:$0xff]
      %v965 = vld [vmem:[%s959 + $0x38] sm:$0xff]
      %v966 = vld [vmem:[%s959 + $0x48] sm:$0xff]
      %v967 = vld [vmem:[%s959 + $0x50] sm:$0xff]
      %v968 = vld [vmem:[%s959 + $0x60] sm:$0xff]
      %v969 = vld [vmem:[%s959 + $0x68] sm:$0xff]
      %v970 = vld [vmem:[%s959 + $0x78] sm:$0xff]
      %v971 = vld [vmem:[%s959 + $0x80] sm:$0xff]
      %v972 = vld [vmem:[%s959 + $0x90] sm:$0xff]
      %v973 = vld [vmem:[%s959 + $0x98] sm:$0xff]
      %v974 = vld [vmem:[%s959 + $0xa8] sm:$0xff]
      %v975 = vld [vmem:[%s959 + $0xb0] sm:$0xff]
      %v976 = vld [vmem:[%s959 + $0xc0] sm:$0xff]
      %v977 = vld [vmem:[%s959 + $0xc8] sm:$0xff]
      %v978 = vld [vmem:[%s959 + $0xd8] sm:$0xff]
      %v979 = vld [vmem:[%s959 + $0xe0] sm:$0xff]
      %v980 = vld [vmem:[%s959 + $0xf0] sm:$0xff]
      %v981 = vld [vmem:[%s959 + $0xf8] sm:$0xff]
      %v982 = vld [vmem:[%s959 + $0x108] sm:$0xff]
      %v983 = vld [vmem:[%s959 + $0x110] sm:$0xff]
      %v984 = vld [vmem:[%s959 + $0x120] sm:$0xff]
      %v985 = vld [vmem:[%s959 + $0x128] sm:$0xff]
      %v986 = vld [vmem:[%s959 + $0x138] sm:$0xff]
      %v987 = vld [vmem:[%s959 + $0x140] sm:$0xff]
      %v988 = vld [vmem:[%s959 + $0x150] sm:$0xff]
      %v989 = vld [vmem:[%s959 + $0x158] sm:$0xff]
      %v990 = vld [vmem:[%s959 + $0x168] sm:$0xff]
      %v991 = vld [vmem:[%s959 + $0x170] sm:$0xff]
      %s992 = scalar_lea.vmem %s1, 24
      %v993 = vld [vmem:[%s992] sm:$0xff]
      %v995 = vsel %vm265, %v960, 0
      %v998 = vsel %vm265, %v961, 0
      %v1001 = vsel %vm265, %v962, 0
      %v1004 = vsel %vm265, %v963, 0
      %v1007 = vsel %vm265, %v964, 0
      %v1010 = vsel %vm265, %v965, 0
      %v1013 = vsel %vm265, %v966, 0
      %v1016 = vsel %vm265, %v967, 0
      %v1019 = vsel %vm265, %v968, 0
      %v1022 = vsel %vm265, %v969, 0
      %v1025 = vsel %vm265, %v970, 0
      %v1028 = vsel %vm265, %v971, 0
      %v1031 = vsel %vm265, %v972, 0
      %v1034 = vsel %vm265, %v973, 0
      %v1037 = vsel %vm265, %v974, 0
      %v1040 = vsel %vm265, %v975, 0
      %v1043 = vsel %vm265, %v976, 0
      %v1046 = vsel %vm265, %v977, 0
      %v1049 = vsel %vm265, %v978, 0
      %v1052 = vsel %vm265, %v979, 0
      %v1055 = vsel %vm265, %v980, 0
      %v1058 = vsel %vm265, %v981, 0
      %v1061 = vsel %vm265, %v982, 0
      %v1064 = vsel %vm265, %v983, 0
      %v1067 = vsel %vm265, %v984, 0
      %v1070 = vsel %vm265, %v985, 0
      %v1073 = vsel %vm265, %v986, 0
      %v1076 = vsel %vm265, %v987, 0
      %v1079 = vsel %vm265, %v988, 0
      %v1082 = vsel %vm265, %v989, 0
      %v1085 = vsel %vm265, %v990, 0
      %v1088 = vsel %vm265, %v991, 0
      %1090 = vmatpush.msra.mxu0 0.0
      %1091 = vmatpush.msra.mxu0 0.0
      %1092 = vmatpush.msra.mxu0 0.0
      %1093 = vmatpush.msra.mxu0 0.0
      %1094 = vmatpush.msra.mxu0 0.0
      %1095 = vmatpush.msra.mxu0 0.0
      %1096 = vmatpush.msra.mxu0 0.0
      %1097 = vmatpush.msra.mxu0 0.0
      %1098 = vmatpush.msra.mxu0 0.0
      %1099 = vmatpush.msra.mxu0 0.0
      %1100 = vmatpush.msra.mxu0 0.0
      %1101 = vmatpush.msra.mxu0 0.0
      %1102 = vmatpush.msra.mxu0 0.0
      %1103 = vmatpush.msra.mxu0 0.0
      %1104 = vmatpush.msra.mxu0 0.0
      %1105 = vmatpush.msra.mxu0 %v993
      %1106 = vmatmul.f32.gmra.mxu0 %v995
      %v1107 = vpop.f32.mrf.mxu0
      %v1108 = vadd.f32 0.0, %v1107
      %1109 = vmatmul.f32.gmra.mxu0 %v998
      %v1110 = vpop.f32.mrf.mxu0
      %v1111 = vadd.f32 0.0, %v1110
      %1112 = vmatmul.f32.gmra.mxu0 %v1001
      %v1113 = vpop.f32.mrf.mxu0
      %v1114 = vadd.f32 0.0, %v1113
      %1115 = vmatmul.f32.gmra.mxu0 %v1004
      %v1116 = vpop.f32.mrf.mxu0
      %v1117 = vadd.f32 0.0, %v1116
      %1118 = vmatmul.f32.gmra.mxu0 %v1007
      %v1119 = vpop.f32.mrf.mxu0
      %v1120 = vadd.f32 0.0, %v1119
      %1121 = vmatmul.f32.gmra.mxu0 %v1010
      %v1122 = vpop.f32.mrf.mxu0
      %v1123 = vadd.f32 0.0, %v1122
      %1124 = vmatmul.f32.gmra.mxu0 %v1013
      %v1125 = vpop.f32.mrf.mxu0
      %v1126 = vadd.f32 0.0, %v1125
      %1127 = vmatmul.f32.gmra.mxu0 %v1016
      %v1128 = vpop.f32.mrf.mxu0
      %v1129 = vadd.f32 0.0, %v1128
      %1130 = vmatmul.f32.gmra.mxu0 %v1019
      %v1131 = vpop.f32.mrf.mxu0
      %v1132 = vadd.f32 0.0, %v1131
      %1133 = vmatmul.f32.gmra.mxu0 %v1022
      %v1134 = vpop.f32.mrf.mxu0
      %v1135 = vadd.f32 0.0, %v1134
      %1136 = vmatmul.f32.gmra.mxu0 %v1025
      %v1137 = vpop.f32.mrf.mxu0
      %v1138 = vadd.f32 0.0, %v1137
      %1139 = vmatmul.f32.gmra.mxu0 %v1028
      %v1140 = vpop.f32.mrf.mxu0
      %v1141 = vadd.f32 0.0, %v1140
      %1142 = vmatmul.f32.gmra.mxu0 %v1031
      %v1143 = vpop.f32.mrf.mxu0
      %v1144 = vadd.f32 0.0, %v1143
      %1145 = vmatmul.f32.gmra.mxu0 %v1034
      %v1146 = vpop.f32.mrf.mxu0
      %v1147 = vadd.f32 0.0, %v1146
      %1148 = vmatmul.f32.gmra.mxu0 %v1037
      %v1149 = vpop.f32.mrf.mxu0
      %v1150 = vadd.f32 0.0, %v1149
      %1151 = vmatmul.f32.gmra.mxu0 %v1040
      %v1152 = vpop.f32.mrf.mxu0
      %v1153 = vadd.f32 0.0, %v1152
      %1154 = vmatmul.f32.gmra.mxu0 %v1043
      %v1155 = vpop.f32.mrf.mxu0
      %v1156 = vadd.f32 0.0, %v1155
      %1157 = vmatmul.f32.gmra.mxu0 %v1046
      %v1158 = vpop.f32.mrf.mxu0
      %v1159 = vadd.f32 0.0, %v1158
      %1160 = vmatmul.f32.gmra.mxu0 %v1049
      %v1161 = vpop.f32.mrf.mxu0
      %v1162 = vadd.f32 0.0, %v1161
      %1163 = vmatmul.f32.gmra.mxu0 %v1052
      %v1164 = vpop.f32.mrf.mxu0
      %v1165 = vadd.f32 0.0, %v1164
      %1166 = vmatmul.f32.gmra.mxu0 %v1055
      %v1167 = vpop.f32.mrf.mxu0
      %v1168 = vadd.f32 0.0, %v1167
      %1169 = vmatmul.f32.gmra.mxu0 %v1058
      %v1170 = vpop.f32.mrf.mxu0
      %v1171 = vadd.f32 0.0, %v1170
      %1172 = vmatmul.f32.gmra.mxu0 %v1061
      %v1173 = vpop.f32.mrf.mxu0
      %v1174 = vadd.f32 0.0, %v1173
      %1175 = vmatmul.f32.gmra.mxu0 %v1064
      %v1176 = vpop.f32.mrf.mxu0
      %v1177 = vadd.f32 0.0, %v1176
      %1178 = vmatmul.f32.gmra.mxu0 %v1067
      %v1179 = vpop.f32.mrf.mxu0
      %v1180 = vadd.f32 0.0, %v1179
      %1181 = vmatmul.f32.gmra.mxu0 %v1070
      %v1182 = vpop.f32.mrf.mxu0
      %v1183 = vadd.f32 0.0, %v1182
      %1184 = vmatmul.f32.gmra.mxu0 %v1073
      %v1185 = vpop.f32.mrf.mxu0
      %v1186 = vadd.f32 0.0, %v1185
      %1187 = vmatmul.f32.gmra.mxu0 %v1076
      %v1188 = vpop.f32.mrf.mxu0
      %v1189 = vadd.f32 0.0, %v1188
      %1190 = vmatmul.f32.gmra.mxu0 %v1079
      %v1191 = vpop.f32.mrf.mxu0
      %v1192 = vadd.f32 0.0, %v1191
      %1193 = vmatmul.f32.gmra.mxu0 %v1082
      %v1194 = vpop.f32.mrf.mxu0
      %v1195 = vadd.f32 0.0, %v1194
      %1196 = vmatmul.f32.gmra.mxu0 %v1085
      %v1197 = vpop.f32.mrf.mxu0
      %v1198 = vadd.f32 0.0, %v1197
      %1199 = vmatmul.f32.gmra.mxu0 %v1088
      %v1200 = vpop.f32.mrf.mxu0
      %v1201 = vadd.f32 0.0, %v1200
      %1202 = vdwg.mxu0
      %v1203 = vadd.f32 %v927, %v1108
      %v1204 = vadd.f32 %v928, %v1111
      %v1205 = vadd.f32 %v929, %v1114
      %v1206 = vadd.f32 %v930, %v1117
      %v1207 = vadd.f32 %v931, %v1120
      %v1208 = vadd.f32 %v932, %v1123
      %v1209 = vadd.f32 %v933, %v1126
      %v1210 = vadd.f32 %v934, %v1129
      %v1211 = vadd.f32 %v935, %v1132
      %v1212 = vadd.f32 %v936, %v1135
      %v1213 = vadd.f32 %v937, %v1138
      %v1214 = vadd.f32 %v938, %v1141
      %v1215 = vadd.f32 %v939, %v1144
      %v1216 = vadd.f32 %v940, %v1147
      %v1217 = vadd.f32 %v941, %v1150
      %v1218 = vadd.f32 %v942, %v1153
      %v1219 = vadd.f32 %v943, %v1156
      %v1220 = vadd.f32 %v944, %v1159
      %v1221 = vadd.f32 %v945, %v1162
      %v1222 = vadd.f32 %v946, %v1165
      %v1223 = vadd.f32 %v947, %v1168
      %v1224 = vadd.f32 %v948, %v1171
      %v1225 = vadd.f32 %v949, %v1174
      %v1226 = vadd.f32 %v950, %v1177
      %v1227 = vadd.f32 %v951, %v1180
      %v1228 = vadd.f32 %v952, %v1183
      %v1229 = vadd.f32 %v953, %v1186
      %v1230 = vadd.f32 %v954, %v1189
      %v1231 = vadd.f32 %v955, %v1192
      %v1232 = vadd.f32 %v956, %v1195
      %v1233 = vadd.f32 %v957, %v1198
      %v1234 = vadd.f32 %v958, %v1201
      %v1235 = vld [vmem:[%s959 + $0x1] sm:$0xff]
      %v1236 = vld [vmem:[%s959 + $0x9] sm:$0xff]
      %v1237 = vld [vmem:[%s959 + $0x19] sm:$0xff]
      %v1238 = vld [vmem:[%s959 + $0x21] sm:$0xff]
      %v1239 = vld [vmem:[%s959 + $0x31] sm:$0xff]
      %v1240 = vld [vmem:[%s959 + $0x39] sm:$0xff]
      %v1241 = vld [vmem:[%s959 + $0x49] sm:$0xff]
      %v1242 = vld [vmem:[%s959 + $0x51] sm:$0xff]
      %v1243 = vld [vmem:[%s959 + $0x61] sm:$0xff]
      %v1244 = vld [vmem:[%s959 + $0x69] sm:$0xff]
      %v1245 = vld [vmem:[%s959 + $0x79] sm:$0xff]
      %v1246 = vld [vmem:[%s959 + $0x81] sm:$0xff]
      %v1247 = vld [vmem:[%s959 + $0x91] sm:$0xff]
      %v1248 = vld [vmem:[%s959 + $0x99] sm:$0xff]
      %v1249 = vld [vmem:[%s959 + $0xa9] sm:$0xff]
      %v1250 = vld [vmem:[%s959 + $0xb1] sm:$0xff]
      %v1251 = vld [vmem:[%s959 + $0xc1] sm:$0xff]
      %v1252 = vld [vmem:[%s959 + $0xc9] sm:$0xff]
      %v1253 = vld [vmem:[%s959 + $0xd9] sm:$0xff]
      %v1254 = vld [vmem:[%s959 + $0xe1] sm:$0xff]
      %v1255 = vld [vmem:[%s959 + $0xf1] sm:$0xff]
      %v1256 = vld [vmem:[%s959 + $0xf9] sm:$0xff]
      %v1257 = vld [vmem:[%s959 + $0x109] sm:$0xff]
      %v1258 = vld [vmem:[%s959 + $0x111] sm:$0xff]
      %v1259 = vld [vmem:[%s959 + $0x121] sm:$0xff]
      %v1260 = vld [vmem:[%s959 + $0x129] sm:$0xff]
      %v1261 = vld [vmem:[%s959 + $0x139] sm:$0xff]
      %v1262 = vld [vmem:[%s959 + $0x141] sm:$0xff]
      %v1263 = vld [vmem:[%s959 + $0x151] sm:$0xff]
      %v1264 = vld [vmem:[%s959 + $0x159] sm:$0xff]
      %v1265 = vld [vmem:[%s959 + $0x169] sm:$0xff]
      %v1266 = vld [vmem:[%s959 + $0x171] sm:$0xff]
      %s1267 = scalar_lea.vmem %s1, 32
      %v1268 = vld [vmem:[%s1267] sm:$0xff]
      %v1270 = vsel %vm265, %v1235, 0
      %v1273 = vsel %vm265, %v1236, 0
      %v1276 = vsel %vm265, %v1237, 0
      %v1279 = vsel %vm265, %v1238, 0
      %v1282 = vsel %vm265, %v1239, 0
      %v1285 = vsel %vm265, %v1240, 0
      %v1288 = vsel %vm265, %v1241, 0
      %v1291 = vsel %vm265, %v1242, 0
      %v1294 = vsel %vm265, %v1243, 0
      %v1297 = vsel %vm265, %v1244, 0
      %v1300 = vsel %vm265, %v1245, 0
      %v1303 = vsel %vm265, %v1246, 0
      %v1306 = vsel %vm265, %v1247, 0
      %v1309 = vsel %vm265, %v1248, 0
      %v1312 = vsel %vm265, %v1249, 0
      %v1315 = vsel %vm265, %v1250, 0
      %v1318 = vsel %vm265, %v1251, 0
      %v1321 = vsel %vm265, %v1252, 0
      %v1324 = vsel %vm265, %v1253, 0
      %v1327 = vsel %vm265, %v1254, 0
      %v1330 = vsel %vm265, %v1255, 0
      %v1333 = vsel %vm265, %v1256, 0
      %v1336 = vsel %vm265, %v1257, 0
      %v1339 = vsel %vm265, %v1258, 0
      %v1342 = vsel %vm265, %v1259, 0
      %v1345 = vsel %vm265, %v1260, 0
      %v1348 = vsel %vm265, %v1261, 0
      %v1351 = vsel %vm265, %v1262, 0
      %v1354 = vsel %vm265, %v1263, 0
      %v1357 = vsel %vm265, %v1264, 0
      %v1360 = vsel %vm265, %v1265, 0
      %v1363 = vsel %vm265, %v1266, 0
      %1365 = vmatpush.msra.mxu0 0.0
      %1366 = vmatpush.msra.mxu0 0.0
      %1367 = vmatpush.msra.mxu0 0.0
      %1368 = vmatpush.msra.mxu0 0.0
      %1369 = vmatpush.msra.mxu0 0.0
      %1370 = vmatpush.msra.mxu0 0.0
      %1371 = vmatpush.msra.mxu0 0.0
      %1372 = vmatpush.msra.mxu0 0.0
      %1373 = vmatpush.msra.mxu0 0.0
      %1374 = vmatpush.msra.mxu0 0.0
      %1375 = vmatpush.msra.mxu0 0.0
      %1376 = vmatpush.msra.mxu0 0.0
      %1377 = vmatpush.msra.mxu0 0.0
      %1378 = vmatpush.msra.mxu0 0.0
      %1379 = vmatpush.msra.mxu0 0.0
      %1380 = vmatpush.msra.mxu0 %v1268
      %1381 = vmatmul.f32.gmra.mxu0 %v1270
      %v1382 = vpop.f32.mrf.mxu0
      %v1383 = vadd.f32 0.0, %v1382
      %1384 = vmatmul.f32.gmra.mxu0 %v1273
      %v1385 = vpop.f32.mrf.mxu0
      %v1386 = vadd.f32 0.0, %v1385
      %1387 = vmatmul.f32.gmra.mxu0 %v1276
      %v1388 = vpop.f32.mrf.mxu0
      %v1389 = vadd.f32 0.0, %v1388
      %1390 = vmatmul.f32.gmra.mxu0 %v1279
      %v1391 = vpop.f32.mrf.mxu0
      %v1392 = vadd.f32 0.0, %v1391
      %1393 = vmatmul.f32.gmra.mxu0 %v1282
      %v1394 = vpop.f32.mrf.mxu0
      %v1395 = vadd.f32 0.0, %v1394
      %1396 = vmatmul.f32.gmra.mxu0 %v1285
      %v1397 = vpop.f32.mrf.mxu0
      %v1398 = vadd.f32 0.0, %v1397
      %1399 = vmatmul.f32.gmra.mxu0 %v1288
      %v1400 = vpop.f32.mrf.mxu0
      %v1401 = vadd.f32 0.0, %v1400
      %1402 = vmatmul.f32.gmra.mxu0 %v1291
      %v1403 = vpop.f32.mrf.mxu0
      %v1404 = vadd.f32 0.0, %v1403
      %1405 = vmatmul.f32.gmra.mxu0 %v1294
      %v1406 = vpop.f32.mrf.mxu0
      %v1407 = vadd.f32 0.0, %v1406
      %1408 = vmatmul.f32.gmra.mxu0 %v1297
      %v1409 = vpop.f32.mrf.mxu0
      %v1410 = vadd.f32 0.0, %v1409
      %1411 = vmatmul.f32.gmra.mxu0 %v1300
      %v1412 = vpop.f32.mrf.mxu0
      %v1413 = vadd.f32 0.0, %v1412
      %1414 = vmatmul.f32.gmra.mxu0 %v1303
      %v1415 = vpop.f32.mrf.mxu0
      %v1416 = vadd.f32 0.0, %v1415
      %1417 = vmatmul.f32.gmra.mxu0 %v1306
      %v1418 = vpop.f32.mrf.mxu0
      %v1419 = vadd.f32 0.0, %v1418
      %1420 = vmatmul.f32.gmra.mxu0 %v1309
      %v1421 = vpop.f32.mrf.mxu0
      %v1422 = vadd.f32 0.0, %v1421
      %1423 = vmatmul.f32.gmra.mxu0 %v1312
      %v1424 = vpop.f32.mrf.mxu0
      %v1425 = vadd.f32 0.0, %v1424
      %1426 = vmatmul.f32.gmra.mxu0 %v1315
      %v1427 = vpop.f32.mrf.mxu0
      %v1428 = vadd.f32 0.0, %v1427
      %1429 = vmatmul.f32.gmra.mxu0 %v1318
      %v1430 = vpop.f32.mrf.mxu0
      %v1431 = vadd.f32 0.0, %v1430
      %1432 = vmatmul.f32.gmra.mxu0 %v1321
      %v1433 = vpop.f32.mrf.mxu0
      %v1434 = vadd.f32 0.0, %v1433
      %1435 = vmatmul.f32.gmra.mxu0 %v1324
      %v1436 = vpop.f32.mrf.mxu0
      %v1437 = vadd.f32 0.0, %v1436
      %1438 = vmatmul.f32.gmra.mxu0 %v1327
      %v1439 = vpop.f32.mrf.mxu0
      %v1440 = vadd.f32 0.0, %v1439
      %1441 = vmatmul.f32.gmra.mxu0 %v1330
      %v1442 = vpop.f32.mrf.mxu0
      %v1443 = vadd.f32 0.0, %v1442
      %1444 = vmatmul.f32.gmra.mxu0 %v1333
      %v1445 = vpop.f32.mrf.mxu0
      %v1446 = vadd.f32 0.0, %v1445
      %1447 = vmatmul.f32.gmra.mxu0 %v1336
      %v1448 = vpop.f32.mrf.mxu0
      %v1449 = vadd.f32 0.0, %v1448
      %1450 = vmatmul.f32.gmra.mxu0 %v1339
      %v1451 = vpop.f32.mrf.mxu0
      %v1452 = vadd.f32 0.0, %v1451
      %1453 = vmatmul.f32.gmra.mxu0 %v1342
      %v1454 = vpop.f32.mrf.mxu0
      %v1455 = vadd.f32 0.0, %v1454
      %1456 = vmatmul.f32.gmra.mxu0 %v1345
      %v1457 = vpop.f32.mrf.mxu0
      %v1458 = vadd.f32 0.0, %v1457
      %1459 = vmatmul.f32.gmra.mxu0 %v1348
      %v1460 = vpop.f32.mrf.mxu0
      %v1461 = vadd.f32 0.0, %v1460
      %1462 = vmatmul.f32.gmra.mxu0 %v1351
      %v1463 = vpop.f32.mrf.mxu0
      %v1464 = vadd.f32 0.0, %v1463
      %1465 = vmatmul.f32.gmra.mxu0 %v1354
      %v1466 = vpop.f32.mrf.mxu0
      %v1467 = vadd.f32 0.0, %v1466
      %1468 = vmatmul.f32.gmra.mxu0 %v1357
      %v1469 = vpop.f32.mrf.mxu0
      %v1470 = vadd.f32 0.0, %v1469
      %1471 = vmatmul.f32.gmra.mxu0 %v1360
      %v1472 = vpop.f32.mrf.mxu0
      %v1473 = vadd.f32 0.0, %v1472
      %1474 = vmatmul.f32.gmra.mxu0 %v1363
      %v1475 = vpop.f32.mrf.mxu0
      %v1476 = vadd.f32 0.0, %v1475
      %1477 = vdwg.mxu0
      %v1478 = vadd.f32 %v1203, %v1383
      %v1479 = vadd.f32 %v1204, %v1386
      %v1480 = vadd.f32 %v1205, %v1389
      %v1481 = vadd.f32 %v1206, %v1392
      %v1482 = vadd.f32 %v1207, %v1395
      %v1483 = vadd.f32 %v1208, %v1398
      %v1484 = vadd.f32 %v1209, %v1401
      %v1485 = vadd.f32 %v1210, %v1404
      %v1486 = vadd.f32 %v1211, %v1407
      %v1487 = vadd.f32 %v1212, %v1410
      %v1488 = vadd.f32 %v1213, %v1413
      %v1489 = vadd.f32 %v1214, %v1416
      %v1490 = vadd.f32 %v1215, %v1419
      %v1491 = vadd.f32 %v1216, %v1422
      %v1492 = vadd.f32 %v1217, %v1425
      %v1493 = vadd.f32 %v1218, %v1428
      %v1494 = vadd.f32 %v1219, %v1431
      %v1495 = vadd.f32 %v1220, %v1434
      %v1496 = vadd.f32 %v1221, %v1437
      %v1497 = vadd.f32 %v1222, %v1440
      %v1498 = vadd.f32 %v1223, %v1443
      %v1499 = vadd.f32 %v1224, %v1446
      %v1500 = vadd.f32 %v1225, %v1449
      %v1501 = vadd.f32 %v1226, %v1452
      %v1502 = vadd.f32 %v1227, %v1455
      %v1503 = vadd.f32 %v1228, %v1458
      %v1504 = vadd.f32 %v1229, %v1461
      %v1505 = vadd.f32 %v1230, %v1464
      %v1506 = vadd.f32 %v1231, %v1467
      %v1507 = vadd.f32 %v1232, %v1470
      %v1508 = vadd.f32 %v1233, %v1473
      %v1509 = vadd.f32 %v1234, %v1476
      %v1510 = vld [vmem:[%s959 + $0x2] sm:$0xff]
      %v1511 = vld [vmem:[%s959 + $0xa] sm:$0xff]
      %v1512 = vld [vmem:[%s959 + $0x1a] sm:$0xff]
      %v1513 = vld [vmem:[%s959 + $0x22] sm:$0xff]
      %v1514 = vld [vmem:[%s959 + $0x32] sm:$0xff]
      %v1515 = vld [vmem:[%s959 + $0x3a] sm:$0xff]
      %v1516 = vld [vmem:[%s959 + $0x4a] sm:$0xff]
      %v1517 = vld [vmem:[%s959 + $0x52] sm:$0xff]
      %v1518 = vld [vmem:[%s959 + $0x62] sm:$0xff]
      %v1519 = vld [vmem:[%s959 + $0x6a] sm:$0xff]
      %v1520 = vld [vmem:[%s959 + $0x7a] sm:$0xff]
      %v1521 = vld [vmem:[%s959 + $0x82] sm:$0xff]
      %v1522 = vld [vmem:[%s959 + $0x92] sm:$0xff]
      %v1523 = vld [vmem:[%s959 + $0x9a] sm:$0xff]
      %v1524 = vld [vmem:[%s959 + $0xaa] sm:$0xff]
      %v1525 = vld [vmem:[%s959 + $0xb2] sm:$0xff]
      %v1526 = vld [vmem:[%s959 + $0xc2] sm:$0xff]
      %v1527 = vld [vmem:[%s959 + $0xca] sm:$0xff]
      %v1528 = vld [vmem:[%s959 + $0xda] sm:$0xff]
      %v1529 = vld [vmem:[%s959 + $0xe2] sm:$0xff]
      %v1530 = vld [vmem:[%s959 + $0xf2] sm:$0xff]
      %v1531 = vld [vmem:[%s959 + $0xfa] sm:$0xff]
      %v1532 = vld [vmem:[%s959 + $0x10a] sm:$0xff]
      %v1533 = vld [vmem:[%s959 + $0x112] sm:$0xff]
      %v1534 = vld [vmem:[%s959 + $0x122] sm:$0xff]
      %v1535 = vld [vmem:[%s959 + $0x12a] sm:$0xff]
      %v1536 = vld [vmem:[%s959 + $0x13a] sm:$0xff]
      %v1537 = vld [vmem:[%s959 + $0x142] sm:$0xff]
      %v1538 = vld [vmem:[%s959 + $0x152] sm:$0xff]
      %v1539 = vld [vmem:[%s959 + $0x15a] sm:$0xff]
      %v1540 = vld [vmem:[%s959 + $0x16a] sm:$0xff]
      %v1541 = vld [vmem:[%s959 + $0x172] sm:$0xff]
      %s1542 = scalar_lea.vmem %s1, 40
      %v1543 = vld [vmem:[%s1542] sm:$0xff]
      %v1545 = vsel %vm265, %v1510, 0
      %v1548 = vsel %vm265, %v1511, 0
      %v1551 = vsel %vm265, %v1512, 0
      %v1554 = vsel %vm265, %v1513, 0
      %v1557 = vsel %vm265, %v1514, 0
      %v1560 = vsel %vm265, %v1515, 0
      %v1563 = vsel %vm265, %v1516, 0
      %v1566 = vsel %vm265, %v1517, 0
      %v1569 = vsel %vm265, %v1518, 0
      %v1572 = vsel %vm265, %v1519, 0
      %v1575 = vsel %vm265, %v1520, 0
      %v1578 = vsel %vm265, %v1521, 0
      %v1581 = vsel %vm265, %v1522, 0
      %v1584 = vsel %vm265, %v1523, 0
      %v1587 = vsel %vm265, %v1524, 0
      %v1590 = vsel %vm265, %v1525, 0
      %v1593 = vsel %vm265, %v1526, 0
      %v1596 = vsel %vm265, %v1527, 0
      %v1599 = vsel %vm265, %v1528, 0
      %v1602 = vsel %vm265, %v1529, 0
      %v1605 = vsel %vm265, %v1530, 0
      %v1608 = vsel %vm265, %v1531, 0
      %v1611 = vsel %vm265, %v1532, 0
      %v1614 = vsel %vm265, %v1533, 0
      %v1617 = vsel %vm265, %v1534, 0
      %v1620 = vsel %vm265, %v1535, 0
      %v1623 = vsel %vm265, %v1536, 0
      %v1626 = vsel %vm265, %v1537, 0
      %v1629 = vsel %vm265, %v1538, 0
      %v1632 = vsel %vm265, %v1539, 0
      %v1635 = vsel %vm265, %v1540, 0
      %v1638 = vsel %vm265, %v1541, 0
      %1640 = vmatpush.msra.mxu0 0.0
      %1641 = vmatpush.msra.mxu0 0.0
      %1642 = vmatpush.msra.mxu0 0.0
      %1643 = vmatpush.msra.mxu0 0.0
      %1644 = vmatpush.msra.mxu0 0.0
      %1645 = vmatpush.msra.mxu0 0.0
      %1646 = vmatpush.msra.mxu0 0.0
      %1647 = vmatpush.msra.mxu0 0.0
      %1648 = vmatpush.msra.mxu0 0.0
      %1649 = vmatpush.msra.mxu0 0.0
      %1650 = vmatpush.msra.mxu0 0.0
      %1651 = vmatpush.msra.mxu0 0.0
      %1652 = vmatpush.msra.mxu0 0.0
      %1653 = vmatpush.msra.mxu0 0.0
      %1654 = vmatpush.msra.mxu0 0.0
      %1655 = vmatpush.msra.mxu0 %v1543
      %1656 = vmatmul.f32.gmra.mxu0 %v1545
      %v1657 = vpop.f32.mrf.mxu0
      %v1658 = vadd.f32 0.0, %v1657
      %1659 = vmatmul.f32.gmra.mxu0 %v1548
      %v1660 = vpop.f32.mrf.mxu0
      %v1661 = vadd.f32 0.0, %v1660
      %1662 = vmatmul.f32.gmra.mxu0 %v1551
      %v1663 = vpop.f32.mrf.mxu0
      %v1664 = vadd.f32 0.0, %v1663
      %1665 = vmatmul.f32.gmra.mxu0 %v1554
      %v1666 = vpop.f32.mrf.mxu0
      %v1667 = vadd.f32 0.0, %v1666
      %1668 = vmatmul.f32.gmra.mxu0 %v1557
      %v1669 = vpop.f32.mrf.mxu0
      %v1670 = vadd.f32 0.0, %v1669
      %1671 = vmatmul.f32.gmra.mxu0 %v1560
      %v1672 = vpop.f32.mrf.mxu0
      %v1673 = vadd.f32 0.0, %v1672
      %1674 = vmatmul.f32.gmra.mxu0 %v1563
      %v1675 = vpop.f32.mrf.mxu0
      %v1676 = vadd.f32 0.0, %v1675
      %1677 = vmatmul.f32.gmra.mxu0 %v1566
      %v1678 = vpop.f32.mrf.mxu0
      %v1679 = vadd.f32 0.0, %v1678
      %1680 = vmatmul.f32.gmra.mxu0 %v1569
      %v1681 = vpop.f32.mrf.mxu0
      %v1682 = vadd.f32 0.0, %v1681
      %1683 = vmatmul.f32.gmra.mxu0 %v1572
      %v1684 = vpop.f32.mrf.mxu0
      %v1685 = vadd.f32 0.0, %v1684
      %1686 = vmatmul.f32.gmra.mxu0 %v1575
      %v1687 = vpop.f32.mrf.mxu0
      %v1688 = vadd.f32 0.0, %v1687
      %1689 = vmatmul.f32.gmra.mxu0 %v1578
      %v1690 = vpop.f32.mrf.mxu0
      %v1691 = vadd.f32 0.0, %v1690
      %1692 = vmatmul.f32.gmra.mxu0 %v1581
      %v1693 = vpop.f32.mrf.mxu0
      %v1694 = vadd.f32 0.0, %v1693
      %1695 = vmatmul.f32.gmra.mxu0 %v1584
      %v1696 = vpop.f32.mrf.mxu0
      %v1697 = vadd.f32 0.0, %v1696
      %1698 = vmatmul.f32.gmra.mxu0 %v1587
      %v1699 = vpop.f32.mrf.mxu0
      %v1700 = vadd.f32 0.0, %v1699
      %1701 = vmatmul.f32.gmra.mxu0 %v1590
      %v1702 = vpop.f32.mrf.mxu0
      %v1703 = vadd.f32 0.0, %v1702
      %1704 = vmatmul.f32.gmra.mxu0 %v1593
      %v1705 = vpop.f32.mrf.mxu0
      %v1706 = vadd.f32 0.0, %v1705
      %1707 = vmatmul.f32.gmra.mxu0 %v1596
      %v1708 = vpop.f32.mrf.mxu0
      %v1709 = vadd.f32 0.0, %v1708
      %1710 = vmatmul.f32.gmra.mxu0 %v1599
      %v1711 = vpop.f32.mrf.mxu0
      %v1712 = vadd.f32 0.0, %v1711
      %1713 = vmatmul.f32.gmra.mxu0 %v1602
      %v1714 = vpop.f32.mrf.mxu0
      %v1715 = vadd.f32 0.0, %v1714
      %1716 = vmatmul.f32.gmra.mxu0 %v1605
      %v1717 = vpop.f32.mrf.mxu0
      %v1718 = vadd.f32 0.0, %v1717
      %1719 = vmatmul.f32.gmra.mxu0 %v1608
      %v1720 = vpop.f32.mrf.mxu0
      %v1721 = vadd.f32 0.0, %v1720
      %1722 = vmatmul.f32.gmra.mxu0 %v1611
      %v1723 = vpop.f32.mrf.mxu0
      %v1724 = vadd.f32 0.0, %v1723
      %1725 = vmatmul.f32.gmra.mxu0 %v1614
      %v1726 = vpop.f32.mrf.mxu0
      %v1727 = vadd.f32 0.0, %v1726
      %1728 = vmatmul.f32.gmra.mxu0 %v1617
      %v1729 = vpop.f32.mrf.mxu0
      %v1730 = vadd.f32 0.0, %v1729
      %1731 = vmatmul.f32.gmra.mxu0 %v1620
      %v1732 = vpop.f32.mrf.mxu0
      %v1733 = vadd.f32 0.0, %v1732
      %1734 = vmatmul.f32.gmra.mxu0 %v1623
      %v1735 = vpop.f32.mrf.mxu0
      %v1736 = vadd.f32 0.0, %v1735
      %1737 = vmatmul.f32.gmra.mxu0 %v1626
      %v1738 = vpop.f32.mrf.mxu0
      %v1739 = vadd.f32 0.0, %v1738
      %1740 = vmatmul.f32.gmra.mxu0 %v1629
      %v1741 = vpop.f32.mrf.mxu0
      %v1742 = vadd.f32 0.0, %v1741
      %1743 = vmatmul.f32.gmra.mxu0 %v1632
      %v1744 = vpop.f32.mrf.mxu0
      %v1745 = vadd.f32 0.0, %v1744
      %1746 = vmatmul.f32.gmra.mxu0 %v1635
      %v1747 = vpop.f32.mrf.mxu0
      %v1748 = vadd.f32 0.0, %v1747
      %1749 = vmatmul.f32.gmra.mxu0 %v1638
      %v1750 = vpop.f32.mrf.mxu0
      %v1751 = vadd.f32 0.0, %v1750
      %1752 = vdwg.mxu0
      %v1753 = vadd.f32 %v1478, %v1658
      %v1754 = vadd.f32 %v1479, %v1661
      %v1755 = vadd.f32 %v1480, %v1664
      %v1756 = vadd.f32 %v1481, %v1667
      %v1757 = vadd.f32 %v1482, %v1670
      %v1758 = vadd.f32 %v1483, %v1673
      %v1759 = vadd.f32 %v1484, %v1676
      %v1760 = vadd.f32 %v1485, %v1679
      %v1761 = vadd.f32 %v1486, %v1682
      %v1762 = vadd.f32 %v1487, %v1685
      %v1763 = vadd.f32 %v1488, %v1688
      %v1764 = vadd.f32 %v1489, %v1691
      %v1765 = vadd.f32 %v1490, %v1694
      %v1766 = vadd.f32 %v1491, %v1697
      %v1767 = vadd.f32 %v1492, %v1700
      %v1768 = vadd.f32 %v1493, %v1703
      %v1769 = vadd.f32 %v1494, %v1706
      %v1770 = vadd.f32 %v1495, %v1709
      %v1771 = vadd.f32 %v1496, %v1712
      %v1772 = vadd.f32 %v1497, %v1715
      %v1773 = vadd.f32 %v1498, %v1718
      %v1774 = vadd.f32 %v1499, %v1721
      %v1775 = vadd.f32 %v1500, %v1724
      %v1776 = vadd.f32 %v1501, %v1727
      %v1777 = vadd.f32 %v1502, %v1730
      %v1778 = vadd.f32 %v1503, %v1733
      %v1779 = vadd.f32 %v1504, %v1736
      %v1780 = vadd.f32 %v1505, %v1739
      %v1781 = vadd.f32 %v1506, %v1742
      %v1782 = vadd.f32 %v1507, %v1745
      %v1783 = vadd.f32 %v1508, %v1748
      %v1784 = vadd.f32 %v1509, %v1751
      %s1785 = scalar_lea.vmem %s192, 48
      %v1786 = vld [vmem:[%s1785] sm:$0xff]
      %v1787 = vld [vmem:[%s1785 + $0x8] sm:$0xff]
      %v1788 = vld [vmem:[%s1785 + $0x18] sm:$0xff]
      %v1789 = vld [vmem:[%s1785 + $0x20] sm:$0xff]
      %v1790 = vld [vmem:[%s1785 + $0x30] sm:$0xff]
      %v1791 = vld [vmem:[%s1785 + $0x38] sm:$0xff]
      %v1792 = vld [vmem:[%s1785 + $0x48] sm:$0xff]
      %v1793 = vld [vmem:[%s1785 + $0x50] sm:$0xff]
      %v1794 = vld [vmem:[%s1785 + $0x60] sm:$0xff]
      %v1795 = vld [vmem:[%s1785 + $0x68] sm:$0xff]
      %v1796 = vld [vmem:[%s1785 + $0x78] sm:$0xff]
      %v1797 = vld [vmem:[%s1785 + $0x80] sm:$0xff]
      %v1798 = vld [vmem:[%s1785 + $0x90] sm:$0xff]
      %v1799 = vld [vmem:[%s1785 + $0x98] sm:$0xff]
      %v1800 = vld [vmem:[%s1785 + $0xa8] sm:$0xff]
      %v1801 = vld [vmem:[%s1785 + $0xb0] sm:$0xff]
      %v1802 = vld [vmem:[%s1785 + $0xc0] sm:$0xff]
      %v1803 = vld [vmem:[%s1785 + $0xc8] sm:$0xff]
      %v1804 = vld [vmem:[%s1785 + $0xd8] sm:$0xff]
      %v1805 = vld [vmem:[%s1785 + $0xe0] sm:$0xff]
      %v1806 = vld [vmem:[%s1785 + $0xf0] sm:$0xff]
      %v1807 = vld [vmem:[%s1785 + $0xf8] sm:$0xff]
      %v1808 = vld [vmem:[%s1785 + $0x108] sm:$0xff]
      %v1809 = vld [vmem:[%s1785 + $0x110] sm:$0xff]
      %v1810 = vld [vmem:[%s1785 + $0x120] sm:$0xff]
      %v1811 = vld [vmem:[%s1785 + $0x128] sm:$0xff]
      %v1812 = vld [vmem:[%s1785 + $0x138] sm:$0xff]
      %v1813 = vld [vmem:[%s1785 + $0x140] sm:$0xff]
      %v1814 = vld [vmem:[%s1785 + $0x150] sm:$0xff]
      %v1815 = vld [vmem:[%s1785 + $0x158] sm:$0xff]
      %v1816 = vld [vmem:[%s1785 + $0x168] sm:$0xff]
      %v1817 = vld [vmem:[%s1785 + $0x170] sm:$0xff]
      %s1818 = scalar_lea.vmem %s1, 48
      %v1819 = vld [vmem:[%s1818] sm:$0xff]
      %v1821 = vsel %vm265, %v1786, 0
      %v1824 = vsel %vm265, %v1787, 0
      %v1827 = vsel %vm265, %v1788, 0
      %v1830 = vsel %vm265, %v1789, 0
      %v1833 = vsel %vm265, %v1790, 0
      %v1836 = vsel %vm265, %v1791, 0
      %v1839 = vsel %vm265, %v1792, 0
      %v1842 = vsel %vm265, %v1793, 0
      %v1845 = vsel %vm265, %v1794, 0
      %v1848 = vsel %vm265, %v1795, 0
      %v1851 = vsel %vm265, %v1796, 0
      %v1854 = vsel %vm265, %v1797, 0
      %v1857 = vsel %vm265, %v1798, 0
      %v1860 = vsel %vm265, %v1799, 0
      %v1863 = vsel %vm265, %v1800, 0
      %v1866 = vsel %vm265, %v1801, 0
      %v1869 = vsel %vm265, %v1802, 0
      %v1872 = vsel %vm265, %v1803, 0
      %v1875 = vsel %vm265, %v1804, 0
      %v1878 = vsel %vm265, %v1805, 0
      %v1881 = vsel %vm265, %v1806, 0
      %v1884 = vsel %vm265, %v1807, 0
      %v1887 = vsel %vm265, %v1808, 0
      %v1890 = vsel %vm265, %v1809, 0
      %v1893 = vsel %vm265, %v1810, 0
      %v1896 = vsel %vm265, %v1811, 0
      %v1899 = vsel %vm265, %v1812, 0
      %v1902 = vsel %vm265, %v1813, 0
      %v1905 = vsel %vm265, %v1814, 0
      %v1908 = vsel %vm265, %v1815, 0
      %v1911 = vsel %vm265, %v1816, 0
      %v1914 = vsel %vm265, %v1817, 0
      %1916 = vmatpush.msra.mxu0 0.0
      %1917 = vmatpush.msra.mxu0 0.0
      %1918 = vmatpush.msra.mxu0 0.0
      %1919 = vmatpush.msra.mxu0 0.0
      %1920 = vmatpush.msra.mxu0 0.0
      %1921 = vmatpush.msra.mxu0 0.0
      %1922 = vmatpush.msra.mxu0 0.0
      %1923 = vmatpush.msra.mxu0 0.0
      %1924 = vmatpush.msra.mxu0 0.0
      %1925 = vmatpush.msra.mxu0 0.0
      %1926 = vmatpush.msra.mxu0 0.0
      %1927 = vmatpush.msra.mxu0 0.0
      %1928 = vmatpush.msra.mxu0 0.0
      %1929 = vmatpush.msra.mxu0 0.0
      %1930 = vmatpush.msra.mxu0 0.0
      %1931 = vmatpush.msra.mxu0 %v1819
      %1932 = vmatmul.f32.gmra.mxu0 %v1821
      %v1933 = vpop.f32.mrf.mxu0
      %v1934 = vadd.f32 0.0, %v1933
      %1935 = vmatmul.f32.gmra.mxu0 %v1824
      %v1936 = vpop.f32.mrf.mxu0
      %v1937 = vadd.f32 0.0, %v1936
      %1938 = vmatmul.f32.gmra.mxu0 %v1827
      %v1939 = vpop.f32.mrf.mxu0
      %v1940 = vadd.f32 0.0, %v1939
      %1941 = vmatmul.f32.gmra.mxu0 %v1830
      %v1942 = vpop.f32.mrf.mxu0
      %v1943 = vadd.f32 0.0, %v1942
      %1944 = vmatmul.f32.gmra.mxu0 %v1833
      %v1945 = vpop.f32.mrf.mxu0
      %v1946 = vadd.f32 0.0, %v1945
      %1947 = vmatmul.f32.gmra.mxu0 %v1836
      %v1948 = vpop.f32.mrf.mxu0
      %v1949 = vadd.f32 0.0, %v1948
      %1950 = vmatmul.f32.gmra.mxu0 %v1839
      %v1951 = vpop.f32.mrf.mxu0
      %v1952 = vadd.f32 0.0, %v1951
      %1953 = vmatmul.f32.gmra.mxu0 %v1842
      %v1954 = vpop.f32.mrf.mxu0
      %v1955 = vadd.f32 0.0, %v1954
      %1956 = vmatmul.f32.gmra.mxu0 %v1845
      %v1957 = vpop.f32.mrf.mxu0
      %v1958 = vadd.f32 0.0, %v1957
      %1959 = vmatmul.f32.gmra.mxu0 %v1848
      %v1960 = vpop.f32.mrf.mxu0
      %v1961 = vadd.f32 0.0, %v1960
      %1962 = vmatmul.f32.gmra.mxu0 %v1851
      %v1963 = vpop.f32.mrf.mxu0
      %v1964 = vadd.f32 0.0, %v1963
      %1965 = vmatmul.f32.gmra.mxu0 %v1854
      %v1966 = vpop.f32.mrf.mxu0
      %v1967 = vadd.f32 0.0, %v1966
      %1968 = vmatmul.f32.gmra.mxu0 %v1857
      %v1969 = vpop.f32.mrf.mxu0
      %v1970 = vadd.f32 0.0, %v1969
      %1971 = vmatmul.f32.gmra.mxu0 %v1860
      %v1972 = vpop.f32.mrf.mxu0
      %v1973 = vadd.f32 0.0, %v1972
      %1974 = vmatmul.f32.gmra.mxu0 %v1863
      %v1975 = vpop.f32.mrf.mxu0
      %v1976 = vadd.f32 0.0, %v1975
      %1977 = vmatmul.f32.gmra.mxu0 %v1866
      %v1978 = vpop.f32.mrf.mxu0
      %v1979 = vadd.f32 0.0, %v1978
      %1980 = vmatmul.f32.gmra.mxu0 %v1869
      %v1981 = vpop.f32.mrf.mxu0
      %v1982 = vadd.f32 0.0, %v1981
      %1983 = vmatmul.f32.gmra.mxu0 %v1872
      %v1984 = vpop.f32.mrf.mxu0
      %v1985 = vadd.f32 0.0, %v1984
      %1986 = vmatmul.f32.gmra.mxu0 %v1875
      %v1987 = vpop.f32.mrf.mxu0
      %v1988 = vadd.f32 0.0, %v1987
      %1989 = vmatmul.f32.gmra.mxu0 %v1878
      %v1990 = vpop.f32.mrf.mxu0
      %v1991 = vadd.f32 0.0, %v1990
      %1992 = vmatmul.f32.gmra.mxu0 %v1881
      %v1993 = vpop.f32.mrf.mxu0
      %v1994 = vadd.f32 0.0, %v1993
      %1995 = vmatmul.f32.gmra.mxu0 %v1884
      %v1996 = vpop.f32.mrf.mxu0
      %v1997 = vadd.f32 0.0, %v1996
      %1998 = vmatmul.f32.gmra.mxu0 %v1887
      %v1999 = vpop.f32.mrf.mxu0
      %v2000 = vadd.f32 0.0, %v1999
      %2001 = vmatmul.f32.gmra.mxu0 %v1890
      %v2002 = vpop.f32.mrf.mxu0
      %v2003 = vadd.f32 0.0, %v2002
      %2004 = vmatmul.f32.gmra.mxu0 %v1893
      %v2005 = vpop.f32.mrf.mxu0
      %v2006 = vadd.f32 0.0, %v2005
      %2007 = vmatmul.f32.gmra.mxu0 %v1896
      %v2008 = vpop.f32.mrf.mxu0
      %v2009 = vadd.f32 0.0, %v2008
      %2010 = vmatmul.f32.gmra.mxu0 %v1899
      %v2011 = vpop.f32.mrf.mxu0
      %v2012 = vadd.f32 0.0, %v2011
      %2013 = vmatmul.f32.gmra.mxu0 %v1902
      %v2014 = vpop.f32.mrf.mxu0
      %v2015 = vadd.f32 0.0, %v2014
      %2016 = vmatmul.f32.gmra.mxu0 %v1905
      %v2017 = vpop.f32.mrf.mxu0
      %v2018 = vadd.f32 0.0, %v2017
      %2019 = vmatmul.f32.gmra.mxu0 %v1908
      %v2020 = vpop.f32.mrf.mxu0
      %v2021 = vadd.f32 0.0, %v2020
      %2022 = vmatmul.f32.gmra.mxu0 %v1911
      %v2023 = vpop.f32.mrf.mxu0
      %v2024 = vadd.f32 0.0, %v2023
      %2025 = vmatmul.f32.gmra.mxu0 %v1914
      %v2026 = vpop.f32.mrf.mxu0
      %v2027 = vadd.f32 0.0, %v2026
      %2028 = vdwg.mxu0
      %v2029 = vadd.f32 %v1753, %v1934
      %v2030 = vadd.f32 %v1754, %v1937
      %v2031 = vadd.f32 %v1755, %v1940
      %v2032 = vadd.f32 %v1756, %v1943
      %v2033 = vadd.f32 %v1757, %v1946
      %v2034 = vadd.f32 %v1758, %v1949
      %v2035 = vadd.f32 %v1759, %v1952
      %v2036 = vadd.f32 %v1760, %v1955
      %v2037 = vadd.f32 %v1761, %v1958
      %v2038 = vadd.f32 %v1762, %v1961
      %v2039 = vadd.f32 %v1763, %v1964
      %v2040 = vadd.f32 %v1764, %v1967
      %v2041 = vadd.f32 %v1765, %v1970
      %v2042 = vadd.f32 %v1766, %v1973
      %v2043 = vadd.f32 %v1767, %v1976
      %v2044 = vadd.f32 %v1768, %v1979
      %v2045 = vadd.f32 %v1769, %v1982
      %v2046 = vadd.f32 %v1770, %v1985
      %v2047 = vadd.f32 %v1771, %v1988
      %v2048 = vadd.f32 %v1772, %v1991
      %v2049 = vadd.f32 %v1773, %v1994
      %v2050 = vadd.f32 %v1774, %v1997
      %v2051 = vadd.f32 %v1775, %v2000
      %v2052 = vadd.f32 %v1776, %v2003
      %v2053 = vadd.f32 %v1777, %v2006
      %v2054 = vadd.f32 %v1778, %v2009
      %v2055 = vadd.f32 %v1779, %v2012
      %v2056 = vadd.f32 %v1780, %v2015
      %v2057 = vadd.f32 %v1781, %v2018
      %v2058 = vadd.f32 %v1782, %v2021
      %v2059 = vadd.f32 %v1783, %v2024
      %v2060 = vadd.f32 %v1784, %v2027
      %v2061 = vld [vmem:[%s1785 + $0x1] sm:$0xff]
      %v2062 = vld [vmem:[%s1785 + $0x9] sm:$0xff]
      %v2063 = vld [vmem:[%s1785 + $0x19] sm:$0xff]
      %v2064 = vld [vmem:[%s1785 + $0x21] sm:$0xff]
      %v2065 = vld [vmem:[%s1785 + $0x31] sm:$0xff]
      %v2066 = vld [vmem:[%s1785 + $0x39] sm:$0xff]
      %v2067 = vld [vmem:[%s1785 + $0x49] sm:$0xff]
      %v2068 = vld [vmem:[%s1785 + $0x51] sm:$0xff]
      %v2069 = vld [vmem:[%s1785 + $0x61] sm:$0xff]
      %v2070 = vld [vmem:[%s1785 + $0x69] sm:$0xff]
      %v2071 = vld [vmem:[%s1785 + $0x79] sm:$0xff]
      %v2072 = vld [vmem:[%s1785 + $0x81] sm:$0xff]
      %v2073 = vld [vmem:[%s1785 + $0x91] sm:$0xff]
      %v2074 = vld [vmem:[%s1785 + $0x99] sm:$0xff]
      %v2075 = vld [vmem:[%s1785 + $0xa9] sm:$0xff]
      %v2076 = vld [vmem:[%s1785 + $0xb1] sm:$0xff]
      %v2077 = vld [vmem:[%s1785 + $0xc1] sm:$0xff]
      %v2078 = vld [vmem:[%s1785 + $0xc9] sm:$0xff]
      %v2079 = vld [vmem:[%s1785 + $0xd9] sm:$0xff]
      %v2080 = vld [vmem:[%s1785 + $0xe1] sm:$0xff]
      %v2081 = vld [vmem:[%s1785 + $0xf1] sm:$0xff]
      %v2082 = vld [vmem:[%s1785 + $0xf9] sm:$0xff]
      %v2083 = vld [vmem:[%s1785 + $0x109] sm:$0xff]
      %v2084 = vld [vmem:[%s1785 + $0x111] sm:$0xff]
      %v2085 = vld [vmem:[%s1785 + $0x121] sm:$0xff]
      %v2086 = vld [vmem:[%s1785 + $0x129] sm:$0xff]
      %v2087 = vld [vmem:[%s1785 + $0x139] sm:$0xff]
      %v2088 = vld [vmem:[%s1785 + $0x141] sm:$0xff]
      %v2089 = vld [vmem:[%s1785 + $0x151] sm:$0xff]
      %v2090 = vld [vmem:[%s1785 + $0x159] sm:$0xff]
      %v2091 = vld [vmem:[%s1785 + $0x169] sm:$0xff]
      %v2092 = vld [vmem:[%s1785 + $0x171] sm:$0xff]
      %s2093 = scalar_lea.vmem %s1, 56
      %v2094 = vld [vmem:[%s2093] sm:$0xff]
      %v2096 = vsel %vm265, %v2061, 0
      %v2099 = vsel %vm265, %v2062, 0
      %v2102 = vsel %vm265, %v2063, 0
      %v2105 = vsel %vm265, %v2064, 0
      %v2108 = vsel %vm265, %v2065, 0
      %v2111 = vsel %vm265, %v2066, 0
      %v2114 = vsel %vm265, %v2067, 0
      %v2117 = vsel %vm265, %v2068, 0
      %v2120 = vsel %vm265, %v2069, 0
      %v2123 = vsel %vm265, %v2070, 0
      %v2126 = vsel %vm265, %v2071, 0
      %v2129 = vsel %vm265, %v2072, 0
      %v2132 = vsel %vm265, %v2073, 0
      %v2135 = vsel %vm265, %v2074, 0
      %v2138 = vsel %vm265, %v2075, 0
      %v2141 = vsel %vm265, %v2076, 0
      %v2144 = vsel %vm265, %v2077, 0
      %v2147 = vsel %vm265, %v2078, 0
      %v2150 = vsel %vm265, %v2079, 0
      %v2153 = vsel %vm265, %v2080, 0
      %v2156 = vsel %vm265, %v2081, 0
      %v2159 = vsel %vm265, %v2082, 0
      %v2162 = vsel %vm265, %v2083, 0
      %v2165 = vsel %vm265, %v2084, 0
      %v2168 = vsel %vm265, %v2085, 0
      %v2171 = vsel %vm265, %v2086, 0
      %v2174 = vsel %vm265, %v2087, 0
      %v2177 = vsel %vm265, %v2088, 0
      %v2180 = vsel %vm265, %v2089, 0
      %v2183 = vsel %vm265, %v2090, 0
      %v2186 = vsel %vm265, %v2091, 0
      %v2189 = vsel %vm265, %v2092, 0
      %2191 = vmatpush.msra.mxu0 0.0
      %2192 = vmatpush.msra.mxu0 0.0
      %2193 = vmatpush.msra.mxu0 0.0
      %2194 = vmatpush.msra.mxu0 0.0
      %2195 = vmatpush.msra.mxu0 0.0
      %2196 = vmatpush.msra.mxu0 0.0
      %2197 = vmatpush.msra.mxu0 0.0
      %2198 = vmatpush.msra.mxu0 0.0
      %2199 = vmatpush.msra.mxu0 0.0
      %2200 = vmatpush.msra.mxu0 0.0
      %2201 = vmatpush.msra.mxu0 0.0
      %2202 = vmatpush.msra.mxu0 0.0
      %2203 = vmatpush.msra.mxu0 0.0
      %2204 = vmatpush.msra.mxu0 0.0
      %2205 = vmatpush.msra.mxu0 0.0
      %2206 = vmatpush.msra.mxu0 %v2094
      %2207 = vmatmul.f32.gmra.mxu0 %v2096
      %v2208 = vpop.f32.mrf.mxu0
      %v2209 = vadd.f32 0.0, %v2208
      %2210 = vmatmul.f32.gmra.mxu0 %v2099
      %v2211 = vpop.f32.mrf.mxu0
      %v2212 = vadd.f32 0.0, %v2211
      %2213 = vmatmul.f32.gmra.mxu0 %v2102
      %v2214 = vpop.f32.mrf.mxu0
      %v2215 = vadd.f32 0.0, %v2214
      %2216 = vmatmul.f32.gmra.mxu0 %v2105
      %v2217 = vpop.f32.mrf.mxu0
      %v2218 = vadd.f32 0.0, %v2217
      %2219 = vmatmul.f32.gmra.mxu0 %v2108
      %v2220 = vpop.f32.mrf.mxu0
      %v2221 = vadd.f32 0.0, %v2220
      %2222 = vmatmul.f32.gmra.mxu0 %v2111
      %v2223 = vpop.f32.mrf.mxu0
      %v2224 = vadd.f32 0.0, %v2223
      %2225 = vmatmul.f32.gmra.mxu0 %v2114
      %v2226 = vpop.f32.mrf.mxu0
      %v2227 = vadd.f32 0.0, %v2226
      %2228 = vmatmul.f32.gmra.mxu0 %v2117
      %v2229 = vpop.f32.mrf.mxu0
      %v2230 = vadd.f32 0.0, %v2229
      %2231 = vmatmul.f32.gmra.mxu0 %v2120
      %v2232 = vpop.f32.mrf.mxu0
      %v2233 = vadd.f32 0.0, %v2232
      %2234 = vmatmul.f32.gmra.mxu0 %v2123
      %v2235 = vpop.f32.mrf.mxu0
      %v2236 = vadd.f32 0.0, %v2235
      %2237 = vmatmul.f32.gmra.mxu0 %v2126
      %v2238 = vpop.f32.mrf.mxu0
      %v2239 = vadd.f32 0.0, %v2238
      %2240 = vmatmul.f32.gmra.mxu0 %v2129
      %v2241 = vpop.f32.mrf.mxu0
      %v2242 = vadd.f32 0.0, %v2241
      %2243 = vmatmul.f32.gmra.mxu0 %v2132
      %v2244 = vpop.f32.mrf.mxu0
      %v2245 = vadd.f32 0.0, %v2244
      %2246 = vmatmul.f32.gmra.mxu0 %v2135
      %v2247 = vpop.f32.mrf.mxu0
      %v2248 = vadd.f32 0.0, %v2247
      %2249 = vmatmul.f32.gmra.mxu0 %v2138
      %v2250 = vpop.f32.mrf.mxu0
      %v2251 = vadd.f32 0.0, %v2250
      %2252 = vmatmul.f32.gmra.mxu0 %v2141
      %v2253 = vpop.f32.mrf.mxu0
      %v2254 = vadd.f32 0.0, %v2253
      %2255 = vmatmul.f32.gmra.mxu0 %v2144
      %v2256 = vpop.f32.mrf.mxu0
      %v2257 = vadd.f32 0.0, %v2256
      %2258 = vmatmul.f32.gmra.mxu0 %v2147
      %v2259 = vpop.f32.mrf.mxu0
      %v2260 = vadd.f32 0.0, %v2259
      %2261 = vmatmul.f32.gmra.mxu0 %v2150
      %v2262 = vpop.f32.mrf.mxu0
      %v2263 = vadd.f32 0.0, %v2262
      %2264 = vmatmul.f32.gmra.mxu0 %v2153
      %v2265 = vpop.f32.mrf.mxu0
      %v2266 = vadd.f32 0.0, %v2265
      %2267 = vmatmul.f32.gmra.mxu0 %v2156
      %v2268 = vpop.f32.mrf.mxu0
      %v2269 = vadd.f32 0.0, %v2268
      %2270 = vmatmul.f32.gmra.mxu0 %v2159
      %v2271 = vpop.f32.mrf.mxu0
      %v2272 = vadd.f32 0.0, %v2271
      %2273 = vmatmul.f32.gmra.mxu0 %v2162
      %v2274 = vpop.f32.mrf.mxu0
      %v2275 = vadd.f32 0.0, %v2274
      %2276 = vmatmul.f32.gmra.mxu0 %v2165
      %v2277 = vpop.f32.mrf.mxu0
      %v2278 = vadd.f32 0.0, %v2277
      %2279 = vmatmul.f32.gmra.mxu0 %v2168
      %v2280 = vpop.f32.mrf.mxu0
      %v2281 = vadd.f32 0.0, %v2280
      %2282 = vmatmul.f32.gmra.mxu0 %v2171
      %v2283 = vpop.f32.mrf.mxu0
      %v2284 = vadd.f32 0.0, %v2283
      %2285 = vmatmul.f32.gmra.mxu0 %v2174
      %v2286 = vpop.f32.mrf.mxu0
      %v2287 = vadd.f32 0.0, %v2286
      %2288 = vmatmul.f32.gmra.mxu0 %v2177
      %v2289 = vpop.f32.mrf.mxu0
      %v2290 = vadd.f32 0.0, %v2289
      %2291 = vmatmul.f32.gmra.mxu0 %v2180
      %v2292 = vpop.f32.mrf.mxu0
      %v2293 = vadd.f32 0.0, %v2292
      %2294 = vmatmul.f32.gmra.mxu0 %v2183
      %v2295 = vpop.f32.mrf.mxu0
      %v2296 = vadd.f32 0.0, %v2295
      %2297 = vmatmul.f32.gmra.mxu0 %v2186
      %v2298 = vpop.f32.mrf.mxu0
      %v2299 = vadd.f32 0.0, %v2298
      %2300 = vmatmul.f32.gmra.mxu0 %v2189
      %v2301 = vpop.f32.mrf.mxu0
      %v2302 = vadd.f32 0.0, %v2301
      %2303 = vdwg.mxu0
      %v2304 = vadd.f32 %v2029, %v2209
      %v2305 = vadd.f32 %v2030, %v2212
      %v2306 = vadd.f32 %v2031, %v2215
      %v2307 = vadd.f32 %v2032, %v2218
      %v2308 = vadd.f32 %v2033, %v2221
      %v2309 = vadd.f32 %v2034, %v2224
      %v2310 = vadd.f32 %v2035, %v2227
      %v2311 = vadd.f32 %v2036, %v2230
      %v2312 = vadd.f32 %v2037, %v2233
      %v2313 = vadd.f32 %v2038, %v2236
      %v2314 = vadd.f32 %v2039, %v2239
      %v2315 = vadd.f32 %v2040, %v2242
      %v2316 = vadd.f32 %v2041, %v2245
      %v2317 = vadd.f32 %v2042, %v2248
      %v2318 = vadd.f32 %v2043, %v2251
      %v2319 = vadd.f32 %v2044, %v2254
      %v2320 = vadd.f32 %v2045, %v2257
      %v2321 = vadd.f32 %v2046, %v2260
      %v2322 = vadd.f32 %v2047, %v2263
      %v2323 = vadd.f32 %v2048, %v2266
      %v2324 = vadd.f32 %v2049, %v2269
      %v2325 = vadd.f32 %v2050, %v2272
      %v2326 = vadd.f32 %v2051, %v2275
      %v2327 = vadd.f32 %v2052, %v2278
      %v2328 = vadd.f32 %v2053, %v2281
      %v2329 = vadd.f32 %v2054, %v2284
      %v2330 = vadd.f32 %v2055, %v2287
      %v2331 = vadd.f32 %v2056, %v2290
      %v2332 = vadd.f32 %v2057, %v2293
      %v2333 = vadd.f32 %v2058, %v2296
      %v2334 = vadd.f32 %v2059, %v2299
      %v2335 = vadd.f32 %v2060, %v2302
      %v2336 = vld [vmem:[%s1785 + $0x2] sm:$0xff]
      %v2337 = vld [vmem:[%s1785 + $0xa] sm:$0xff]
      %v2338 = vld [vmem:[%s1785 + $0x1a] sm:$0xff]
      %v2339 = vld [vmem:[%s1785 + $0x22] sm:$0xff]
      %v2340 = vld [vmem:[%s1785 + $0x32] sm:$0xff]
      %v2341 = vld [vmem:[%s1785 + $0x3a] sm:$0xff]
      %v2342 = vld [vmem:[%s1785 + $0x4a] sm:$0xff]
      %v2343 = vld [vmem:[%s1785 + $0x52] sm:$0xff]
      %v2344 = vld [vmem:[%s1785 + $0x62] sm:$0xff]
      %v2345 = vld [vmem:[%s1785 + $0x6a] sm:$0xff]
      %v2346 = vld [vmem:[%s1785 + $0x7a] sm:$0xff]
      %v2347 = vld [vmem:[%s1785 + $0x82] sm:$0xff]
      %v2348 = vld [vmem:[%s1785 + $0x92] sm:$0xff]
      %v2349 = vld [vmem:[%s1785 + $0x9a] sm:$0xff]
      %v2350 = vld [vmem:[%s1785 + $0xaa] sm:$0xff]
      %v2351 = vld [vmem:[%s1785 + $0xb2] sm:$0xff]
      %v2352 = vld [vmem:[%s1785 + $0xc2] sm:$0xff]
      %v2353 = vld [vmem:[%s1785 + $0xca] sm:$0xff]
      %v2354 = vld [vmem:[%s1785 + $0xda] sm:$0xff]
      %v2355 = vld [vmem:[%s1785 + $0xe2] sm:$0xff]
      %v2356 = vld [vmem:[%s1785 + $0xf2] sm:$0xff]
      %v2357 = vld [vmem:[%s1785 + $0xfa] sm:$0xff]
      %v2358 = vld [vmem:[%s1785 + $0x10a] sm:$0xff]
      %v2359 = vld [vmem:[%s1785 + $0x112] sm:$0xff]
      %v2360 = vld [vmem:[%s1785 + $0x122] sm:$0xff]
      %v2361 = vld [vmem:[%s1785 + $0x12a] sm:$0xff]
      %v2362 = vld [vmem:[%s1785 + $0x13a] sm:$0xff]
      %v2363 = vld [vmem:[%s1785 + $0x142] sm:$0xff]
      %v2364 = vld [vmem:[%s1785 + $0x152] sm:$0xff]
      %v2365 = vld [vmem:[%s1785 + $0x15a] sm:$0xff]
      %v2366 = vld [vmem:[%s1785 + $0x16a] sm:$0xff]
      %v2367 = vld [vmem:[%s1785 + $0x172] sm:$0xff]
      %s2368 = scalar_lea.vmem %s1, 64
      %v2369 = vld [vmem:[%s2368] sm:$0xff]
      %v2371 = vsel %vm265, %v2336, 0
      %v2374 = vsel %vm265, %v2337, 0
      %v2377 = vsel %vm265, %v2338, 0
      %v2380 = vsel %vm265, %v2339, 0
      %v2383 = vsel %vm265, %v2340, 0
      %v2386 = vsel %vm265, %v2341, 0
      %v2389 = vsel %vm265, %v2342, 0
      %v2392 = vsel %vm265, %v2343, 0
      %v2395 = vsel %vm265, %v2344, 0
      %v2398 = vsel %vm265, %v2345, 0
      %v2401 = vsel %vm265, %v2346, 0
      %v2404 = vsel %vm265, %v2347, 0
      %v2407 = vsel %vm265, %v2348, 0
      %v2410 = vsel %vm265, %v2349, 0
      %v2413 = vsel %vm265, %v2350, 0
      %v2416 = vsel %vm265, %v2351, 0
      %v2419 = vsel %vm265, %v2352, 0
      %v2422 = vsel %vm265, %v2353, 0
      %v2425 = vsel %vm265, %v2354, 0
      %v2428 = vsel %vm265, %v2355, 0
      %v2431 = vsel %vm265, %v2356, 0
      %v2434 = vsel %vm265, %v2357, 0
      %v2437 = vsel %vm265, %v2358, 0
      %v2440 = vsel %vm265, %v2359, 0
      %v2443 = vsel %vm265, %v2360, 0
      %v2446 = vsel %vm265, %v2361, 0
      %v2449 = vsel %vm265, %v2362, 0
      %v2452 = vsel %vm265, %v2363, 0
      %v2455 = vsel %vm265, %v2364, 0
      %v2458 = vsel %vm265, %v2365, 0
      %v2461 = vsel %vm265, %v2366, 0
      %v2464 = vsel %vm265, %v2367, 0
      %2466 = vmatpush.msra.mxu0 0.0
      %2467 = vmatpush.msra.mxu0 0.0
      %2468 = vmatpush.msra.mxu0 0.0
      %2469 = vmatpush.msra.mxu0 0.0
      %2470 = vmatpush.msra.mxu0 0.0
      %2471 = vmatpush.msra.mxu0 0.0
      %2472 = vmatpush.msra.mxu0 0.0
      %2473 = vmatpush.msra.mxu0 0.0
      %2474 = vmatpush.msra.mxu0 0.0
      %2475 = vmatpush.msra.mxu0 0.0
      %2476 = vmatpush.msra.mxu0 0.0
      %2477 = vmatpush.msra.mxu0 0.0
      %2478 = vmatpush.msra.mxu0 0.0
      %2479 = vmatpush.msra.mxu0 0.0
      %2480 = vmatpush.msra.mxu0 0.0
      %2481 = vmatpush.msra.mxu0 %v2369
      %2482 = vmatmul.f32.gmra.mxu0 %v2371
      %v2483 = vpop.f32.mrf.mxu0
      %v2484 = vadd.f32 0.0, %v2483
      %2485 = vmatmul.f32.gmra.mxu0 %v2374
      %v2486 = vpop.f32.mrf.mxu0
      %v2487 = vadd.f32 0.0, %v2486
      %2488 = vmatmul.f32.gmra.mxu0 %v2377
      %v2489 = vpop.f32.mrf.mxu0
      %v2490 = vadd.f32 0.0, %v2489
      %2491 = vmatmul.f32.gmra.mxu0 %v2380
      %v2492 = vpop.f32.mrf.mxu0
      %v2493 = vadd.f32 0.0, %v2492
      %2494 = vmatmul.f32.gmra.mxu0 %v2383
      %v2495 = vpop.f32.mrf.mxu0
      %v2496 = vadd.f32 0.0, %v2495
      %2497 = vmatmul.f32.gmra.mxu0 %v2386
      %v2498 = vpop.f32.mrf.mxu0
      %v2499 = vadd.f32 0.0, %v2498
      %2500 = vmatmul.f32.gmra.mxu0 %v2389
      %v2501 = vpop.f32.mrf.mxu0
      %v2502 = vadd.f32 0.0, %v2501
      %2503 = vmatmul.f32.gmra.mxu0 %v2392
      %v2504 = vpop.f32.mrf.mxu0
      %v2505 = vadd.f32 0.0, %v2504
      %2506 = vmatmul.f32.gmra.mxu0 %v2395
      %v2507 = vpop.f32.mrf.mxu0
      %v2508 = vadd.f32 0.0, %v2507
      %2509 = vmatmul.f32.gmra.mxu0 %v2398
      %v2510 = vpop.f32.mrf.mxu0
      %v2511 = vadd.f32 0.0, %v2510
      %2512 = vmatmul.f32.gmra.mxu0 %v2401
      %v2513 = vpop.f32.mrf.mxu0
      %v2514 = vadd.f32 0.0, %v2513
      %2515 = vmatmul.f32.gmra.mxu0 %v2404
      %v2516 = vpop.f32.mrf.mxu0
      %v2517 = vadd.f32 0.0, %v2516
      %2518 = vmatmul.f32.gmra.mxu0 %v2407
      %v2519 = vpop.f32.mrf.mxu0
      %v2520 = vadd.f32 0.0, %v2519
      %2521 = vmatmul.f32.gmra.mxu0 %v2410
      %v2522 = vpop.f32.mrf.mxu0
      %v2523 = vadd.f32 0.0, %v2522
      %2524 = vmatmul.f32.gmra.mxu0 %v2413
      %v2525 = vpop.f32.mrf.mxu0
      %v2526 = vadd.f32 0.0, %v2525
      %2527 = vmatmul.f32.gmra.mxu0 %v2416
      %v2528 = vpop.f32.mrf.mxu0
      %v2529 = vadd.f32 0.0, %v2528
      %2530 = vmatmul.f32.gmra.mxu0 %v2419
      %v2531 = vpop.f32.mrf.mxu0
      %v2532 = vadd.f32 0.0, %v2531
      %2533 = vmatmul.f32.gmra.mxu0 %v2422
      %v2534 = vpop.f32.mrf.mxu0
      %v2535 = vadd.f32 0.0, %v2534
      %2536 = vmatmul.f32.gmra.mxu0 %v2425
      %v2537 = vpop.f32.mrf.mxu0
      %v2538 = vadd.f32 0.0, %v2537
      %2539 = vmatmul.f32.gmra.mxu0 %v2428
      %v2540 = vpop.f32.mrf.mxu0
      %v2541 = vadd.f32 0.0, %v2540
      %2542 = vmatmul.f32.gmra.mxu0 %v2431
      %v2543 = vpop.f32.mrf.mxu0
      %v2544 = vadd.f32 0.0, %v2543
      %2545 = vmatmul.f32.gmra.mxu0 %v2434
      %v2546 = vpop.f32.mrf.mxu0
      %v2547 = vadd.f32 0.0, %v2546
      %2548 = vmatmul.f32.gmra.mxu0 %v2437
      %v2549 = vpop.f32.mrf.mxu0
      %v2550 = vadd.f32 0.0, %v2549
      %2551 = vmatmul.f32.gmra.mxu0 %v2440
      %v2552 = vpop.f32.mrf.mxu0
      %v2553 = vadd.f32 0.0, %v2552
      %2554 = vmatmul.f32.gmra.mxu0 %v2443
      %v2555 = vpop.f32.mrf.mxu0
      %v2556 = vadd.f32 0.0, %v2555
      %2557 = vmatmul.f32.gmra.mxu0 %v2446
      %v2558 = vpop.f32.mrf.mxu0
      %v2559 = vadd.f32 0.0, %v2558
      %2560 = vmatmul.f32.gmra.mxu0 %v2449
      %v2561 = vpop.f32.mrf.mxu0
      %v2562 = vadd.f32 0.0, %v2561
      %2563 = vmatmul.f32.gmra.mxu0 %v2452
      %v2564 = vpop.f32.mrf.mxu0
      %v2565 = vadd.f32 0.0, %v2564
      %2566 = vmatmul.f32.gmra.mxu0 %v2455
      %v2567 = vpop.f32.mrf.mxu0
      %v2568 = vadd.f32 0.0, %v2567
      %2569 = vmatmul.f32.gmra.mxu0 %v2458
      %v2570 = vpop.f32.mrf.mxu0
      %v2571 = vadd.f32 0.0, %v2570
      %2572 = vmatmul.f32.gmra.mxu0 %v2461
      %v2573 = vpop.f32.mrf.mxu0
      %v2574 = vadd.f32 0.0, %v2573
      %2575 = vmatmul.f32.gmra.mxu0 %v2464
      %v2576 = vpop.f32.mrf.mxu0
      %v2577 = vadd.f32 0.0, %v2576
      %2578 = vdwg.mxu0
      %v2579 = vadd.f32 %v2304, %v2484
      %v2580 = vadd.f32 %v2305, %v2487
      %v2581 = vadd.f32 %v2306, %v2490
      %v2582 = vadd.f32 %v2307, %v2493
      %v2583 = vadd.f32 %v2308, %v2496
      %v2584 = vadd.f32 %v2309, %v2499
      %v2585 = vadd.f32 %v2310, %v2502
      %v2586 = vadd.f32 %v2311, %v2505
      %v2587 = vadd.f32 %v2312, %v2508
      %v2588 = vadd.f32 %v2313, %v2511
      %v2589 = vadd.f32 %v2314, %v2514
      %v2590 = vadd.f32 %v2315, %v2517
      %v2591 = vadd.f32 %v2316, %v2520
      %v2592 = vadd.f32 %v2317, %v2523
      %v2593 = vadd.f32 %v2318, %v2526
      %v2594 = vadd.f32 %v2319, %v2529
      %v2595 = vadd.f32 %v2320, %v2532
      %v2596 = vadd.f32 %v2321, %v2535
      %v2597 = vadd.f32 %v2322, %v2538
      %v2598 = vadd.f32 %v2323, %v2541
      %v2599 = vadd.f32 %v2324, %v2544
      %v2600 = vadd.f32 %v2325, %v2547
      %v2601 = vadd.f32 %v2326, %v2550
      %v2602 = vadd.f32 %v2327, %v2553
      %v2603 = vadd.f32 %v2328, %v2556
      %v2604 = vadd.f32 %v2329, %v2559
      %v2605 = vadd.f32 %v2330, %v2562
      %v2606 = vadd.f32 %v2331, %v2565
      %v2607 = vadd.f32 %v2332, %v2568
      %v2608 = vadd.f32 %v2333, %v2571
      %v2609 = vadd.f32 %v2334, %v2574
      %v2610 = vadd.f32 %v2335, %v2577
      %v2611 = vld [vmem:[%s2] sm:$0x1]
      %v2613 = vperm.slane %v2611, 0
      %v2615 = vadd.f32 %v2579, %v2613
      %v2616 = vadd.f32 %v2580, %v2613
      %v2617 = vadd.f32 %v2581, %v2613
      %v2618 = vadd.f32 %v2582, %v2613
      %v2619 = vadd.f32 %v2583, %v2613
      %v2620 = vadd.f32 %v2584, %v2613
      %v2621 = vadd.f32 %v2585, %v2613
      %v2622 = vadd.f32 %v2586, %v2613
      %v2623 = vadd.f32 %v2587, %v2613
      %v2624 = vadd.f32 %v2588, %v2613
      %v2625 = vadd.f32 %v2589, %v2613
      %v2626 = vadd.f32 %v2590, %v2613
      %v2627 = vadd.f32 %v2591, %v2613
      %v2628 = vadd.f32 %v2592, %v2613
      %v2629 = vadd.f32 %v2593, %v2613
      %v2630 = vadd.f32 %v2594, %v2613
      %v2631 = vadd.f32 %v2595, %v2613
      %v2632 = vadd.f32 %v2596, %v2613
      %v2633 = vadd.f32 %v2597, %v2613
      %v2634 = vadd.f32 %v2598, %v2613
      %v2635 = vadd.f32 %v2599, %v2613
      %v2636 = vadd.f32 %v2600, %v2613
      %v2637 = vadd.f32 %v2601, %v2613
      %v2638 = vadd.f32 %v2602, %v2613
      %v2639 = vadd.f32 %v2603, %v2613
      %v2640 = vadd.f32 %v2604, %v2613
      %v2641 = vadd.f32 %v2605, %v2613
      %v2642 = vadd.f32 %v2606, %v2613
      %v2643 = vadd.f32 %v2607, %v2613
      %v2644 = vadd.f32 %v2608, %v2613
      %v2645 = vadd.f32 %v2609, %v2613
      %v2646 = vadd.f32 %v2610, %v2613
      %v2647 = vmul.f32 %v2615, %v2615
      %v2648 = vmul.f32 %v2616, %v2616
      %v2649 = vmul.f32 %v2617, %v2617
      %v2650 = vmul.f32 %v2618, %v2618
      %v2651 = vmul.f32 %v2619, %v2619
      %v2652 = vmul.f32 %v2620, %v2620
      %v2653 = vmul.f32 %v2621, %v2621
      %v2654 = vmul.f32 %v2622, %v2622
      %v2655 = vmul.f32 %v2623, %v2623
      %v2656 = vmul.f32 %v2624, %v2624
      %v2657 = vmul.f32 %v2625, %v2625
      %v2658 = vmul.f32 %v2626, %v2626
      %v2659 = vmul.f32 %v2627, %v2627
      %v2660 = vmul.f32 %v2628, %v2628
      %v2661 = vmul.f32 %v2629, %v2629
      %v2662 = vmul.f32 %v2630, %v2630
      %v2663 = vmul.f32 %v2631, %v2631
      %v2664 = vmul.f32 %v2632, %v2632
      %v2665 = vmul.f32 %v2633, %v2633
      %v2666 = vmul.f32 %v2634, %v2634
      %v2667 = vmul.f32 %v2635, %v2635
      %v2668 = vmul.f32 %v2636, %v2636
      %v2669 = vmul.f32 %v2637, %v2637
      %v2670 = vmul.f32 %v2638, %v2638
      %v2671 = vmul.f32 %v2639, %v2639
      %v2672 = vmul.f32 %v2640, %v2640
      %v2673 = vmul.f32 %v2641, %v2641
      %v2674 = vmul.f32 %v2642, %v2642
      %v2675 = vmul.f32 %v2643, %v2643
      %v2676 = vmul.f32 %v2644, %v2644
      %v2677 = vmul.f32 %v2645, %v2645
      %v2678 = vmul.f32 %v2646, %v2646
      %2711 = vrot.lane.b32.xlu0 %v2647, 120
      %v2712 = vpop.permute.xlu0 %2711
      %2713 = vrot.lane.b32.xlu0 %v2648, 120
      %v2714 = vpop.permute.xlu0 %2713
      %2715 = vrot.lane.b32.xlu0 %v2649, 120
      %v2716 = vpop.permute.xlu0 %2715
      %2717 = vrot.lane.b32.xlu0 %v2650, 120
      %v2718 = vpop.permute.xlu0 %2717
      %2719 = vrot.lane.b32.xlu0 %v2651, 120
      %v2720 = vpop.permute.xlu0 %2719
      %2721 = vrot.lane.b32.xlu0 %v2652, 120
      %v2722 = vpop.permute.xlu0 %2721
      %2723 = vrot.lane.b32.xlu0 %v2653, 120
      %v2724 = vpop.permute.xlu0 %2723
      %2725 = vrot.lane.b32.xlu0 %v2654, 120
      %v2726 = vpop.permute.xlu0 %2725
      %2727 = vrot.lane.b32.xlu0 %v2655, 120
      %v2728 = vpop.permute.xlu0 %2727
      %2729 = vrot.lane.b32.xlu0 %v2656, 120
      %v2730 = vpop.permute.xlu0 %2729
      %2731 = vrot.lane.b32.xlu0 %v2657, 120
      %v2732 = vpop.permute.xlu0 %2731
      %2733 = vrot.lane.b32.xlu0 %v2658, 120
      %v2734 = vpop.permute.xlu0 %2733
      %2735 = vrot.lane.b32.xlu0 %v2659, 120
      %v2736 = vpop.permute.xlu0 %2735
      %2737 = vrot.lane.b32.xlu0 %v2660, 120
      %v2738 = vpop.permute.xlu0 %2737
      %2739 = vrot.lane.b32.xlu0 %v2661, 120
      %v2740 = vpop.permute.xlu0 %2739
      %2741 = vrot.lane.b32.xlu0 %v2662, 120
      %v2742 = vpop.permute.xlu0 %2741
      %2743 = vrot.lane.b32.xlu0 %v2663, 120
      %v2744 = vpop.permute.xlu0 %2743
      %2745 = vrot.lane.b32.xlu0 %v2664, 120
      %v2746 = vpop.permute.xlu0 %2745
      %2747 = vrot.lane.b32.xlu0 %v2665, 120
      %v2748 = vpop.permute.xlu0 %2747
      %2749 = vrot.lane.b32.xlu0 %v2666, 120
      %v2750 = vpop.permute.xlu0 %2749
      %2751 = vrot.lane.b32.xlu0 %v2667, 120
      %v2752 = vpop.permute.xlu0 %2751
      %2753 = vrot.lane.b32.xlu0 %v2668, 120
      %v2754 = vpop.permute.xlu0 %2753
      %2755 = vrot.lane.b32.xlu0 %v2669, 120
      %v2756 = vpop.permute.xlu0 %2755
      %2757 = vrot.lane.b32.xlu0 %v2670, 120
      %v2758 = vpop.permute.xlu0 %2757
      %2759 = vrot.lane.b32.xlu0 %v2671, 120
      %v2760 = vpop.permute.xlu0 %2759
      %2761 = vrot.lane.b32.xlu0 %v2672, 120
      %v2762 = vpop.permute.xlu0 %2761
      %2763 = vrot.lane.b32.xlu0 %v2673, 120
      %v2764 = vpop.permute.xlu0 %2763
      %2765 = vrot.lane.b32.xlu0 %v2674, 120
      %v2766 = vpop.permute.xlu0 %2765
      %2767 = vrot.lane.b32.xlu0 %v2675, 120
      %v2768 = vpop.permute.xlu0 %2767
      %2769 = vrot.lane.b32.xlu0 %v2676, 120
      %v2770 = vpop.permute.xlu0 %2769
      %2771 = vrot.lane.b32.xlu0 %v2677, 120
      %v2772 = vpop.permute.xlu0 %2771
      %2773 = vrot.lane.b32.xlu0 %v2678, 120
      %v2774 = vpop.permute.xlu0 %2773
      %v2807 = vadd.f32 %v2647, %v2712
      %v2808 = vadd.f32 %v2648, %v2714
      %v2809 = vadd.f32 %v2649, %v2716
      %v2810 = vadd.f32 %v2650, %v2718
      %v2811 = vadd.f32 %v2651, %v2720
      %v2812 = vadd.f32 %v2652, %v2722
      %v2813 = vadd.f32 %v2653, %v2724
      %v2814 = vadd.f32 %v2654, %v2726
      %v2815 = vadd.f32 %v2655, %v2728
      %v2816 = vadd.f32 %v2656, %v2730
      %v2817 = vadd.f32 %v2657, %v2732
      %v2818 = vadd.f32 %v2658, %v2734
      %v2819 = vadd.f32 %v2659, %v2736
      %v2820 = vadd.f32 %v2660, %v2738
      %v2821 = vadd.f32 %v2661, %v2740
      %v2822 = vadd.f32 %v2662, %v2742
      %v2823 = vadd.f32 %v2663, %v2744
      %v2824 = vadd.f32 %v2664, %v2746
      %v2825 = vadd.f32 %v2665, %v2748
      %v2826 = vadd.f32 %v2666, %v2750
      %v2827 = vadd.f32 %v2667, %v2752
      %v2828 = vadd.f32 %v2668, %v2754
      %v2829 = vadd.f32 %v2669, %v2756
      %v2830 = vadd.f32 %v2670, %v2758
      %v2831 = vadd.f32 %v2671, %v2760
      %v2832 = vadd.f32 %v2672, %v2762
      %v2833 = vadd.f32 %v2673, %v2764
      %v2834 = vadd.f32 %v2674, %v2766
      %v2835 = vadd.f32 %v2675, %v2768
      %v2836 = vadd.f32 %v2676, %v2770
      %v2837 = vadd.f32 %v2677, %v2772
      %v2838 = vadd.f32 %v2678, %v2774
      %v2839 = vrsqrt.pop %v2807
      %v2840 = vmul.f32 %v2839, %v2807
      %v2841 = vmul.f32 %v2840, %v2839
      %v2842 = vmul.f32 0.5, %v2841
      %v2843 = vsub.f32 1.5, %v2842
      %v2844 = vmul.f32 %v2839, %v2843
      %v2845 = vmul.f32 %v2807, %v2844
      %vm2846 = vcmp.eq.f32.partialorder %v2807, inf
      %v2847 = vsel %vm2846, %v2807, %v2845
      %vm2848 = vcmp.eq.f32.partialorder %v2807, 0.0
      %v2849 = vand.u32 %v2807, 2147483648
      %v2850 = vsel %vm2848, %v2849, %v2847
      %v2851 = vrsqrt.pop %v2808
      %v2852 = vmul.f32 %v2851, %v2808
      %v2853 = vmul.f32 %v2852, %v2851
      %v2854 = vmul.f32 0.5, %v2853
      %v2855 = vsub.f32 1.5, %v2854
      %v2856 = vmul.f32 %v2851, %v2855
      %v2857 = vmul.f32 %v2808, %v2856
      %vm2858 = vcmp.eq.f32.partialorder %v2808, inf
      %v2859 = vsel %vm2858, %v2808, %v2857
      %vm2860 = vcmp.eq.f32.partialorder %v2808, 0.0
      %v2861 = vand.u32 %v2808, 2147483648
      %v2862 = vsel %vm2860, %v2861, %v2859
      %v2863 = vrsqrt.pop %v2809
      %v2864 = vmul.f32 %v2863, %v2809
      %v2865 = vmul.f32 %v2864, %v2863
      %v2866 = vmul.f32 0.5, %v2865
      %v2867 = vsub.f32 1.5, %v2866
      %v2868 = vmul.f32 %v2863, %v2867
      %v2869 = vmul.f32 %v2809, %v2868
      %vm2870 = vcmp.eq.f32.partialorder %v2809, inf
      %v2871 = vsel %vm2870, %v2809, %v2869
      %vm2872 = vcmp.eq.f32.partialorder %v2809, 0.0
      %v2873 = vand.u32 %v2809, 2147483648
      %v2874 = vsel %vm2872, %v2873, %v2871
      %v2875 = vrsqrt.pop %v2810
      %v2876 = vmul.f32 %v2875, %v2810
      %v2877 = vmul.f32 %v2876, %v2875
      %v2878 = vmul.f32 0.5, %v2877
      %v2879 = vsub.f32 1.5, %v2878
      %v2880 = vmul.f32 %v2875, %v2879
      %v2881 = vmul.f32 %v2810, %v2880
      %vm2882 = vcmp.eq.f32.partialorder %v2810, inf
      %v2883 = vsel %vm2882, %v2810, %v2881
      %vm2884 = vcmp.eq.f32.partialorder %v2810, 0.0
      %v2885 = vand.u32 %v2810, 2147483648
      %v2886 = vsel %vm2884, %v2885, %v2883
      %v2887 = vrsqrt.pop %v2811
      %v2888 = vmul.f32 %v2887, %v2811
      %v2889 = vmul.f32 %v2888, %v2887
      %v2890 = vmul.f32 0.5, %v2889
      %v2891 = vsub.f32 1.5, %v2890
      %v2892 = vmul.f32 %v2887, %v2891
      %v2893 = vmul.f32 %v2811, %v2892
      %vm2894 = vcmp.eq.f32.partialorder %v2811, inf
      %v2895 = vsel %vm2894, %v2811, %v2893
      %vm2896 = vcmp.eq.f32.partialorder %v2811, 0.0
      %v2897 = vand.u32 %v2811, 2147483648
      %v2898 = vsel %vm2896, %v2897, %v2895
      %v2899 = vrsqrt.pop %v2812
      %v2900 = vmul.f32 %v2899, %v2812
      %v2901 = vmul.f32 %v2900, %v2899
      %v2902 = vmul.f32 0.5, %v2901
      %v2903 = vsub.f32 1.5, %v2902
      %v2904 = vmul.f32 %v2899, %v2903
      %v2905 = vmul.f32 %v2812, %v2904
      %vm2906 = vcmp.eq.f32.partialorder %v2812, inf
      %v2907 = vsel %vm2906, %v2812, %v2905
      %vm2908 = vcmp.eq.f32.partialorder %v2812, 0.0
      %v2909 = vand.u32 %v2812, 2147483648
      %v2910 = vsel %vm2908, %v2909, %v2907
      %v2911 = vrsqrt.pop %v2813
      %v2912 = vmul.f32 %v2911, %v2813
      %v2913 = vmul.f32 %v2912, %v2911
      %v2914 = vmul.f32 0.5, %v2913
      %v2915 = vsub.f32 1.5, %v2914
      %v2916 = vmul.f32 %v2911, %v2915
      %v2917 = vmul.f32 %v2813, %v2916
      %vm2918 = vcmp.eq.f32.partialorder %v2813, inf
      %v2919 = vsel %vm2918, %v2813, %v2917
      %vm2920 = vcmp.eq.f32.partialorder %v2813, 0.0
      %v2921 = vand.u32 %v2813, 2147483648
      %v2922 = vsel %vm2920, %v2921, %v2919
      %v2923 = vrsqrt.pop %v2814
      %v2924 = vmul.f32 %v2923, %v2814
      %v2925 = vmul.f32 %v2924, %v2923
      %v2926 = vmul.f32 0.5, %v2925
      %v2927 = vsub.f32 1.5, %v2926
      %v2928 = vmul.f32 %v2923, %v2927
      %v2929 = vmul.f32 %v2814, %v2928
      %vm2930 = vcmp.eq.f32.partialorder %v2814, inf
      %v2931 = vsel %vm2930, %v2814, %v2929
      %vm2932 = vcmp.eq.f32.partialorder %v2814, 0.0
      %v2933 = vand.u32 %v2814, 2147483648
      %v2934 = vsel %vm2932, %v2933, %v2931
      %v2935 = vrsqrt.pop %v2815
      %v2936 = vmul.f32 %v2935, %v2815
      %v2937 = vmul.f32 %v2936, %v2935
      %v2938 = vmul.f32 0.5, %v2937
      %v2939 = vsub.f32 1.5, %v2938
      %v2940 = vmul.f32 %v2935, %v2939
      %v2941 = vmul.f32 %v2815, %v2940
      %vm2942 = vcmp.eq.f32.partialorder %v2815, inf
      %v2943 = vsel %vm2942, %v2815, %v2941
      %vm2944 = vcmp.eq.f32.partialorder %v2815, 0.0
      %v2945 = vand.u32 %v2815, 2147483648
      %v2946 = vsel %vm2944, %v2945, %v2943
      %v2947 = vrsqrt.pop %v2816
      %v2948 = vmul.f32 %v2947, %v2816
      %v2949 = vmul.f32 %v2948, %v2947
      %v2950 = vmul.f32 0.5, %v2949
      %v2951 = vsub.f32 1.5, %v2950
      %v2952 = vmul.f32 %v2947, %v2951
      %v2953 = vmul.f32 %v2816, %v2952
      %vm2954 = vcmp.eq.f32.partialorder %v2816, inf
      %v2955 = vsel %vm2954, %v2816, %v2953
      %vm2956 = vcmp.eq.f32.partialorder %v2816, 0.0
      %v2957 = vand.u32 %v2816, 2147483648
      %v2958 = vsel %vm2956, %v2957, %v2955
      %v2959 = vrsqrt.pop %v2817
      %v2960 = vmul.f32 %v2959, %v2817
      %v2961 = vmul.f32 %v2960, %v2959
      %v2962 = vmul.f32 0.5, %v2961
      %v2963 = vsub.f32 1.5, %v2962
      %v2964 = vmul.f32 %v2959, %v2963
      %v2965 = vmul.f32 %v2817, %v2964
      %vm2966 = vcmp.eq.f32.partialorder %v2817, inf
      %v2967 = vsel %vm2966, %v2817, %v2965
      %vm2968 = vcmp.eq.f32.partialorder %v2817, 0.0
      %v2969 = vand.u32 %v2817, 2147483648
      %v2970 = vsel %vm2968, %v2969, %v2967
      %v2971 = vrsqrt.pop %v2818
      %v2972 = vmul.f32 %v2971, %v2818
      %v2973 = vmul.f32 %v2972, %v2971
      %v2974 = vmul.f32 0.5, %v2973
      %v2975 = vsub.f32 1.5, %v2974
      %v2976 = vmul.f32 %v2971, %v2975
      %v2977 = vmul.f32 %v2818, %v2976
      %vm2978 = vcmp.eq.f32.partialorder %v2818, inf
      %v2979 = vsel %vm2978, %v2818, %v2977
      %vm2980 = vcmp.eq.f32.partialorder %v2818, 0.0
      %v2981 = vand.u32 %v2818, 2147483648
      %v2982 = vsel %vm2980, %v2981, %v2979
      %v2983 = vrsqrt.pop %v2819
      %v2984 = vmul.f32 %v2983, %v2819
      %v2985 = vmul.f32 %v2984, %v2983
      %v2986 = vmul.f32 0.5, %v2985
      %v2987 = vsub.f32 1.5, %v2986
      %v2988 = vmul.f32 %v2983, %v2987
      %v2989 = vmul.f32 %v2819, %v2988
      %vm2990 = vcmp.eq.f32.partialorder %v2819, inf
      %v2991 = vsel %vm2990, %v2819, %v2989
      %vm2992 = vcmp.eq.f32.partialorder %v2819, 0.0
      %v2993 = vand.u32 %v2819, 2147483648
      %v2994 = vsel %vm2992, %v2993, %v2991
      %v2995 = vrsqrt.pop %v2820
      %v2996 = vmul.f32 %v2995, %v2820
      %v2997 = vmul.f32 %v2996, %v2995
      %v2998 = vmul.f32 0.5, %v2997
      %v2999 = vsub.f32 1.5, %v2998
      %v3000 = vmul.f32 %v2995, %v2999
      %v3001 = vmul.f32 %v2820, %v3000
      %vm3002 = vcmp.eq.f32.partialorder %v2820, inf
      %v3003 = vsel %vm3002, %v2820, %v3001
      %vm3004 = vcmp.eq.f32.partialorder %v2820, 0.0
      %v3005 = vand.u32 %v2820, 2147483648
      %v3006 = vsel %vm3004, %v3005, %v3003
      %v3007 = vrsqrt.pop %v2821
      %v3008 = vmul.f32 %v3007, %v2821
      %v3009 = vmul.f32 %v3008, %v3007
      %v3010 = vmul.f32 0.5, %v3009
      %v3011 = vsub.f32 1.5, %v3010
      %v3012 = vmul.f32 %v3007, %v3011
      %v3013 = vmul.f32 %v2821, %v3012
      %vm3014 = vcmp.eq.f32.partialorder %v2821, inf
      %v3015 = vsel %vm3014, %v2821, %v3013
      %vm3016 = vcmp.eq.f32.partialorder %v2821, 0.0
      %v3017 = vand.u32 %v2821, 2147483648
      %v3018 = vsel %vm3016, %v3017, %v3015
      %v3019 = vrsqrt.pop %v2822
      %v3020 = vmul.f32 %v3019, %v2822
      %v3021 = vmul.f32 %v3020, %v3019
      %v3022 = vmul.f32 0.5, %v3021
      %v3023 = vsub.f32 1.5, %v3022
      %v3024 = vmul.f32 %v3019, %v3023
      %v3025 = vmul.f32 %v2822, %v3024
      %vm3026 = vcmp.eq.f32.partialorder %v2822, inf
      %v3027 = vsel %vm3026, %v2822, %v3025
      %vm3028 = vcmp.eq.f32.partialorder %v2822, 0.0
      %v3029 = vand.u32 %v2822, 2147483648
      %v3030 = vsel %vm3028, %v3029, %v3027
      %v3031 = vrsqrt.pop %v2823
      %v3032 = vmul.f32 %v3031, %v2823
      %v3033 = vmul.f32 %v3032, %v3031
      %v3034 = vmul.f32 0.5, %v3033
      %v3035 = vsub.f32 1.5, %v3034
      %v3036 = vmul.f32 %v3031, %v3035
      %v3037 = vmul.f32 %v2823, %v3036
      %vm3038 = vcmp.eq.f32.partialorder %v2823, inf
      %v3039 = vsel %vm3038, %v2823, %v3037
      %vm3040 = vcmp.eq.f32.partialorder %v2823, 0.0
      %v3041 = vand.u32 %v2823, 2147483648
      %v3042 = vsel %vm3040, %v3041, %v3039
      %v3043 = vrsqrt.pop %v2824
      %v3044 = vmul.f32 %v3043, %v2824
      %v3045 = vmul.f32 %v3044, %v3043
      %v3046 = vmul.f32 0.5, %v3045
      %v3047 = vsub.f32 1.5, %v3046
      %v3048 = vmul.f32 %v3043, %v3047
      %v3049 = vmul.f32 %v2824, %v3048
      %vm3050 = vcmp.eq.f32.partialorder %v2824, inf
      %v3051 = vsel %vm3050, %v2824, %v3049
      %vm3052 = vcmp.eq.f32.partialorder %v2824, 0.0
      %v3053 = vand.u32 %v2824, 2147483648
      %v3054 = vsel %vm3052, %v3053, %v3051
      %v3055 = vrsqrt.pop %v2825
      %v3056 = vmul.f32 %v3055, %v2825
      %v3057 = vmul.f32 %v3056, %v3055
      %v3058 = vmul.f32 0.5, %v3057
      %v3059 = vsub.f32 1.5, %v3058
      %v3060 = vmul.f32 %v3055, %v3059
      %v3061 = vmul.f32 %v2825, %v3060
      %vm3062 = vcmp.eq.f32.partialorder %v2825, inf
      %v3063 = vsel %vm3062, %v2825, %v3061
      %vm3064 = vcmp.eq.f32.partialorder %v2825, 0.0
      %v3065 = vand.u32 %v2825, 2147483648
      %v3066 = vsel %vm3064, %v3065, %v3063
      %v3067 = vrsqrt.pop %v2826
      %v3068 = vmul.f32 %v3067, %v2826
      %v3069 = vmul.f32 %v3068, %v3067
      %v3070 = vmul.f32 0.5, %v3069
      %v3071 = vsub.f32 1.5, %v3070
      %v3072 = vmul.f32 %v3067, %v3071
      %v3073 = vmul.f32 %v2826, %v3072
      %vm3074 = vcmp.eq.f32.partialorder %v2826, inf
      %v3075 = vsel %vm3074, %v2826, %v3073
      %vm3076 = vcmp.eq.f32.partialorder %v2826, 0.0
      %v3077 = vand.u32 %v2826, 2147483648
      %v3078 = vsel %vm3076, %v3077, %v3075
      %v3079 = vrsqrt.pop %v2827
      %v3080 = vmul.f32 %v3079, %v2827
      %v3081 = vmul.f32 %v3080, %v3079
      %v3082 = vmul.f32 0.5, %v3081
      %v3083 = vsub.f32 1.5, %v3082
      %v3084 = vmul.f32 %v3079, %v3083
      %v3085 = vmul.f32 %v2827, %v3084
      %vm3086 = vcmp.eq.f32.partialorder %v2827, inf
      %v3087 = vsel %vm3086, %v2827, %v3085
      %vm3088 = vcmp.eq.f32.partialorder %v2827, 0.0
      %v3089 = vand.u32 %v2827, 2147483648
      %v3090 = vsel %vm3088, %v3089, %v3087
      %v3091 = vrsqrt.pop %v2828
      %v3092 = vmul.f32 %v3091, %v2828
      %v3093 = vmul.f32 %v3092, %v3091
      %v3094 = vmul.f32 0.5, %v3093
      %v3095 = vsub.f32 1.5, %v3094
      %v3096 = vmul.f32 %v3091, %v3095
      %v3097 = vmul.f32 %v2828, %v3096
      %vm3098 = vcmp.eq.f32.partialorder %v2828, inf
      %v3099 = vsel %vm3098, %v2828, %v3097
      %vm3100 = vcmp.eq.f32.partialorder %v2828, 0.0
      %v3101 = vand.u32 %v2828, 2147483648
      %v3102 = vsel %vm3100, %v3101, %v3099
      %v3103 = vrsqrt.pop %v2829
      %v3104 = vmul.f32 %v3103, %v2829
      %v3105 = vmul.f32 %v3104, %v3103
      %v3106 = vmul.f32 0.5, %v3105
      %v3107 = vsub.f32 1.5, %v3106
      %v3108 = vmul.f32 %v3103, %v3107
      %v3109 = vmul.f32 %v2829, %v3108
      %vm3110 = vcmp.eq.f32.partialorder %v2829, inf
      %v3111 = vsel %vm3110, %v2829, %v3109
      %vm3112 = vcmp.eq.f32.partialorder %v2829, 0.0
      %v3113 = vand.u32 %v2829, 2147483648
      %v3114 = vsel %vm3112, %v3113, %v3111
      %v3115 = vrsqrt.pop %v2830
      %v3116 = vmul.f32 %v3115, %v2830
      %v3117 = vmul.f32 %v3116, %v3115
      %v3118 = vmul.f32 0.5, %v3117
      %v3119 = vsub.f32 1.5, %v3118
      %v3120 = vmul.f32 %v3115, %v3119
      %v3121 = vmul.f32 %v2830, %v3120
      %vm3122 = vcmp.eq.f32.partialorder %v2830, inf
      %v3123 = vsel %vm3122, %v2830, %v3121
      %vm3124 = vcmp.eq.f32.partialorder %v2830, 0.0
      %v3125 = vand.u32 %v2830, 2147483648
      %v3126 = vsel %vm3124, %v3125, %v3123
      %v3127 = vrsqrt.pop %v2831
      %v3128 = vmul.f32 %v3127, %v2831
      %v3129 = vmul.f32 %v3128, %v3127
      %v3130 = vmul.f32 0.5, %v3129
      %v3131 = vsub.f32 1.5, %v3130
      %v3132 = vmul.f32 %v3127, %v3131
      %v3133 = vmul.f32 %v2831, %v3132
      %vm3134 = vcmp.eq.f32.partialorder %v2831, inf
      %v3135 = vsel %vm3134, %v2831, %v3133
      %vm3136 = vcmp.eq.f32.partialorder %v2831, 0.0
      %v3137 = vand.u32 %v2831, 2147483648
      %v3138 = vsel %vm3136, %v3137, %v3135
      %v3139 = vrsqrt.pop %v2832
      %v3140 = vmul.f32 %v3139, %v2832
      %v3141 = vmul.f32 %v3140, %v3139
      %v3142 = vmul.f32 0.5, %v3141
      %v3143 = vsub.f32 1.5, %v3142
      %v3144 = vmul.f32 %v3139, %v3143
      %v3145 = vmul.f32 %v2832, %v3144
      %vm3146 = vcmp.eq.f32.partialorder %v2832, inf
      %v3147 = vsel %vm3146, %v2832, %v3145
      %vm3148 = vcmp.eq.f32.partialorder %v2832, 0.0
      %v3149 = vand.u32 %v2832, 2147483648
      %v3150 = vsel %vm3148, %v3149, %v3147
      %v3151 = vrsqrt.pop %v2833
      %v3152 = vmul.f32 %v3151, %v2833
      %v3153 = vmul.f32 %v3152, %v3151
      %v3154 = vmul.f32 0.5, %v3153
      %v3155 = vsub.f32 1.5, %v3154
      %v3156 = vmul.f32 %v3151, %v3155
      %v3157 = vmul.f32 %v2833, %v3156
      %vm3158 = vcmp.eq.f32.partialorder %v2833, inf
      %v3159 = vsel %vm3158, %v2833, %v3157
      %vm3160 = vcmp.eq.f32.partialorder %v2833, 0.0
      %v3161 = vand.u32 %v2833, 2147483648
      %v3162 = vsel %vm3160, %v3161, %v3159
      %v3163 = vrsqrt.pop %v2834
      %v3164 = vmul.f32 %v3163, %v2834
      %v3165 = vmul.f32 %v3164, %v3163
      %v3166 = vmul.f32 0.5, %v3165
      %v3167 = vsub.f32 1.5, %v3166
      %v3168 = vmul.f32 %v3163, %v3167
      %v3169 = vmul.f32 %v2834, %v3168
      %vm3170 = vcmp.eq.f32.partialorder %v2834, inf
      %v3171 = vsel %vm3170, %v2834, %v3169
      %vm3172 = vcmp.eq.f32.partialorder %v2834, 0.0
      %v3173 = vand.u32 %v2834, 2147483648
      %v3174 = vsel %vm3172, %v3173, %v3171
      %v3175 = vrsqrt.pop %v2835
      %v3176 = vmul.f32 %v3175, %v2835
      %v3177 = vmul.f32 %v3176, %v3175
      %v3178 = vmul.f32 0.5, %v3177
      %v3179 = vsub.f32 1.5, %v3178
      %v3180 = vmul.f32 %v3175, %v3179
      %v3181 = vmul.f32 %v2835, %v3180
      %vm3182 = vcmp.eq.f32.partialorder %v2835, inf
      %v3183 = vsel %vm3182, %v2835, %v3181
      %vm3184 = vcmp.eq.f32.partialorder %v2835, 0.0
      %v3185 = vand.u32 %v2835, 2147483648
      %v3186 = vsel %vm3184, %v3185, %v3183
      %v3187 = vrsqrt.pop %v2836
      %v3188 = vmul.f32 %v3187, %v2836
      %v3189 = vmul.f32 %v3188, %v3187
      %v3190 = vmul.f32 0.5, %v3189
      %v3191 = vsub.f32 1.5, %v3190
      %v3192 = vmul.f32 %v3187, %v3191
      %v3193 = vmul.f32 %v2836, %v3192
      %vm3194 = vcmp.eq.f32.partialorder %v2836, inf
      %v3195 = vsel %vm3194, %v2836, %v3193
      %vm3196 = vcmp.eq.f32.partialorder %v2836, 0.0
      %v3197 = vand.u32 %v2836, 2147483648
      %v3198 = vsel %vm3196, %v3197, %v3195
      %v3199 = vrsqrt.pop %v2837
      %v3200 = vmul.f32 %v3199, %v2837
      %v3201 = vmul.f32 %v3200, %v3199
      %v3202 = vmul.f32 0.5, %v3201
      %v3203 = vsub.f32 1.5, %v3202
      %v3204 = vmul.f32 %v3199, %v3203
      %v3205 = vmul.f32 %v2837, %v3204
      %vm3206 = vcmp.eq.f32.partialorder %v2837, inf
      %v3207 = vsel %vm3206, %v2837, %v3205
      %vm3208 = vcmp.eq.f32.partialorder %v2837, 0.0
      %v3209 = vand.u32 %v2837, 2147483648
      %v3210 = vsel %vm3208, %v3209, %v3207
      %v3211 = vrsqrt.pop %v2838
      %v3212 = vmul.f32 %v3211, %v2838
      %v3213 = vmul.f32 %v3212, %v3211
      %v3214 = vmul.f32 0.5, %v3213
      %v3215 = vsub.f32 1.5, %v3214
      %v3216 = vmul.f32 %v3211, %v3215
      %v3217 = vmul.f32 %v2838, %v3216
      %vm3218 = vcmp.eq.f32.partialorder %v2838, inf
      %v3219 = vsel %vm3218, %v2838, %v3217
      %vm3220 = vcmp.eq.f32.partialorder %v2838, 0.0
      %v3221 = vand.u32 %v2838, 2147483648
      %v3222 = vsel %vm3220, %v3221, %v3219
      %v3223 = vld [vmem:[%s3] sm:$0x1]
      %v3225 = vperm.slane %v3223, 0
      %v3227 = vadd.f32 %v2850, %v3225
      %v3228 = vadd.f32 %v2862, %v3225
      %v3229 = vadd.f32 %v2874, %v3225
      %v3230 = vadd.f32 %v2886, %v3225
      %v3231 = vadd.f32 %v2898, %v3225
      %v3232 = vadd.f32 %v2910, %v3225
      %v3233 = vadd.f32 %v2922, %v3225
      %v3234 = vadd.f32 %v2934, %v3225
      %v3235 = vadd.f32 %v2946, %v3225
      %v3236 = vadd.f32 %v2958, %v3225
      %v3237 = vadd.f32 %v2970, %v3225
      %v3238 = vadd.f32 %v2982, %v3225
      %v3239 = vadd.f32 %v2994, %v3225
      %v3240 = vadd.f32 %v3006, %v3225
      %v3241 = vadd.f32 %v3018, %v3225
      %v3242 = vadd.f32 %v3030, %v3225
      %v3243 = vadd.f32 %v3042, %v3225
      %v3244 = vadd.f32 %v3054, %v3225
      %v3245 = vadd.f32 %v3066, %v3225
      %v3246 = vadd.f32 %v3078, %v3225
      %v3247 = vadd.f32 %v3090, %v3225
      %v3248 = vadd.f32 %v3102, %v3225
      %v3249 = vadd.f32 %v3114, %v3225
      %v3250 = vadd.f32 %v3126, %v3225
      %v3251 = vadd.f32 %v3138, %v3225
      %v3252 = vadd.f32 %v3150, %v3225
      %v3253 = vadd.f32 %v3162, %v3225
      %v3254 = vadd.f32 %v3174, %v3225
      %v3255 = vadd.f32 %v3186, %v3225
      %v3256 = vadd.f32 %v3198, %v3225
      %v3257 = vadd.f32 %v3210, %v3225
      %v3258 = vadd.f32 %v3222, %v3225
      %v3259 = vmax.f32 %v3227, 0.0
      %v3260 = vmax.f32 %v3228, 0.0
      %v3261 = vmax.f32 %v3229, 0.0
      %v3262 = vmax.f32 %v3230, 0.0
      %v3263 = vmax.f32 %v3231, 0.0
      %v3264 = vmax.f32 %v3232, 0.0
      %v3265 = vmax.f32 %v3233, 0.0
      %v3266 = vmax.f32 %v3234, 0.0
      %v3267 = vmax.f32 %v3235, 0.0
      %v3268 = vmax.f32 %v3236, 0.0
      %v3269 = vmax.f32 %v3237, 0.0
      %v3270 = vmax.f32 %v3238, 0.0
      %v3271 = vmax.f32 %v3239, 0.0
      %v3272 = vmax.f32 %v3240, 0.0
      %v3273 = vmax.f32 %v3241, 0.0
      %v3274 = vmax.f32 %v3242, 0.0
      %v3275 = vmax.f32 %v3243, 0.0
      %v3276 = vmax.f32 %v3244, 0.0
      %v3277 = vmax.f32 %v3245, 0.0
      %v3278 = vmax.f32 %v3246, 0.0
      %v3279 = vmax.f32 %v3247, 0.0
      %v3280 = vmax.f32 %v3248, 0.0
      %v3281 = vmax.f32 %v3249, 0.0
      %v3282 = vmax.f32 %v3250, 0.0
      %v3283 = vmax.f32 %v3251, 0.0
      %v3284 = vmax.f32 %v3252, 0.0
      %v3285 = vmax.f32 %v3253, 0.0
      %v3286 = vmax.f32 %v3254, 0.0
      %v3287 = vmax.f32 %v3255, 0.0
      %v3288 = vmax.f32 %v3256, 0.0
      %v3289 = vmax.f32 %v3257, 0.0
      %v3290 = vmax.f32 %v3258, 0.0
      %v3291 = vadd.f32 %v2850, 1e-09
      %v3292 = vadd.f32 %v2862, 1e-09
      %v3293 = vadd.f32 %v2874, 1e-09
      %v3294 = vadd.f32 %v2886, 1e-09
      %v3295 = vadd.f32 %v2898, 1e-09
      %v3296 = vadd.f32 %v2910, 1e-09
      %v3297 = vadd.f32 %v2922, 1e-09
      %v3298 = vadd.f32 %v2934, 1e-09
      %v3299 = vadd.f32 %v2946, 1e-09
      %v3300 = vadd.f32 %v2958, 1e-09
      %v3301 = vadd.f32 %v2970, 1e-09
      %v3302 = vadd.f32 %v2982, 1e-09
      %v3303 = vadd.f32 %v2994, 1e-09
      %v3304 = vadd.f32 %v3006, 1e-09
      %v3305 = vadd.f32 %v3018, 1e-09
      %v3306 = vadd.f32 %v3030, 1e-09
      %v3307 = vadd.f32 %v3042, 1e-09
      %v3308 = vadd.f32 %v3054, 1e-09
      %v3309 = vadd.f32 %v3066, 1e-09
      %v3310 = vadd.f32 %v3078, 1e-09
      %v3311 = vadd.f32 %v3090, 1e-09
      %v3312 = vadd.f32 %v3102, 1e-09
      %v3313 = vadd.f32 %v3114, 1e-09
      %v3314 = vadd.f32 %v3126, 1e-09
      %v3315 = vadd.f32 %v3138, 1e-09
      %v3316 = vadd.f32 %v3150, 1e-09
      %v3317 = vadd.f32 %v3162, 1e-09
      %v3318 = vadd.f32 %v3174, 1e-09
      %v3319 = vadd.f32 %v3186, 1e-09
      %v3320 = vadd.f32 %v3198, 1e-09
      %v3321 = vadd.f32 %v3210, 1e-09
      %v3322 = vadd.f32 %v3222, 1e-09
      %v3323 = vrcp.pop %v3291
      %v3324 = vrcp.pop %v3292
      %v3325 = vrcp.pop %v3293
      %v3326 = vrcp.pop %v3294
      %v3327 = vrcp.pop %v3295
      %v3328 = vrcp.pop %v3296
      %v3329 = vrcp.pop %v3297
      %v3330 = vrcp.pop %v3298
      %v3331 = vrcp.pop %v3299
      %v3332 = vrcp.pop %v3300
      %v3333 = vrcp.pop %v3301
      %v3334 = vrcp.pop %v3302
      %v3335 = vrcp.pop %v3303
      %v3336 = vrcp.pop %v3304
      %v3337 = vrcp.pop %v3305
      %v3338 = vrcp.pop %v3306
      %v3339 = vrcp.pop %v3307
      %v3340 = vrcp.pop %v3308
      %v3341 = vrcp.pop %v3309
      %v3342 = vrcp.pop %v3310
      %v3343 = vrcp.pop %v3311
      %v3344 = vrcp.pop %v3312
      %v3345 = vrcp.pop %v3313
      %v3346 = vrcp.pop %v3314
      %v3347 = vrcp.pop %v3315
      %v3348 = vrcp.pop %v3316
      %v3349 = vrcp.pop %v3317
      %v3350 = vrcp.pop %v3318
      %v3351 = vrcp.pop %v3319
      %v3352 = vrcp.pop %v3320
      %v3353 = vrcp.pop %v3321
      %v3354 = vrcp.pop %v3322
      %v3355 = vmul.f32 %v3259, %v3323
      %v3356 = vmul.f32 %v3260, %v3324
      %v3357 = vmul.f32 %v3261, %v3325
      %v3358 = vmul.f32 %v3262, %v3326
      %v3359 = vmul.f32 %v3263, %v3327
      %v3360 = vmul.f32 %v3264, %v3328
      %v3361 = vmul.f32 %v3265, %v3329
      %v3362 = vmul.f32 %v3266, %v3330
      %v3363 = vmul.f32 %v3267, %v3331
      %v3364 = vmul.f32 %v3268, %v3332
      %v3365 = vmul.f32 %v3269, %v3333
      %v3366 = vmul.f32 %v3270, %v3334
      %v3367 = vmul.f32 %v3271, %v3335
      %v3368 = vmul.f32 %v3272, %v3336
      %v3369 = vmul.f32 %v3273, %v3337
      %v3370 = vmul.f32 %v3274, %v3338
      %v3371 = vmul.f32 %v3275, %v3339
      %v3372 = vmul.f32 %v3276, %v3340
      %v3373 = vmul.f32 %v3277, %v3341
      %v3374 = vmul.f32 %v3278, %v3342
      %v3375 = vmul.f32 %v3279, %v3343
      %v3376 = vmul.f32 %v3280, %v3344
      %v3377 = vmul.f32 %v3281, %v3345
      %v3378 = vmul.f32 %v3282, %v3346
      %v3379 = vmul.f32 %v3283, %v3347
      %v3380 = vmul.f32 %v3284, %v3348
      %v3381 = vmul.f32 %v3285, %v3349
      %v3382 = vmul.f32 %v3286, %v3350
      %v3383 = vmul.f32 %v3287, %v3351
      %v3384 = vmul.f32 %v3288, %v3352
      %v3385 = vmul.f32 %v3289, %v3353
      %v3386 = vmul.f32 %v3290, %v3354
      %3419 = vrot.lane.b32.xlu0 %v3355, 8
      %v3420 = vpop.permute.xlu0 %3419
      %3421 = vrot.lane.b32.xlu0 %v3356, 8
      %v3422 = vpop.permute.xlu0 %3421
      %3423 = vrot.lane.b32.xlu0 %v3357, 8
      %v3424 = vpop.permute.xlu0 %3423
      %3425 = vrot.lane.b32.xlu0 %v3358, 8
      %v3426 = vpop.permute.xlu0 %3425
      %3427 = vrot.lane.b32.xlu0 %v3359, 8
      %v3428 = vpop.permute.xlu0 %3427
      %3429 = vrot.lane.b32.xlu0 %v3360, 8
      %v3430 = vpop.permute.xlu0 %3429
      %3431 = vrot.lane.b32.xlu0 %v3361, 8
      %v3432 = vpop.permute.xlu0 %3431
      %3433 = vrot.lane.b32.xlu0 %v3362, 8
      %v3434 = vpop.permute.xlu0 %3433
      %3435 = vrot.lane.b32.xlu0 %v3363, 8
      %v3436 = vpop.permute.xlu0 %3435
      %3437 = vrot.lane.b32.xlu0 %v3364, 8
      %v3438 = vpop.permute.xlu0 %3437
      %3439 = vrot.lane.b32.xlu0 %v3365, 8
      %v3440 = vpop.permute.xlu0 %3439
      %3441 = vrot.lane.b32.xlu0 %v3366, 8
      %v3442 = vpop.permute.xlu0 %3441
      %3443 = vrot.lane.b32.xlu0 %v3367, 8
      %v3444 = vpop.permute.xlu0 %3443
      %3445 = vrot.lane.b32.xlu0 %v3368, 8
      %v3446 = vpop.permute.xlu0 %3445
      %3447 = vrot.lane.b32.xlu0 %v3369, 8
      %v3448 = vpop.permute.xlu0 %3447
      %3449 = vrot.lane.b32.xlu0 %v3370, 8
      %v3450 = vpop.permute.xlu0 %3449
      %3451 = vrot.lane.b32.xlu0 %v3371, 8
      %v3452 = vpop.permute.xlu0 %3451
      %3453 = vrot.lane.b32.xlu0 %v3372, 8
      %v3454 = vpop.permute.xlu0 %3453
      %3455 = vrot.lane.b32.xlu0 %v3373, 8
      %v3456 = vpop.permute.xlu0 %3455
      %3457 = vrot.lane.b32.xlu0 %v3374, 8
      %v3458 = vpop.permute.xlu0 %3457
      %3459 = vrot.lane.b32.xlu0 %v3375, 8
      %v3460 = vpop.permute.xlu0 %3459
      %3461 = vrot.lane.b32.xlu0 %v3376, 8
      %v3462 = vpop.permute.xlu0 %3461
      %3463 = vrot.lane.b32.xlu0 %v3377, 8
      %v3464 = vpop.permute.xlu0 %3463
      %3465 = vrot.lane.b32.xlu0 %v3378, 8
      %v3466 = vpop.permute.xlu0 %3465
      %3467 = vrot.lane.b32.xlu0 %v3379, 8
      %v3468 = vpop.permute.xlu0 %3467
      %3469 = vrot.lane.b32.xlu0 %v3380, 8
      %v3470 = vpop.permute.xlu0 %3469
      %3471 = vrot.lane.b32.xlu0 %v3381, 8
      %v3472 = vpop.permute.xlu0 %3471
      %3473 = vrot.lane.b32.xlu0 %v3382, 8
      %v3474 = vpop.permute.xlu0 %3473
      %3475 = vrot.lane.b32.xlu0 %v3383, 8
      %v3476 = vpop.permute.xlu0 %3475
      %3477 = vrot.lane.b32.xlu0 %v3384, 8
      %v3478 = vpop.permute.xlu0 %3477
      %3479 = vrot.lane.b32.xlu0 %v3385, 8
      %v3480 = vpop.permute.xlu0 %3479
      %3481 = vrot.lane.b32.xlu0 %v3386, 8
      %v3482 = vpop.permute.xlu0 %3481
      %v3515 = vsel %vm265, %v3355, %v3420
      %v3516 = vsel %vm265, %v3356, %v3422
      %v3517 = vsel %vm265, %v3357, %v3424
      %v3518 = vsel %vm265, %v3358, %v3426
      %v3519 = vsel %vm265, %v3359, %v3428
      %v3520 = vsel %vm265, %v3360, %v3430
      %v3521 = vsel %vm265, %v3361, %v3432
      %v3522 = vsel %vm265, %v3362, %v3434
      %v3523 = vsel %vm265, %v3363, %v3436
      %v3524 = vsel %vm265, %v3364, %v3438
      %v3525 = vsel %vm265, %v3365, %v3440
      %v3526 = vsel %vm265, %v3366, %v3442
      %v3527 = vsel %vm265, %v3367, %v3444
      %v3528 = vsel %vm265, %v3368, %v3446
      %v3529 = vsel %vm265, %v3369, %v3448
      %v3530 = vsel %vm265, %v3370, %v3450
      %v3531 = vsel %vm265, %v3371, %v3452
      %v3532 = vsel %vm265, %v3372, %v3454
      %v3533 = vsel %vm265, %v3373, %v3456
      %v3534 = vsel %vm265, %v3374, %v3458
      %v3535 = vsel %vm265, %v3375, %v3460
      %v3536 = vsel %vm265, %v3376, %v3462
      %v3537 = vsel %vm265, %v3377, %v3464
      %v3538 = vsel %vm265, %v3378, %v3466
      %v3539 = vsel %vm265, %v3379, %v3468
      %v3540 = vsel %vm265, %v3380, %v3470
      %v3541 = vsel %vm265, %v3381, %v3472
      %v3542 = vsel %vm265, %v3382, %v3474
      %v3543 = vsel %vm265, %v3383, %v3476
      %v3544 = vsel %vm265, %v3384, %v3478
      %v3545 = vsel %vm265, %v3385, %v3480
      %v3546 = vsel %vm265, %v3386, %v3482
      %v3547 = vmul.f32 %v2615, %v3515
      %v3548 = vmul.f32 %v2616, %v3516
      %v3549 = vmul.f32 %v2617, %v3517
      %v3550 = vmul.f32 %v2618, %v3518
      %v3551 = vmul.f32 %v2619, %v3519
      %v3552 = vmul.f32 %v2620, %v3520
      %v3553 = vmul.f32 %v2621, %v3521
      %v3554 = vmul.f32 %v2622, %v3522
      %v3555 = vmul.f32 %v2623, %v3523
      %v3556 = vmul.f32 %v2624, %v3524
      %v3557 = vmul.f32 %v2625, %v3525
      %v3558 = vmul.f32 %v2626, %v3526
      %v3559 = vmul.f32 %v2627, %v3527
      %v3560 = vmul.f32 %v2628, %v3528
      %v3561 = vmul.f32 %v2629, %v3529
      %v3562 = vmul.f32 %v2630, %v3530
      %v3563 = vmul.f32 %v2631, %v3531
      %v3564 = vmul.f32 %v2632, %v3532
      %v3565 = vmul.f32 %v2633, %v3533
      %v3566 = vmul.f32 %v2634, %v3534
      %v3567 = vmul.f32 %v2635, %v3535
      %v3568 = vmul.f32 %v2636, %v3536
      %v3569 = vmul.f32 %v2637, %v3537
      %v3570 = vmul.f32 %v2638, %v3538
      %v3571 = vmul.f32 %v2639, %v3539
      %v3572 = vmul.f32 %v2640, %v3540
      %v3573 = vmul.f32 %v2641, %v3541
      %v3574 = vmul.f32 %v2642, %v3542
      %v3575 = vmul.f32 %v2643, %v3543
      %v3576 = vmul.f32 %v2644, %v3544
      %v3577 = vmul.f32 %v2645, %v3545
      %v3578 = vmul.f32 %v2646, %v3546
      %vm3579 = vcmask 130048
      %3580 = vst.msk [vmem:[%s197] sm:$0xff] %vm3579, %v3547
      %3581 = vst.msk [vmem:[%s197 + $0x8] sm:$0xff] %vm3579, %v3548
      %3582 = vst.msk [vmem:[%s197 + $0x10] sm:$0xff] %vm3579, %v3549
      %3583 = vst.msk [vmem:[%s197 + $0x18] sm:$0xff] %vm3579, %v3550
      %3584 = vst.msk [vmem:[%s197 + $0x20] sm:$0xff] %vm3579, %v3551
      %3585 = vst.msk [vmem:[%s197 + $0x28] sm:$0xff] %vm3579, %v3552
      %3586 = vst.msk [vmem:[%s197 + $0x30] sm:$0xff] %vm3579, %v3553
      %3587 = vst.msk [vmem:[%s197 + $0x38] sm:$0xff] %vm3579, %v3554
      %3588 = vst.msk [vmem:[%s197 + $0x40] sm:$0xff] %vm3579, %v3555
      %3589 = vst.msk [vmem:[%s197 + $0x48] sm:$0xff] %vm3579, %v3556
      %3590 = vst.msk [vmem:[%s197 + $0x50] sm:$0xff] %vm3579, %v3557
      %3591 = vst.msk [vmem:[%s197 + $0x58] sm:$0xff] %vm3579, %v3558
      %3592 = vst.msk [vmem:[%s197 + $0x60] sm:$0xff] %vm3579, %v3559
      %3593 = vst.msk [vmem:[%s197 + $0x68] sm:$0xff] %vm3579, %v3560
      %3594 = vst.msk [vmem:[%s197 + $0x70] sm:$0xff] %vm3579, %v3561
      %3595 = vst.msk [vmem:[%s197 + $0x78] sm:$0xff] %vm3579, %v3562
      %3596 = vst.msk [vmem:[%s197 + $0x80] sm:$0xff] %vm3579, %v3563
      %3597 = vst.msk [vmem:[%s197 + $0x88] sm:$0xff] %vm3579, %v3564
      %3598 = vst.msk [vmem:[%s197 + $0x90] sm:$0xff] %vm3579, %v3565
      %3599 = vst.msk [vmem:[%s197 + $0x98] sm:$0xff] %vm3579, %v3566
      %3600 = vst.msk [vmem:[%s197 + $0xa0] sm:$0xff] %vm3579, %v3567
      %3601 = vst.msk [vmem:[%s197 + $0xa8] sm:$0xff] %vm3579, %v3568
      %3602 = vst.msk [vmem:[%s197 + $0xb0] sm:$0xff] %vm3579, %v3569
      %3603 = vst.msk [vmem:[%s197 + $0xb8] sm:$0xff] %vm3579, %v3570
      %3604 = vst.msk [vmem:[%s197 + $0xc0] sm:$0xff] %vm3579, %v3571
      %3605 = vst.msk [vmem:[%s197 + $0xc8] sm:$0xff] %vm3579, %v3572
      %3606 = vst.msk [vmem:[%s197 + $0xd0] sm:$0xff] %vm3579, %v3573
      %3607 = vst.msk [vmem:[%s197 + $0xd8] sm:$0xff] %vm3579, %v3574
      %3608 = vst.msk [vmem:[%s197 + $0xe0] sm:$0xff] %vm3579, %v3575
      %3609 = vst.msk [vmem:[%s197 + $0xe8] sm:$0xff] %vm3579, %v3576
      %3610 = vst.msk [vmem:[%s197 + $0xf0] sm:$0xff] %vm3579, %v3577
      %3611 = vst.msk [vmem:[%s197 + $0xf8] sm:$0xff] %vm3579, %v3578
      %p3612 = scmp.lt.s32.totalorder %s15, 1
      %s3613 = scalar_select %p3612, %s15, 1
      %s3614 = smul.addr %s3613, 32
      %s3615 = smul.addr %s3614, 8
      %s3616 = scalar_lea.vmem %s4, %s3615
      // Predicated region
      $region37: #{tpu_custom_call.1} parent=35 // pred_check
        %p3617 = pneg %p122
      $region38: #{tpu_custom_call.1} parent=35 // pred_check_branch
        %3619 = sbr.rel (%p3617) target = $region40
      $region39: #{tpu_custom_call.1} parent=35 // pred_region
        _
      $region40: #{tpu_custom_call.1} parent=35 // pred_fallthru
        _
    $region36: #{tpu_custom_call.1} parent=5 // pred_fallthru
      _
    %p3620 = scmp.le.s32.totalorder 2, %s10
    // Predicated region
    $region41: #{tpu_custom_call.1} parent=5 // pred_check
      %p3621 = pneg %p3620
    $region42: #{tpu_custom_call.1} parent=5 // pred_check_branch
      %3623 = sbr.rel (%p3621) target = $region44
    $region43: #{tpu_custom_call.1} parent=5 // pred_region
      %s3624 = ssub.s32 %s10, 2
      // Predicated region
      $region45: #{tpu_custom_call.1} parent=43 // pred_check
        %p3625 = pneg %p128
      $region46: #{tpu_custom_call.1} parent=43 // pred_check_branch
        %3627 = sbr.rel (%p3625) target = $region48
      $region47: #{tpu_custom_call.1} parent=43 // pred_region
        %p3628 = scmp.lt.s32.totalorder %s16, 1
        %s3629 = scalar_select %p3628, %s16, 1
        %s3630 = smul.addr %s3629, 32
        %s3631 = smul.addr %s3630, 8
        %s3632 = scalar_lea.vmem %s4, %s3631
      $region48: #{tpu_custom_call.1} parent=43 // pred_fallthru
        _
    $region44: #{tpu_custom_call.1} parent=5 // pred_fallthru
      _
  $region6: #{tpu_custom_call.1} parent=0 // loop_footer
    %s14 = sadd.s32 1, %s10
  $region7: #{tpu_custom_call.1} parent=0 // loop_footer_branch
    %9 = sbr.rel target = $region3
  $region8: #{tpu_custom_call.1} parent=0 // loop_exit
    _

</llo_original>
